<compile_context>
chip_gen: v6e
topology: v6e:2x2x1
jax: 0.10.0
libtpu: 0.0.40
codegen_flags: <defaults>
</compile_context>

<pallas_src>
import jax
import jax.numpy as jnp
from jax.experimental import pallas as pl
from jax.experimental.pallas import tpu as pltpu

_BN_EPS = 1e-5
_DEFAULT_ROW_TILE = 8                 # image rows per grid step (sweep per chip)
_VMEM_LIMIT_BYTES = 32 * 1024 * 1024  # explicit scoped-VMEM budget (safe on v5e/v6e/v7x)


# ----------------------------------------------------------------------------- kernels


def _make_conv3x3_kernel(TH, W, fuse_input_bn):
    """3x3 same-conv over a row block + per-channel partial BN statistics.

    Refs (in order):
      x_ref   : (TH*W, Cin)  bf16   interior rows of the flat activation
      top_ref : (W,   Cin)   bf16   image row above the block (clamped)
      bot_ref : (W,   Cin)   bf16   image row below the block (clamped)
      w_ref   : (9*Cin, Cout) bf16  taps flattened (kh, kw, cin) -> rows
      [s_ref, t_ref : (1, Cin) f32  previous stage's folded BN scale/shift (fused)]
      y_ref   : (TH*W, Cout) bf16   un-normalized conv output
      st_ref  : (1, 2, Cout) f32    [sum, sum of squares] over this block's rows
    """
    P = TH * W              # output rows per block
    L = (TH + 2) * W        # rows of the H-padded window

    def kernel(*refs):
        if fuse_input_bn:
            x_ref, top_ref, bot_ref, w_ref, s_ref, t_ref, y_ref, st_ref = refs
        else:
            x_ref, top_ref, bot_ref, w_ref, y_ref, st_ref = refs

        hb = pl.program_id(1)
        nhb = pl.num_programs(1)
        cin = x_ref.shape[-1]

        # H-padded window: [halo_top | interior | halo_bot]  -> (L, Cin)
        xw = jnp.concatenate([top_ref[...], x_ref[...], bot_ref[...]], axis=0)
        xw = xw.astype(jnp.float32)

        if fuse_input_bn:
            # previous stage's BatchNorm + ReLU applied on the fly (per-channel FMA)
            xw = jnp.maximum(xw * s_ref[...] + t_ref[...], 0.0)

        # zero the halo rows that fall outside the image (same-padding semantics)
        rid = jax.lax.broadcasted_iota(jnp.int32, (L, 1), 0)
        keep = jnp.logical_and(
            jnp.logical_or(rid >= W, hb > 0),
            jnp.logical_or(rid < L - W, hb + 1 < nhb))
        xw = jnp.where(keep, xw, 0.0).astype(jnp.bfloat16)

        # one extra zero row at each end so all 9 taps are static in-bounds slices
        zrow = jnp.zeros((1, cin), jnp.bfloat16)
        xz = jnp.concatenate([zrow, xw, zrow], axis=0)          # (L + 2, Cin)

        # column-in-row index -> masks for the left/right taps (width same-padding)
        cid = jax.lax.broadcasted_iota(jnp.int32, (P, 1), 0) % W
        not_first = cid != 0
        not_last = cid != (W - 1)

        # im2col along the 9 taps (channels fastest, (kh, kw) lexicographic) ->
        # a single MXU matmul with contraction K = 9 * Cin.
        pieces = []
        for kh in range(3):
            for dw in (-1, 0, 1):
                start = kh * W + dw + 1
                piece = xz[start:start + P]                     # (P, Cin)
                if dw == -1:
                    piece = jnp.where(not_first, piece, 0.0)
                elif dw == 1:
                    piece = jnp.where(not_last, piece, 0.0)
                pieces.append(piece)
        lhs = jnp.concatenate(pieces, axis=1)                   # (P, 9*Cin) bf16

        acc = jnp.dot(lhs, w_ref[...],
                      preferred_element_type=jnp.float32)       # (P, Cout) f32

        # partial statistics for the batch-stat BatchNorm (reduced in the wrapper)
        s1 = jnp.sum(acc, axis=0, keepdims=True)
        s2 = jnp.sum(acc * acc, axis=0, keepdims=True)
        st_ref[0] = jnp.concatenate([s1, s2], axis=0)

        y_ref[...] = acc.astype(y_ref.dtype)

    return kernel


def _make_affine_act_kernel(apply_relu):
    """out = act(y * scale + shift), per-channel scale/shift, f32 math."""
    def kernel(y_ref, s_ref, t_ref, o_ref):
        y = y_ref[...].astype(jnp.float32) * s_ref[...] + t_ref[...]
        if apply_relu:
            y = jnp.maximum(y, 0.0)
        o_ref[...] = y.astype(o_ref.dtype)
    return kernel


# ----------------------------------------------------------------------------- wrappers


def _conv3x3_bn_stats(x_flat, w9, N, H, W, in_scale=None, in_shift=None,
                      row_tile=_DEFAULT_ROW_TILE):
    """Tiled 3x3 conv pass: returns (y_lin bf16 (R, Cout), partial stats (N*HB, 2, Cout))."""
    R, Cin = x_flat.shape
    assert R == N * H * W
    K, Cout = w9.shape
    assert K == 9 * Cin
    assert W % 8 == 0, "image width must be a multiple of 8 for the halo row blocks"

    TH = min(H, max(1, row_tile))
    while H % TH:
        TH -= 1
    HB = H // TH
    assert (TH * W) % 8 == 0

    fuse = in_scale is not None
    x_flat = x_flat.astype(jnp.bfloat16)
    w9 = w9.astype(jnp.bfloat16)

    def x_map(n, hb):
        return (n * HB + hb, 0)

    def top_map(n, hb):                       # image row above the block (clamped)
        return (jnp.maximum(n * H + hb * TH - 1, 0), 0)

    def bot_map(n, hb):                       # image row below the block (clamped)
        return (jnp.minimum(n * H + (hb + 1) * TH, N * H - 1), 0)

    in_specs = [
        pl.BlockSpec((TH * W, Cin), x_map),                       # interior (pipelined)
        pl.BlockSpec((W, Cin), top_map),                          # halo row above
        pl.BlockSpec((W, Cin), bot_map),                          # halo row below
        pl.BlockSpec((9 * Cin, Cout), lambda n, hb: (0, 0)),      # weights (VMEM resident)
    ]
    args = [x_flat, x_flat, x_flat, w9]
    if fuse:
        in_specs += [pl.BlockSpec((1, Cin), lambda n, hb: (0, 0)),
                     pl.BlockSpec((1, Cin), lambda n, hb: (0, 0))]
        args += [in_scale.astype(jnp.float32), in_shift.astype(jnp.float32)]

    out_shape = (jax.ShapeDtypeStruct((R, Cout), jnp.bfloat16),
                 jax.ShapeDtypeStruct((N * HB, 2, Cout), jnp.float32))
    out_specs = (pl.BlockSpec((TH * W, Cout), lambda n, hb: (n * HB + hb, 0)),
                 pl.BlockSpec((1, 2, Cout), lambda n, hb: (n * HB + hb, 0, 0)))

    y, stats = pl.pallas_call(
        _make_conv3x3_kernel(TH, W, fuse),
        grid=(N, HB),
        in_specs=in_specs,
        out_specs=out_specs,
        out_shape=out_shape,
        compiler_params=pltpu.CompilerParams(
            dimension_semantics=("parallel", "parallel"),
            vmem_limit_bytes=_VMEM_LIMIT_BYTES),
    )(*args)
    return y, stats


def _affine_act(y_flat, scale, shift, out_dtype, apply_relu=True, max_rows=2048):
    """Per-channel affine (+ ReLU) epilogue over the flat (rows, C) activation."""
    R, C = y_flat.shape
    TR = min(R, max_rows)
    while R % TR:
        TR -= 1
    assert TR % 8 == 0 or TR == R

    return pl.pallas_call(
        _make_affine_act_kernel(apply_relu),
        grid=(R // TR,),
        in_specs=[pl.BlockSpec((TR, C), lambda i: (i, 0)),
                  pl.BlockSpec((1, C), lambda i: (0, 0)),
                  pl.BlockSpec((1, C), lambda i: (0, 0))],
        out_specs=pl.BlockSpec((TR, C), lambda i: (i, 0)),
        out_shape=jax.ShapeDtypeStruct((R, C), out_dtype),
        compiler_params=pltpu.CompilerParams(
            dimension_semantics=("parallel",),
            vmem_limit_bytes=_VMEM_LIMIT_BYTES),
    )(y_flat, scale.astype(jnp.float32), shift.astype(jnp.float32))


def _fold_bn(stats, count, gamma, beta, eps=_BN_EPS):
    """Fold batch statistics + BN affine into one per-channel scale/shift (tiny)."""
    s = jnp.sum(stats, axis=0)                      # (2, C): [sum, sum of squares]
    mean = s[0] / count
    var = jnp.maximum(s[1] / count - mean * mean, 0.0)   # biased variance
    scale = gamma * jax.lax.rsqrt(var + eps)
    shift = beta - mean * scale
    return scale.reshape(1, -1).astype(jnp.float32), shift.reshape(1, -1).astype(jnp.float32)


# ----------------------------------------------------------------------------- module


def init_conv_block_params(key, ch_in, ch_out):
    """Synthetic parameters mirroring nn.Conv2d/nn.BatchNorm2d state of ConvBlock."""
    k1, k2, k3, k4 = jax.random.split(key, 4)
    return {
        # conv weights stored as (kh, kw, Cin, Cout) (== torch weight.permute(2,3,1,0))
        "w1": jax.random.normal(k1, (3, 3, ch_in, ch_out), jnp.float32) * 0.1,
        "b1": jax.random.normal(k2, (ch_out,), jnp.float32) * 0.01,
        "gamma1": jnp.ones((ch_out,), jnp.float32),
        "beta1": jnp.zeros((ch_out,), jnp.float32),
        "w2": jax.random.normal(k3, (3, 3, ch_out, ch_out), jnp.float32) * 0.1,
        "b2": jax.random.normal(k4, (ch_out,), jnp.float32) * 0.01,
        "gamma2": jnp.ones((ch_out,), jnp.float32),
        "beta2": jnp.zeros((ch_out,), jnp.float32),
    }


@jax.jit
def conv_block_forward(params, x_nchw):
    """ConvBlock.forward: (N, C_in, H, W) -> (N, C_out, H, W), training-mode BN.

    Note: the conv biases b1/b2 are kept in the parameter dict for state-dict parity but
    are not applied - a per-channel constant cancels exactly under batch-statistic BN.
    """
    N, Cin, H, W = x_nchw.shape
    x = jnp.transpose(x_nchw, (0, 2, 3, 1)).reshape(N * H * W, Cin)
    x = x.astype(jnp.bfloat16)

    w1 = params["w1"].reshape(-1, params["w1"].shape[-1])
    w2 = params["w2"].reshape(-1, params["w2"].shape[-1])
    c_out = params["w2"].shape[-1]
    count = N * H * W

    # stage 1: conv + partial BN stats (no bias, no activation yet)
    y1, st1 = _conv3x3_bn_stats(x, w1, N, H, W)
    s1, t1 = _fold_bn(st1, count, params["gamma1"], params["beta1"])

    # stage 2: stage-1 BN + ReLU fused into the conv's input read
    y2, st2 = _conv3x3_bn_stats(y1, w2, N, H, W, in_scale=s1, in_shift=t1)
    s2, t2 = _fold_bn(st2, count, params["gamma2"], params["beta2"])

    # final BN + ReLU epilogue
    out = _affine_act(y2, s2, t2, out_dtype=jnp.float32, apply_relu=True)
    return jnp.transpose(out.reshape(N, H, W, c_out), (0, 3, 1, 2))


# ----------------------------------------------------------------------------- reference


def _conv_block_reference(params, x_nchw, eps=_BN_EPS):
    """Pure-JAX f32 reference of the PyTorch module (biases included)."""
    x = jnp.transpose(x_nchw, (0, 2, 3, 1)).astype(jnp.float32)

    def stage(h, w, b, gamma, beta):
        y = jax.lax.conv_general_dilated(
            h, w, window_strides=(1, 1), padding="SAME",
            dimension_numbers=("NHWC", "HWIO", "NHWC"),
            precision=jax.lax.Precision.HIGHEST)
        y = y + b.reshape(1, 1, 1, -1)
        mean = y.mean(axis=(0, 1, 2))
        var = ((y - mean) ** 2).mean(axis=(0, 1, 2))
        y = (y - mean) * jax.lax.rsqrt(var + eps) * gamma + beta
        return jnp.maximum(y, 0.0)

    h = stage(x, params["w1"], params["b1"], params["gamma1"], params["beta1"])
    h = stage(h, params["w2"], params["b2"], params["gamma2"], params["beta2"])
    return jnp.transpose(h, (0, 3, 1, 2))


# ----------------------------------------------------------------------------- harness


if __name__ == "__main__":
    key = jax.random.PRNGKey(0)
    k_x, k_p = jax.random.split(key)

    N, CH_IN, CH_OUT, H, W = 2, 4, 8, 16, 16
    x = jax.random.normal(k_x, (N, CH_IN, H, W), jnp.float32)
    params = init_conv_block_params(k_p, CH_IN, CH_OUT)

    out = jax.block_until_ready(conv_block_forward(params, x))

    assert out.shape == (N, CH_OUT, H, W), out.shape
    assert out.dtype == jnp.float32
    assert bool(jnp.all(jnp.isfinite(out)))
    assert bool(jnp.all(out >= 0.0))          # ReLU output

    # correctness vs. a pure-JAX f32 reference (tolerance covers the bf16 MXU path)
    ref = _conv_block_reference(params, x)
    max_err = float(jnp.max(jnp.abs(out - ref)))
    assert max_err < 0.25, f"max abs error vs reference: {max_err}"

    print("KERNEL_OK")
</pallas_src>

<mosaic_0001>
module attributes {stable_mosaic.version = 11 : i64} {
  func.func @kernel(%arg0: i32, %arg1: memref<512x8xbf16, #tpu.memory_space<vmem>>, %arg2: memref<1x8xf32, #tpu.memory_space<vmem>>, %arg3: memref<1x8xf32, #tpu.memory_space<vmem>>, %arg4: memref<512x8xf32, #tpu.memory_space<vmem>>) attributes {dimension_semantics = [#tpu.dimension_semantics<parallel>], iteration_bounds = array<i64: 1>, scalar_prefetch = 0 : i64, scratch_operands = 0 : i64, tpu.core_type = #tpu.core_type<tc>, window_params = [{transform_indices = @transform_0, window_bounds = array<i64: 512, 8>}, {pipeline_mode = #tpu.pipeline_mode<synchronous>, transform_indices = @transform_1, window_bounds = array<i64: 1, 8>}, {pipeline_mode = #tpu.pipeline_mode<synchronous>, transform_indices = @transform_2, window_bounds = array<i64: 1, 8>}, {transform_indices = @transform_3, window_bounds = array<i64: 512, 8>}]} {
    %c0 = arith.constant 0 : index
    %c0_0 = arith.constant 0 : index
    %0 = vector.load %arg1[%c0, %c0_0] : memref<512x8xbf16, #tpu.memory_space<vmem>>, vector<512x8xbf16>
    %1 = arith.extf %0 : vector<512x8xbf16> to vector<512x8xf32>
    %c0_1 = arith.constant 0 : index
    %c0_2 = arith.constant 0 : index
    %2 = vector.load %arg2[%c0_1, %c0_2] : memref<1x8xf32, #tpu.memory_space<vmem>>, vector<1x8xf32>
    %3 = vector.broadcast %2 : vector<1x8xf32> to vector<512x8xf32>
    %4 = arith.mulf %1, %3 : vector<512x8xf32>
    %c0_3 = arith.constant 0 : index
    %c0_4 = arith.constant 0 : index
    %5 = vector.load %arg3[%c0_3, %c0_4] : memref<1x8xf32, #tpu.memory_space<vmem>>, vector<1x8xf32>
    %6 = vector.broadcast %5 : vector<1x8xf32> to vector<512x8xf32>
    %7 = arith.addf %4, %6 : vector<512x8xf32>
    %cst = arith.constant 0.000000e+00 : f32
    %8 = vector.broadcast %cst : f32 to vector<512x8xf32>
    %9 = arith.maximumf %7, %8 : vector<512x8xf32>
    %c0_5 = arith.constant 0 : index
    %c0_6 = arith.constant 0 : index
    %10 = vector.load %arg4[%c0_5, %c0_6] : memref<512x8xf32, #tpu.memory_space<vmem>>, vector<512x8xf32>
    tpu.vector_store %arg4[%c0_5, %c0_6], %9 {strides = array<i32>} : memref<512x8xf32, #tpu.memory_space<vmem>>, vector<512x8xf32>,
    return
  }
  func.func @transform_0(%arg0: i32) -> (i32, i32) {
    %c0_i32 = arith.constant 0 : i32
    %c0_i32_0 = arith.constant 0 : i32
    return %arg0, %c0_i32 : i32, i32
  }
  func.func @transform_1(%arg0: i32) -> (i32, i32) {
    %c0_i32 = arith.constant 0 : i32
    %c0_i32_0 = arith.constant 0 : i32
    %c0_i32_1 = arith.constant 0 : i32
    return %c0_i32, %c0_i32_0 : i32, i32
  }
  func.func @transform_2(%arg0: i32) -> (i32, i32) {
    %c0_i32 = arith.constant 0 : i32
    %c0_i32_0 = arith.constant 0 : i32
    %c0_i32_1 = arith.constant 0 : i32
    return %c0_i32, %c0_i32_0 : i32, i32
  }
  func.func @transform_3(%arg0: i32) -> (i32, i32) {
    %c0_i32 = arith.constant 0 : i32
    %c0_i32_0 = arith.constant 0 : i32
    return %arg0, %c0_i32 : i32, i32
  }
}

module attributes {stable_mosaic.version = 11 : i64} {
  func.func @kernel(%arg0: i32, %arg1: i32, %arg2: memref<128x4xbf16, #tpu.memory_space<vmem>>, %arg3: memref<16x4xbf16, #tpu.memory_space<vmem>>, %arg4: memref<16x4xbf16, #tpu.memory_space<vmem>>, %arg5: memref<36x8xbf16, #tpu.memory_space<vmem>>, %arg6: memref<128x8xbf16, #tpu.memory_space<vmem>>, %arg7: memref<1x2x8xf32, #tpu.memory_space<vmem>>) attributes {dimension_semantics = [#tpu.dimension_semantics<parallel>, #tpu.dimension_semantics<parallel>], iteration_bounds = array<i64: 2, 2>, scalar_prefetch = 0 : i64, scratch_operands = 0 : i64, tpu.core_type = #tpu.core_type<tc>, window_params = [{transform_indices = @transform_0, window_bounds = array<i64: 128, 4>}, {transform_indices = @transform_1, window_bounds = array<i64: 16, 4>}, {transform_indices = @transform_2, window_bounds = array<i64: 16, 4>}, {pipeline_mode = #tpu.pipeline_mode<synchronous>, transform_indices = @transform_3, window_bounds = array<i64: 36, 8>}, {transform_indices = @transform_4, window_bounds = array<i64: 128, 8>}, {transform_indices = @transform_5, window_bounds = array<i64: 1, 2, 8>}]} {
    %c0 = arith.constant 0 : index
    %c0_0 = arith.constant 0 : index
    %0 = vector.load %arg3[%c0, %c0_0] : memref<16x4xbf16, #tpu.memory_space<vmem>>, vector<16x4xbf16>
    %c0_1 = arith.constant 0 : index
    %c0_2 = arith.constant 0 : index
    %1 = vector.load %arg2[%c0_1, %c0_2] : memref<128x4xbf16, #tpu.memory_space<vmem>>, vector<128x4xbf16>
    %c0_3 = arith.constant 0 : index
    %c0_4 = arith.constant 0 : index
    %2 = vector.load %arg4[%c0_3, %c0_4] : memref<16x4xbf16, #tpu.memory_space<vmem>>, vector<16x4xbf16>
    %3 = tpu.concatenate %0, %1, %2 in 0 : vector<16x4xbf16>, vector<128x4xbf16>, vector<16x4xbf16> -> vector<160x4xbf16>
    %4 = arith.extf %3 : vector<160x4xbf16> to vector<160x4xf32>
    %5 = tpu.iota {dimensions = array<i32: 0>} : vector<160x1xi32>
    %c16_i32 = arith.constant 16 : i32
    %6 = vector.broadcast %c16_i32 : i32 to vector<160x1xi32>
    %7 = arith.cmpi sge, %5, %6 : vector<160x1xi32>
    %c0_i32 = arith.constant 0 : i32
    %8 = arith.cmpi sgt, %arg1, %c0_i32 : i32
    %9 = vector.broadcast %8 : i1 to vector<160x1xi1>
    %10 = arith.ori %7, %9 : vector<160x1xi1>
    %c144_i32 = arith.constant 144 : i32
    %11 = vector.broadcast %c144_i32 : i32 to vector<160x1xi32>
    %12 = arith.cmpi slt, %5, %11 : vector<160x1xi32>
    %c1_i32 = arith.constant 1 : i32
    %13 = arith.addi %arg1, %c1_i32 : i32
    %c2_i32 = arith.constant 2 : i32
    %14 = arith.cmpi slt, %13, %c2_i32 : i32
    %15 = vector.broadcast %14 : i1 to vector<160x1xi1>
    %16 = arith.ori %12, %15 : vector<160x1xi1>
    %17 = arith.andi %10, %16 : vector<160x1xi1>
    %cst = arith.constant 0.000000e+00 : f32
    %18 = vector.shape_cast %17 : vector<160x1xi1> to vector<160x1xi1>
    %19 = vector.broadcast %18 : vector<160x1xi1> to vector<160x4xi1>
    %20 = vector.broadcast %cst : f32 to vector<160x4xf32>
    %21 = arith.select %19, %4, %20 : vector<160x4xi1>, vector<160x4xf32>
    %22 = arith.truncf %21 : vector<160x4xf32> to vector<160x4xbf16>
    %cst_5 = arith.constant 0.000000e+00 : bf16
    %23 = vector.broadcast %cst_5 : bf16 to vector<1x4xbf16>
    %24 = tpu.concatenate %23, %22, %23 in 0 : vector<1x4xbf16>, vector<160x4xbf16>, vector<1x4xbf16> -> vector<162x4xbf16>
    %25 = tpu.iota {dimensions = array<i32: 0>} : vector<128x1xi32>
    %c16_i32_6 = arith.constant 16 : i32
    %c0_i32_7 = arith.constant 0 : i32
    %26 = arith.cmpi eq, %c16_i32_6, %c0_i32_7 : i32
    %c1_i32_8 = arith.constant 1 : i32
    %27 = arith.select %26, %c1_i32_8, %c16_i32_6 : i32
    %28 = vector.broadcast %27 : i32 to vector<128x1xi32>
    %29 = arith.remsi %25, %28 : vector<128x1xi32>
    %c0_i32_9 = arith.constant 0 : i32
    %30 = vector.broadcast %c0_i32_9 : i32 to vector<128x1xi32>
    %31 = arith.cmpi ne, %29, %30 : vector<128x1xi32>
    %c0_i32_10 = arith.constant 0 : i32
    %32 = vector.broadcast %c0_i32_10 : i32 to vector<128x1xi32>
    %33 = arith.cmpi slt, %29, %32 : vector<128x1xi32>
    %c0_i32_11 = arith.constant 0 : i32
    %34 = arith.cmpi slt, %27, %c0_i32_11 : i32
    %35 = vector.broadcast %34 : i1 to vector<128x1xi1>
    %36 = vector.broadcast %35 : vector<128x1xi1> to vector<128x1xi1>
    %37 = arith.xori %33, %36 : vector<128x1xi1>
    %38 = arith.andi %37, %31 : vector<128x1xi1>
    %39 = vector.broadcast %27 : i32 to vector<128x1xi32>
    %40 = arith.addi %29, %39 : vector<128x1xi32>
    %41 = arith.select %38, %40, %29 : vector<128x1xi1>, vector<128x1xi32>
    %c0_i32_12 = arith.constant 0 : i32
    %42 = vector.broadcast %c0_i32_12 : i32 to vector<128x1xi32>
    %43 = arith.cmpi ne, %41, %42 : vector<128x1xi32>
    %c15_i32 = arith.constant 15 : i32
    %44 = vector.broadcast %c15_i32 : i32 to vector<128x1xi32>
    %45 = arith.cmpi ne, %41, %44 : vector<128x1xi32>
    %46 = vector.extract_strided_slice %24 {offsets = [0, 0], sizes = [128, 4], strides = [1, 1]} : vector<162x4xbf16> to vector<128x4xbf16>
    %cst_13 = arith.constant 0.000000e+00 : f32
    %47 = arith.truncf %cst_13 : f32 to bf16
    %48 = vector.shape_cast %43 : vector<128x1xi1> to vector<128x1xi1>
    %49 = vector.broadcast %48 : vector<128x1xi1> to vector<128x4xi1>
    %50 = vector.broadcast %47 : bf16 to vector<128x4xbf16>
    %51 = arith.select %49, %46, %50 : vector<128x4xi1>, vector<128x4xbf16>
    %52 = vector.extract_strided_slice %24 {offsets = [1, 0], sizes = [128, 4], strides = [1, 1]} : vector<162x4xbf16> to vector<128x4xbf16>
    %53 = vector.extract_strided_slice %24 {offsets = [2, 0], sizes = [128, 4], strides = [1, 1]} : vector<162x4xbf16> to vector<128x4xbf16>
    %cst_14 = arith.constant 0.000000e+00 : f32
    %54 = arith.truncf %cst_14 : f32 to bf16
    %55 = vector.shape_cast %45 : vector<128x1xi1> to vector<128x1xi1>
    %56 = vector.broadcast %55 : vector<128x1xi1> to vector<128x4xi1>
    %57 = vector.broadcast %54 : bf16 to vector<128x4xbf16>
    %58 = arith.select %56, %53, %57 : vector<128x4xi1>, vector<128x4xbf16>
    %59 = vector.extract_strided_slice %24 {offsets = [16, 0], sizes = [128, 4], strides = [1, 1]} : vector<162x4xbf16> to vector<128x4xbf16>
    %cst_15 = arith.constant 0.000000e+00 : f32
    %60 = arith.truncf %cst_15 : f32 to bf16
    %61 = vector.shape_cast %43 : vector<128x1xi1> to vector<128x1xi1>
    %62 = vector.broadcast %61 : vector<128x1xi1> to vector<128x4xi1>
    %63 = vector.broadcast %60 : bf16 to vector<128x4xbf16>
    %64 = arith.select %62, %59, %63 : vector<128x4xi1>, vector<128x4xbf16>
    %65 = vector.extract_strided_slice %24 {offsets = [17, 0], sizes = [128, 4], strides = [1, 1]} : vector<162x4xbf16> to vector<128x4xbf16>
    %66 = vector.extract_strided_slice %24 {offsets = [18, 0], sizes = [128, 4], strides = [1, 1]} : vector<162x4xbf16> to vector<128x4xbf16>
    %cst_16 = arith.constant 0.000000e+00 : f32
    %67 = arith.truncf %cst_16 : f32 to bf16
    %68 = vector.shape_cast %45 : vector<128x1xi1> to vector<128x1xi1>
    %69 = vector.broadcast %68 : vector<128x1xi1> to vector<128x4xi1>
    %70 = vector.broadcast %67 : bf16 to vector<128x4xbf16>
    %71 = arith.select %69, %66, %70 : vector<128x4xi1>, vector<128x4xbf16>
    %72 = vector.extract_strided_slice %24 {offsets = [32, 0], sizes = [128, 4], strides = [1, 1]} : vector<162x4xbf16> to vector<128x4xbf16>
    %cst_17 = arith.constant 0.000000e+00 : f32
    %73 = arith.truncf %cst_17 : f32 to bf16
    %74 = vector.shape_cast %43 : vector<128x1xi1> to vector<128x1xi1>
    %75 = vector.broadcast %74 : vector<128x1xi1> to vector<128x4xi1>
    %76 = vector.broadcast %73 : bf16 to vector<128x4xbf16>
    %77 = arith.select %75, %72, %76 : vector<128x4xi1>, vector<128x4xbf16>
    %78 = vector.extract_strided_slice %24 {offsets = [33, 0], sizes = [128, 4], strides = [1, 1]} : vector<162x4xbf16> to vector<128x4xbf16>
    %79 = vector.extract_strided_slice %24 {offsets = [34, 0], sizes = [128, 4], strides = [1, 1]} : vector<162x4xbf16> to vector<128x4xbf16>
    %cst_18 = arith.constant 0.000000e+00 : f32
    %80 = arith.truncf %cst_18 : f32 to bf16
    %81 = vector.shape_cast %45 : vector<128x1xi1> to vector<128x1xi1>
    %82 = vector.broadcast %81 : vector<128x1xi1> to vector<128x4xi1>
    %83 = vector.broadcast %80 : bf16 to vector<128x4xbf16>
    %84 = arith.select %82, %79, %83 : vector<128x4xi1>, vector<128x4xbf16>
    %85 = tpu.concatenate %51, %52, %58, %64, %65, %71, %77, %78, %84 in 1 : vector<128x4xbf16>, vector<128x4xbf16>, vector<128x4xbf16>, vector<128x4xbf16>, vector<128x4xbf16>, vector<128x4xbf16>, vector<128x4xbf16>, vector<128x4xbf16>, vector<128x4xbf16> -> vector<128x36xbf16>
    %c0_19 = arith.constant 0 : index
    %c0_20 = arith.constant 0 : index
    %86 = vector.load %arg5[%c0_19, %c0_20] : memref<36x8xbf16, #tpu.memory_space<vmem>>, vector<36x8xbf16>
    %cst_21 = arith.constant dense<0.000000e+00> : vector<128x8xf32>
    %87 = tpu.matmul %85, %86, %cst_21 {dimension_numbers = #tpu.dot_dimension_numbers<[1], [0], [0], [1], [0, 0, 1, 1], [], []>} : vector<128x36xbf16>, vector<36x8xbf16>, vector<128x8xf32> -> vector<128x8xf32>
    %cst_22 = arith.constant dense<0.000000e+00> : vector<8xf32>
    %88 = vector.multi_reduction <add>, %87, %cst_22 [0] : vector<128x8xf32> to vector<8xf32>
    %89 = vector.shape_cast %88 : vector<8xf32> to vector<1x8xf32>
    %90 = arith.mulf %87, %87 : vector<128x8xf32>
    %cst_23 = arith.constant dense<0.000000e+00> : vector<8xf32>
    %91 = vector.multi_reduction <add>, %90, %cst_23 [0] : vector<128x8xf32> to vector<8xf32>
    %92 = vector.shape_cast %91 : vector<8xf32> to vector<1x8xf32>
    %93 = tpu.concatenate %89, %92 in 0 : vector<1x8xf32>, vector<1x8xf32> -> vector<2x8xf32>
    %c0_24 = arith.constant 0 : index
    %c0_25 = arith.constant 0 : index
    %c0_26 = arith.constant 0 : index
    %94 = vector.load %arg7[%c0_24, %c0_25, %c0_26] : memref<1x2x8xf32, #tpu.memory_space<vmem>>, vector<1x2x8xf32>
    %95 = vector.shape_cast %94 : vector<1x2x8xf32> to vector<2x8xf32>
    %96 = vector.shape_cast %93 : vector<2x8xf32> to vector<1x2x8xf32>
    tpu.vector_store %arg7[%c0_24, %c0_25, %c0_26], %96 {strides = array<i32>} : memref<1x2x8xf32, #tpu.memory_space<vmem>>, vector<1x2x8xf32>,
    %97 = arith.truncf %87 : vector<128x8xf32> to vector<128x8xbf16>
    %c0_27 = arith.constant 0 : index
    %c0_28 = arith.constant 0 : index
    %98 = vector.load %arg6[%c0_27, %c0_28] : memref<128x8xbf16, #tpu.memory_space<vmem>>, vector<128x8xbf16>
    tpu.vector_store %arg6[%c0_27, %c0_28], %97 {strides = array<i32>} : memref<128x8xbf16, #tpu.memory_space<vmem>>, vector<128x8xbf16>,
    return
  }
  func.func @transform_0(%arg0: i32, %arg1: i32) -> (i32, i32) {
    %c2_i32 = arith.constant 2 : i32
    %0 = arith.muli %arg0, %c2_i32 : i32
    %1 = arith.addi %0, %arg1 : i32
    %c0_i32 = arith.constant 0 : i32
    %c0_i32_0 = arith.constant 0 : i32
    return %1, %c0_i32 : i32, i32
  }
  func.func @transform_1(%arg0: i32, %arg1: i32) -> (i32, i32) {
    %c16_i32 = arith.constant 16 : i32
    %0 = arith.muli %arg0, %c16_i32 : i32
    %c8_i32 = arith.constant 8 : i32
    %1 = arith.muli %arg1, %c8_i32 : i32
    %2 = arith.addi %0, %1 : i32
    %c1_i32 = arith.constant 1 : i32
    %3 = arith.subi %2, %c1_i32 : i32
    %c0_i32 = arith.constant 0 : i32
    %4 = arith.maxsi %3, %c0_i32 : i32
    %c0_i32_0 = arith.constant 0 : i32
    %c0_i32_1 = arith.constant 0 : i32
    return %4, %c0_i32_0 : i32, i32
  }
  func.func @transform_2(%arg0: i32, %arg1: i32) -> (i32, i32) {
    %c16_i32 = arith.constant 16 : i32
    %0 = arith.muli %arg0, %c16_i32 : i32
    %c1_i32 = arith.constant 1 : i32
    %1 = arith.addi %arg1, %c1_i32 : i32
    %c8_i32 = arith.constant 8 : i32
    %2 = arith.muli %1, %c8_i32 : i32
    %3 = arith.addi %0, %2 : i32
    %c31_i32 = arith.constant 31 : i32
    %4 = arith.minsi %3, %c31_i32 : i32
    %c0_i32 = arith.constant 0 : i32
    %c0_i32_0 = arith.constant 0 : i32
    return %4, %c0_i32 : i32, i32
  }
  func.func @transform_3(%arg0: i32, %arg1: i32) -> (i32, i32) {
    %c0_i32 = arith.constant 0 : i32
    %c0_i32_0 = arith.constant 0 : i32
    %c0_i32_1 = arith.constant 0 : i32
    return %c0_i32, %c0_i32_0 : i32, i32
  }
  func.func @transform_4(%arg0: i32, %arg1: i32) -> (i32, i32) {
    %c2_i32 = arith.constant 2 : i32
    %0 = arith.muli %arg0, %c2_i32 : i32
    %1 = arith.addi %0, %arg1 : i32
    %c0_i32 = arith.constant 0 : i32
    %c0_i32_0 = arith.constant 0 : i32
    return %1, %c0_i32 : i32, i32
  }
  func.func @transform_5(%arg0: i32, %arg1: i32) -> (i32, i32, i32) {
    %c2_i32 = arith.constant 2 : i32
    %0 = arith.muli %arg0, %c2_i32 : i32
    %1 = arith.addi %0, %arg1 : i32
    %c0_i32 = arith.constant 0 : i32
    %c0_i32_0 = arith.constant 0 : i32
    %c0_i32_1 = arith.constant 0 : i32
    return %1, %c0_i32, %c0_i32_0 : i32, i32, i32
  }
}

module attributes {stable_mosaic.version = 11 : i64} {
  func.func @kernel(%arg0: i32, %arg1: i32, %arg2: memref<128x8xbf16, #tpu.memory_space<vmem>>, %arg3: memref<16x8xbf16, #tpu.memory_space<vmem>>, %arg4: memref<16x8xbf16, #tpu.memory_space<vmem>>, %arg5: memref<72x8xbf16, #tpu.memory_space<vmem>>, %arg6: memref<1x8xf32, #tpu.memory_space<vmem>>, %arg7: memref<1x8xf32, #tpu.memory_space<vmem>>, %arg8: memref<128x8xbf16, #tpu.memory_space<vmem>>, %arg9: memref<1x2x8xf32, #tpu.memory_space<vmem>>) attributes {dimension_semantics = [#tpu.dimension_semantics<parallel>, #tpu.dimension_semantics<parallel>], iteration_bounds = array<i64: 2, 2>, scalar_prefetch = 0 : i64, scratch_operands = 0 : i64, tpu.core_type = #tpu.core_type<tc>, window_params = [{transform_indices = @transform_0, window_bounds = array<i64: 128, 8>}, {transform_indices = @transform_1, window_bounds = array<i64: 16, 8>}, {transform_indices = @transform_2, window_bounds = array<i64: 16, 8>}, {pipeline_mode = #tpu.pipeline_mode<synchronous>, transform_indices = @transform_3, window_bounds = array<i64: 72, 8>}, {pipeline_mode = #tpu.pipeline_mode<synchronous>, transform_indices = @transform_4, window_bounds = array<i64: 1, 8>}, {pipeline_mode = #tpu.pipeline_mode<synchronous>, transform_indices = @transform_5, window_bounds = array<i64: 1, 8>}, {transform_indices = @transform_6, window_bounds = array<i64: 128, 8>}, {transform_indices = @transform_7, window_bounds = array<i64: 1, 2, 8>}]} {
    %c0 = arith.constant 0 : index
    %c0_0 = arith.constant 0 : index
    %0 = vector.load %arg3[%c0, %c0_0] : memref<16x8xbf16, #tpu.memory_space<vmem>>, vector<16x8xbf16>
    %c0_1 = arith.constant 0 : index
    %c0_2 = arith.constant 0 : index
    %1 = vector.load %arg2[%c0_1, %c0_2] : memref<128x8xbf16, #tpu.memory_space<vmem>>, vector<128x8xbf16>
    %c0_3 = arith.constant 0 : index
    %c0_4 = arith.constant 0 : index
    %2 = vector.load %arg4[%c0_3, %c0_4] : memref<16x8xbf16, #tpu.memory_space<vmem>>, vector<16x8xbf16>
    %3 = tpu.concatenate %0, %1, %2 in 0 : vector<16x8xbf16>, vector<128x8xbf16>, vector<16x8xbf16> -> vector<160x8xbf16>
    %4 = arith.extf %3 : vector<160x8xbf16> to vector<160x8xf32>
    %c0_5 = arith.constant 0 : index
    %c0_6 = arith.constant 0 : index
    %5 = vector.load %arg6[%c0_5, %c0_6] : memref<1x8xf32, #tpu.memory_space<vmem>>, vector<1x8xf32>
    %6 = vector.broadcast %5 : vector<1x8xf32> to vector<160x8xf32>
    %7 = arith.mulf %4, %6 : vector<160x8xf32>
    %c0_7 = arith.constant 0 : index
    %c0_8 = arith.constant 0 : index
    %8 = vector.load %arg7[%c0_7, %c0_8] : memref<1x8xf32, #tpu.memory_space<vmem>>, vector<1x8xf32>
    %9 = vector.broadcast %8 : vector<1x8xf32> to vector<160x8xf32>
    %10 = arith.addf %7, %9 : vector<160x8xf32>
    %cst = arith.constant 0.000000e+00 : f32
    %11 = vector.broadcast %cst : f32 to vector<160x8xf32>
    %12 = arith.maximumf %10, %11 : vector<160x8xf32>
    %13 = tpu.iota {dimensions = array<i32: 0>} : vector<160x1xi32>
    %c16_i32 = arith.constant 16 : i32
    %14 = vector.broadcast %c16_i32 : i32 to vector<160x1xi32>
    %15 = arith.cmpi sge, %13, %14 : vector<160x1xi32>
    %c0_i32 = arith.constant 0 : i32
    %16 = arith.cmpi sgt, %arg1, %c0_i32 : i32
    %17 = vector.broadcast %16 : i1 to vector<160x1xi1>
    %18 = arith.ori %15, %17 : vector<160x1xi1>
    %c144_i32 = arith.constant 144 : i32
    %19 = vector.broadcast %c144_i32 : i32 to vector<160x1xi32>
    %20 = arith.cmpi slt, %13, %19 : vector<160x1xi32>
    %c1_i32 = arith.constant 1 : i32
    %21 = arith.addi %arg1, %c1_i32 : i32
    %c2_i32 = arith.constant 2 : i32
    %22 = arith.cmpi slt, %21, %c2_i32 : i32
    %23 = vector.broadcast %22 : i1 to vector<160x1xi1>
    %24 = arith.ori %20, %23 : vector<160x1xi1>
    %25 = arith.andi %18, %24 : vector<160x1xi1>
    %cst_9 = arith.constant 0.000000e+00 : f32
    %26 = vector.shape_cast %25 : vector<160x1xi1> to vector<160x1xi1>
    %27 = vector.broadcast %26 : vector<160x1xi1> to vector<160x8xi1>
    %28 = vector.broadcast %cst_9 : f32 to vector<160x8xf32>
    %29 = arith.select %27, %12, %28 : vector<160x8xi1>, vector<160x8xf32>
    %30 = arith.truncf %29 : vector<160x8xf32> to vector<160x8xbf16>
    %cst_10 = arith.constant 0.000000e+00 : bf16
    %31 = vector.broadcast %cst_10 : bf16 to vector<1x8xbf16>
    %32 = tpu.concatenate %31, %30, %31 in 0 : vector<1x8xbf16>, vector<160x8xbf16>, vector<1x8xbf16> -> vector<162x8xbf16>
    %33 = tpu.iota {dimensions = array<i32: 0>} : vector<128x1xi32>
    %c16_i32_11 = arith.constant 16 : i32
    %c0_i32_12 = arith.constant 0 : i32
    %34 = arith.cmpi eq, %c16_i32_11, %c0_i32_12 : i32
    %c1_i32_13 = arith.constant 1 : i32
    %35 = arith.select %34, %c1_i32_13, %c16_i32_11 : i32
    %36 = vector.broadcast %35 : i32 to vector<128x1xi32>
    %37 = arith.remsi %33, %36 : vector<128x1xi32>
    %c0_i32_14 = arith.constant 0 : i32
    %38 = vector.broadcast %c0_i32_14 : i32 to vector<128x1xi32>
    %39 = arith.cmpi ne, %37, %38 : vector<128x1xi32>
    %c0_i32_15 = arith.constant 0 : i32
    %40 = vector.broadcast %c0_i32_15 : i32 to vector<128x1xi32>
    %41 = arith.cmpi slt, %37, %40 : vector<128x1xi32>
    %c0_i32_16 = arith.constant 0 : i32
    %42 = arith.cmpi slt, %35, %c0_i32_16 : i32
    %43 = vector.broadcast %42 : i1 to vector<128x1xi1>
    %44 = vector.broadcast %43 : vector<128x1xi1> to vector<128x1xi1>
    %45 = arith.xori %41, %44 : vector<128x1xi1>
    %46 = arith.andi %45, %39 : vector<128x1xi1>
    %47 = vector.broadcast %35 : i32 to vector<128x1xi32>
    %48 = arith.addi %37, %47 : vector<128x1xi32>
    %49 = arith.select %46, %48, %37 : vector<128x1xi1>, vector<128x1xi32>
    %c0_i32_17 = arith.constant 0 : i32
    %50 = vector.broadcast %c0_i32_17 : i32 to vector<128x1xi32>
    %51 = arith.cmpi ne, %49, %50 : vector<128x1xi32>
    %c15_i32 = arith.constant 15 : i32
    %52 = vector.broadcast %c15_i32 : i32 to vector<128x1xi32>
    %53 = arith.cmpi ne, %49, %52 : vector<128x1xi32>
    %54 = vector.extract_strided_slice %32 {offsets = [0, 0], sizes = [128, 8], strides = [1, 1]} : vector<162x8xbf16> to vector<128x8xbf16>
    %cst_18 = arith.constant 0.000000e+00 : f32
    %55 = arith.truncf %cst_18 : f32 to bf16
    %56 = vector.shape_cast %51 : vector<128x1xi1> to vector<128x1xi1>
    %57 = vector.broadcast %56 : vector<128x1xi1> to vector<128x8xi1>
    %58 = vector.broadcast %55 : bf16 to vector<128x8xbf16>
    %59 = arith.select %57, %54, %58 : vector<128x8xi1>, vector<128x8xbf16>
    %60 = vector.extract_strided_slice %32 {offsets = [1, 0], sizes = [128, 8], strides = [1, 1]} : vector<162x8xbf16> to vector<128x8xbf16>
    %61 = vector.extract_strided_slice %32 {offsets = [2, 0], sizes = [128, 8], strides = [1, 1]} : vector<162x8xbf16> to vector<128x8xbf16>
    %cst_19 = arith.constant 0.000000e+00 : f32
    %62 = arith.truncf %cst_19 : f32 to bf16
    %63 = vector.shape_cast %53 : vector<128x1xi1> to vector<128x1xi1>
    %64 = vector.broadcast %63 : vector<128x1xi1> to vector<128x8xi1>
    %65 = vector.broadcast %62 : bf16 to vector<128x8xbf16>
    %66 = arith.select %64, %61, %65 : vector<128x8xi1>, vector<128x8xbf16>
    %67 = vector.extract_strided_slice %32 {offsets = [16, 0], sizes = [128, 8], strides = [1, 1]} : vector<162x8xbf16> to vector<128x8xbf16>
    %cst_20 = arith.constant 0.000000e+00 : f32
    %68 = arith.truncf %cst_20 : f32 to bf16
    %69 = vector.shape_cast %51 : vector<128x1xi1> to vector<128x1xi1>
    %70 = vector.broadcast %69 : vector<128x1xi1> to vector<128x8xi1>
    %71 = vector.broadcast %68 : bf16 to vector<128x8xbf16>
    %72 = arith.select %70, %67, %71 : vector<128x8xi1>, vector<128x8xbf16>
    %73 = vector.extract_strided_slice %32 {offsets = [17, 0], sizes = [128, 8], strides = [1, 1]} : vector<162x8xbf16> to vector<128x8xbf16>
    %74 = vector.extract_strided_slice %32 {offsets = [18, 0], sizes = [128, 8], strides = [1, 1]} : vector<162x8xbf16> to vector<128x8xbf16>
    %cst_21 = arith.constant 0.000000e+00 : f32
    %75 = arith.truncf %cst_21 : f32 to bf16
    %76 = vector.shape_cast %53 : vector<128x1xi1> to vector<128x1xi1>
    %77 = vector.broadcast %76 : vector<128x1xi1> to vector<128x8xi1>
    %78 = vector.broadcast %75 : bf16 to vector<128x8xbf16>
    %79 = arith.select %77, %74, %78 : vector<128x8xi1>, vector<128x8xbf16>
    %80 = vector.extract_strided_slice %32 {offsets = [32, 0], sizes = [128, 8], strides = [1, 1]} : vector<162x8xbf16> to vector<128x8xbf16>
    %cst_22 = arith.constant 0.000000e+00 : f32
    %81 = arith.truncf %cst_22 : f32 to bf16
    %82 = vector.shape_cast %51 : vector<128x1xi1> to vector<128x1xi1>
    %83 = vector.broadcast %82 : vector<128x1xi1> to vector<128x8xi1>
    %84 = vector.broadcast %81 : bf16 to vector<128x8xbf16>
    %85 = arith.select %83, %80, %84 : vector<128x8xi1>, vector<128x8xbf16>
    %86 = vector.extract_strided_slice %32 {offsets = [33, 0], sizes = [128, 8], strides = [1, 1]} : vector<162x8xbf16> to vector<128x8xbf16>
    %87 = vector.extract_strided_slice %32 {offsets = [34, 0], sizes = [128, 8], strides = [1, 1]} : vector<162x8xbf16> to vector<128x8xbf16>
    %cst_23 = arith.constant 0.000000e+00 : f32
    %88 = arith.truncf %cst_23 : f32 to bf16
    %89 = vector.shape_cast %53 : vector<128x1xi1> to vector<128x1xi1>
    %90 = vector.broadcast %89 : vector<128x1xi1> to vector<128x8xi1>
    %91 = vector.broadcast %88 : bf16 to vector<128x8xbf16>
    %92 = arith.select %90, %87, %91 : vector<128x8xi1>, vector<128x8xbf16>
    %93 = tpu.concatenate %59, %60, %66, %72, %73, %79, %85, %86, %92 in 1 : vector<128x8xbf16>, vector<128x8xbf16>, vector<128x8xbf16>, vector<128x8xbf16>, vector<128x8xbf16>, vector<128x8xbf16>, vector<128x8xbf16>, vector<128x8xbf16>, vector<128x8xbf16> -> vector<128x72xbf16>
    %c0_24 = arith.constant 0 : index
    %c0_25 = arith.constant 0 : index
    %94 = vector.load %arg5[%c0_24, %c0_25] : memref<72x8xbf16, #tpu.memory_space<vmem>>, vector<72x8xbf16>
    %cst_26 = arith.constant dense<0.000000e+00> : vector<128x8xf32>
    %95 = tpu.matmul %93, %94, %cst_26 {dimension_numbers = #tpu.dot_dimension_numbers<[1], [0], [0], [1], [0, 0, 1, 1], [], []>} : vector<128x72xbf16>, vector<72x8xbf16>, vector<128x8xf32> -> vector<128x8xf32>
    %cst_27 = arith.constant dense<0.000000e+00> : vector<8xf32>
    %96 = vector.multi_reduction <add>, %95, %cst_27 [0] : vector<128x8xf32> to vector<8xf32>
    %97 = vector.shape_cast %96 : vector<8xf32> to vector<1x8xf32>
    %98 = arith.mulf %95, %95 : vector<128x8xf32>
    %cst_28 = arith.constant dense<0.000000e+00> : vector<8xf32>
    %99 = vector.multi_reduction <add>, %98, %cst_28 [0] : vector<128x8xf32> to vector<8xf32>
    %100 = vector.shape_cast %99 : vector<8xf32> to vector<1x8xf32>
    %101 = tpu.concatenate %97, %100 in 0 : vector<1x8xf32>, vector<1x8xf32> -> vector<2x8xf32>
    %c0_29 = arith.constant 0 : index
    %c0_30 = arith.constant 0 : index
    %c0_31 = arith.constant 0 : index
    %102 = vector.load %arg9[%c0_29, %c0_30, %c0_31] : memref<1x2x8xf32, #tpu.memory_space<vmem>>, vector<1x2x8xf32>
    %103 = vector.shape_cast %102 : vector<1x2x8xf32> to vector<2x8xf32>
    %104 = vector.shape_cast %101 : vector<2x8xf32> to vector<1x2x8xf32>
    tpu.vector_store %arg9[%c0_29, %c0_30, %c0_31], %104 {strides = array<i32>} : memref<1x2x8xf32, #tpu.memory_space<vmem>>, vector<1x2x8xf32>,
    %105 = arith.truncf %95 : vector<128x8xf32> to vector<128x8xbf16>
    %c0_32 = arith.constant 0 : index
    %c0_33 = arith.constant 0 : index
    %106 = vector.load %arg8[%c0_32, %c0_33] : memref<128x8xbf16, #tpu.memory_space<vmem>>, vector<128x8xbf16>
    tpu.vector_store %arg8[%c0_32, %c0_33], %105 {strides = array<i32>} : memref<128x8xbf16, #tpu.memory_space<vmem>>, vector<128x8xbf16>,
    return
  }
  func.func @transform_0(%arg0: i32, %arg1: i32) -> (i32, i32) {
    %c2_i32 = arith.constant 2 : i32
    %0 = arith.muli %arg0, %c2_i32 : i32
    %1 = arith.addi %0, %arg1 : i32
    %c0_i32 = arith.constant 0 : i32
    %c0_i32_0 = arith.constant 0 : i32
    return %1, %c0_i32 : i32, i32
  }
  func.func @transform_1(%arg0: i32, %arg1: i32) -> (i32, i32) {
    %c16_i32 = arith.constant 16 : i32
    %0 = arith.muli %arg0, %c16_i32 : i32
    %c8_i32 = arith.constant 8 : i32
    %1 = arith.muli %arg1, %c8_i32 : i32
    %2 = arith.addi %0, %1 : i32
    %c1_i32 = arith.constant 1 : i32
    %3 = arith.subi %2, %c1_i32 : i32
    %c0_i32 = arith.constant 0 : i32
    %4 = arith.maxsi %3, %c0_i32 : i32
    %c0_i32_0 = arith.constant 0 : i32
    %c0_i32_1 = arith.constant 0 : i32
    return %4, %c0_i32_0 : i32, i32
  }
  func.func @transform_2(%arg0: i32, %arg1: i32) -> (i32, i32) {
    %c16_i32 = arith.constant 16 : i32
    %0 = arith.muli %arg0, %c16_i32 : i32
    %c1_i32 = arith.constant 1 : i32
    %1 = arith.addi %arg1, %c1_i32 : i32
    %c8_i32 = arith.constant 8 : i32
    %2 = arith.muli %1, %c8_i32 : i32
    %3 = arith.addi %0, %2 : i32
    %c31_i32 = arith.constant 31 : i32
    %4 = arith.minsi %3, %c31_i32 : i32
    %c0_i32 = arith.constant 0 : i32
    %c0_i32_0 = arith.constant 0 : i32
    return %4, %c0_i32 : i32, i32
  }
  func.func @transform_3(%arg0: i32, %arg1: i32) -> (i32, i32) {
    %c0_i32 = arith.constant 0 : i32
    %c0_i32_0 = arith.constant 0 : i32
    %c0_i32_1 = arith.constant 0 : i32
    return %c0_i32, %c0_i32_0 : i32, i32
  }
  func.func @transform_4(%arg0: i32, %arg1: i32) -> (i32, i32) {
    %c0_i32 = arith.constant 0 : i32
    %c0_i32_0 = arith.constant 0 : i32
    %c0_i32_1 = arith.constant 0 : i32
    return %c0_i32, %c0_i32_0 : i32, i32
  }
  func.func @transform_5(%arg0: i32, %arg1: i32) -> (i32, i32) {
    %c0_i32 = arith.constant 0 : i32
    %c0_i32_0 = arith.constant 0 : i32
    %c0_i32_1 = arith.constant 0 : i32
    return %c0_i32, %c0_i32_0 : i32, i32
  }
  func.func @transform_6(%arg0: i32, %arg1: i32) -> (i32, i32) {
    %c2_i32 = arith.constant 2 : i32
    %0 = arith.muli %arg0, %c2_i32 : i32
    %1 = arith.addi %0, %arg1 : i32
    %c0_i32 = arith.constant 0 : i32
    %c0_i32_0 = arith.constant 0 : i32
    return %1, %c0_i32 : i32, i32
  }
  func.func @transform_7(%arg0: i32, %arg1: i32) -> (i32, i32, i32) {
    %c2_i32 = arith.constant 2 : i32
    %0 = arith.muli %arg0, %c2_i32 : i32
    %1 = arith.addi %0, %arg1 : i32
    %c0_i32 = arith.constant 0 : i32
    %c0_i32_0 = arith.constant 0 : i32
    %c0_i32_1 = arith.constant 0 : i32
    return %1, %c0_i32, %c0_i32_0 : i32, i32, i32
  }
}

</mosaic_0001>

<llo_original>
// kernel: conv_block_forward.5
$region0: #{conv_block_forward.5}
  #allocation0 [shape = 'u32[]', space=smem, size = 0x4, offset = 0x4, fixed_abs, tag = 'smem constant byte address 0x4 - core index']
  #allocation1 [shape = 'u32[144,128]{1,0:T(1,128)}', space=vmem, size = 0x12000, scoped, tag = 'internal scratch']
  %s0 = inlined_call_operand.vmem [shape: bf16[512,8], index: 0, kind: input, shape index: {}]
  %s1 = inlined_call_operand.vmem [shape: f32[1,8], index: 1, kind: input, shape index: {}]
  %s2 = inlined_call_operand.vmem [shape: f32[1,8], index: 2, kind: input, shape index: {}]
  %s3 = inlined_call_operand.vmem [shape: f32[512,8], index: 3, kind: output, shape index: {}]
  %s4 = sld [smem:[#allocation0]]
  $region22: #{conv_block_forward.5} parent=0
    _
  %s6 = ssub.s32 1, %s4
  %s7 = scalar_select 0, %s6, %s4
  // Predicated region
  $region2: #{conv_block_forward.5} parent=0 // pred_check
    _
  $region3: #{conv_block_forward.5} parent=0 // pred_check_branch
    %9 = sbr.rel (0) target = $region5
  $region4: #{conv_block_forward.5} parent=0 // pred_region
    _
  $region5: #{conv_block_forward.5} parent=0 // pred_fallthru
    _
  // Predicated region
  $region6: #{conv_block_forward.5} parent=0 // pred_check
    _
  $region7: #{conv_block_forward.5} parent=0 // pred_check_branch
    %11 = sbr.rel (0) target = $region9
  $region8: #{conv_block_forward.5} parent=0 // pred_region
    _
  $region9: #{conv_block_forward.5} parent=0 // pred_fallthru
    _
  // Predicated region
  $region10: #{conv_block_forward.5} parent=0 // pred_check
    _
  $region11: #{conv_block_forward.5} parent=0 // pred_check_branch
    %13 = sbr.rel (0) target = $region13
  $region12: #{conv_block_forward.5} parent=0 // pred_region
    _
  $region13: #{conv_block_forward.5} parent=0 // pred_fallthru
    _
  %v14 = vld [vmem:[%s0] sm:$0xf]
  %v15 = vld [vmem:[%s0 + $0x4] sm:$0xf]
  %v16 = vld [vmem:[%s0 + $0x8] sm:$0xf]
  %v17 = vld [vmem:[%s0 + $0xc] sm:$0xf]
  %v18 = vld [vmem:[%s0 + $0x10] sm:$0xf]
  %v19 = vld [vmem:[%s0 + $0x14] sm:$0xf]
  %v20 = vld [vmem:[%s0 + $0x18] sm:$0xf]
  %v21 = vld [vmem:[%s0 + $0x1c] sm:$0xf]
  %v22 = vld [vmem:[%s0 + $0x20] sm:$0xf]
  %v23 = vld [vmem:[%s0 + $0x24] sm:$0xf]
  %v24 = vld [vmem:[%s0 + $0x28] sm:$0xf]
  %v25 = vld [vmem:[%s0 + $0x2c] sm:$0xf]
  %v26 = vld [vmem:[%s0 + $0x30] sm:$0xf]
  %v27 = vld [vmem:[%s0 + $0x34] sm:$0xf]
  %v28 = vld [vmem:[%s0 + $0x38] sm:$0xf]
  %v29 = vld [vmem:[%s0 + $0x3c] sm:$0xf]
  %v30 = vld [vmem:[%s0 + $0x40] sm:$0xf]
  %v31 = vld [vmem:[%s0 + $0x44] sm:$0xf]
  %v32 = vld [vmem:[%s0 + $0x48] sm:$0xf]
  %v33 = vld [vmem:[%s0 + $0x4c] sm:$0xf]
  %v34 = vld [vmem:[%s0 + $0x50] sm:$0xf]
  %v35 = vld [vmem:[%s0 + $0x54] sm:$0xf]
  %v36 = vld [vmem:[%s0 + $0x58] sm:$0xf]
  %v37 = vld [vmem:[%s0 + $0x5c] sm:$0xf]
  %v38 = vld [vmem:[%s0 + $0x60] sm:$0xf]
  %v39 = vld [vmem:[%s0 + $0x64] sm:$0xf]
  %v40 = vld [vmem:[%s0 + $0x68] sm:$0xf]
  %v41 = vld [vmem:[%s0 + $0x6c] sm:$0xf]
  %v42 = vld [vmem:[%s0 + $0x70] sm:$0xf]
  %v43 = vld [vmem:[%s0 + $0x74] sm:$0xf]
  %v44 = vld [vmem:[%s0 + $0x78] sm:$0xf]
  %v45 = vld [vmem:[%s0 + $0x7c] sm:$0xf]
  %v46 = vld [vmem:[%s0 + $0x80] sm:$0xf]
  %v47 = vld [vmem:[%s0 + $0x84] sm:$0xf]
  %v48 = vld [vmem:[%s0 + $0x88] sm:$0xf]
  %v49 = vld [vmem:[%s0 + $0x8c] sm:$0xf]
  %v50 = vld [vmem:[%s0 + $0x90] sm:$0xf]
  %v51 = vld [vmem:[%s0 + $0x94] sm:$0xf]
  %v52 = vld [vmem:[%s0 + $0x98] sm:$0xf]
  %v53 = vld [vmem:[%s0 + $0x9c] sm:$0xf]
  %v54 = vld [vmem:[%s0 + $0xa0] sm:$0xf]
  %v55 = vld [vmem:[%s0 + $0xa4] sm:$0xf]
  %v56 = vld [vmem:[%s0 + $0xa8] sm:$0xf]
  %v57 = vld [vmem:[%s0 + $0xac] sm:$0xf]
  %v58 = vld [vmem:[%s0 + $0xb0] sm:$0xf]
  %v59 = vld [vmem:[%s0 + $0xb4] sm:$0xf]
  %v60 = vld [vmem:[%s0 + $0xb8] sm:$0xf]
  %v61 = vld [vmem:[%s0 + $0xbc] sm:$0xf]
  %v62 = vld [vmem:[%s0 + $0xc0] sm:$0xf]
  %v63 = vld [vmem:[%s0 + $0xc4] sm:$0xf]
  %v64 = vld [vmem:[%s0 + $0xc8] sm:$0xf]
  %v65 = vld [vmem:[%s0 + $0xcc] sm:$0xf]
  %v66 = vld [vmem:[%s0 + $0xd0] sm:$0xf]
  %v67 = vld [vmem:[%s0 + $0xd4] sm:$0xf]
  %v68 = vld [vmem:[%s0 + $0xd8] sm:$0xf]
  %v69 = vld [vmem:[%s0 + $0xdc] sm:$0xf]
  %v70 = vld [vmem:[%s0 + $0xe0] sm:$0xf]
  %v71 = vld [vmem:[%s0 + $0xe4] sm:$0xf]
  %v72 = vld [vmem:[%s0 + $0xe8] sm:$0xf]
  %v73 = vld [vmem:[%s0 + $0xec] sm:$0xf]
  %v74 = vld [vmem:[%s0 + $0xf0] sm:$0xf]
  %v75 = vld [vmem:[%s0 + $0xf4] sm:$0xf]
  %v76 = vld [vmem:[%s0 + $0xf8] sm:$0xf]
  %v77 = vld [vmem:[%s0 + $0xfc] sm:$0xf]
  %v78 = vunpack.c.l.bf16 %v14
  %v79 = vunpack.c.l.bf16 %v15
  %v80 = vunpack.c.l.bf16 %v16
  %v81 = vunpack.c.l.bf16 %v17
  %v82 = vunpack.c.l.bf16 %v18
  %v83 = vunpack.c.l.bf16 %v19
  %v84 = vunpack.c.l.bf16 %v20
  %v85 = vunpack.c.l.bf16 %v21
  %v86 = vunpack.c.l.bf16 %v22
  %v87 = vunpack.c.l.bf16 %v23
  %v88 = vunpack.c.l.bf16 %v24
  %v89 = vunpack.c.l.bf16 %v25
  %v90 = vunpack.c.l.bf16 %v26
  %v91 = vunpack.c.l.bf16 %v27
  %v92 = vunpack.c.l.bf16 %v28
  %v93 = vunpack.c.l.bf16 %v29
  %v94 = vunpack.c.l.bf16 %v30
  %v95 = vunpack.c.l.bf16 %v31
  %v96 = vunpack.c.l.bf16 %v32
  %v97 = vunpack.c.l.bf16 %v33
  %v98 = vunpack.c.l.bf16 %v34
  %v99 = vunpack.c.l.bf16 %v35
  %v100 = vunpack.c.l.bf16 %v36
  %v101 = vunpack.c.l.bf16 %v37
  %v102 = vunpack.c.l.bf16 %v38
  %v103 = vunpack.c.l.bf16 %v39
  %v104 = vunpack.c.l.bf16 %v40
  %v105 = vunpack.c.l.bf16 %v41
  %v106 = vunpack.c.l.bf16 %v42
  %v107 = vunpack.c.l.bf16 %v43
  %v108 = vunpack.c.l.bf16 %v44
  %v109 = vunpack.c.l.bf16 %v45
  %v110 = vunpack.c.l.bf16 %v46
  %v111 = vunpack.c.l.bf16 %v47
  %v112 = vunpack.c.l.bf16 %v48
  %v113 = vunpack.c.l.bf16 %v49
  %v114 = vunpack.c.l.bf16 %v50
  %v115 = vunpack.c.l.bf16 %v51
  %v116 = vunpack.c.l.bf16 %v52
  %v117 = vunpack.c.l.bf16 %v53
  %v118 = vunpack.c.l.bf16 %v54
  %v119 = vunpack.c.l.bf16 %v55
  %v120 = vunpack.c.l.bf16 %v56
  %v121 = vunpack.c.l.bf16 %v57
  %v122 = vunpack.c.l.bf16 %v58
  %v123 = vunpack.c.l.bf16 %v59
  %v124 = vunpack.c.l.bf16 %v60
  %v125 = vunpack.c.l.bf16 %v61
  %v126 = vunpack.c.l.bf16 %v62
  %v127 = vunpack.c.l.bf16 %v63
  %v128 = vunpack.c.l.bf16 %v64
  %v129 = vunpack.c.l.bf16 %v65
  %v130 = vunpack.c.l.bf16 %v66
  %v131 = vunpack.c.l.bf16 %v67
  %v132 = vunpack.c.l.bf16 %v68
  %v133 = vunpack.c.l.bf16 %v69
  %v134 = vunpack.c.l.bf16 %v70
  %v135 = vunpack.c.l.bf16 %v71
  %v136 = vunpack.c.l.bf16 %v72
  %v137 = vunpack.c.l.bf16 %v73
  %v138 = vunpack.c.l.bf16 %v74
  %v139 = vunpack.c.l.bf16 %v75
  %v140 = vunpack.c.l.bf16 %v76
  %v141 = vunpack.c.l.bf16 %v77
  %v142 = vld [vmem:[%s1] sm:$0x1]
  %v144 = vlaneseq
  %v145 = vshrl.u32 %v144, 7
  %v146 = vsub.s32 0, %v145
  %v147 = vrot.slane %v142, %v146
  %v149 = vmul.f32 %v78, %v147
  %v150 = vmul.f32 %v79, %v147
  %v151 = vmul.f32 %v80, %v147
  %v152 = vmul.f32 %v81, %v147
  %v153 = vmul.f32 %v82, %v147
  %v154 = vmul.f32 %v83, %v147
  %v155 = vmul.f32 %v84, %v147
  %v156 = vmul.f32 %v85, %v147
  %v157 = vmul.f32 %v86, %v147
  %v158 = vmul.f32 %v87, %v147
  %v159 = vmul.f32 %v88, %v147
  %v160 = vmul.f32 %v89, %v147
  %v161 = vmul.f32 %v90, %v147
  %v162 = vmul.f32 %v91, %v147
  %v163 = vmul.f32 %v92, %v147
  %v164 = vmul.f32 %v93, %v147
  %v165 = vmul.f32 %v94, %v147
  %v166 = vmul.f32 %v95, %v147
  %v167 = vmul.f32 %v96, %v147
  %v168 = vmul.f32 %v97, %v147
  %v169 = vmul.f32 %v98, %v147
  %v170 = vmul.f32 %v99, %v147
  %v171 = vmul.f32 %v100, %v147
  %v172 = vmul.f32 %v101, %v147
  %v173 = vmul.f32 %v102, %v147
  %v174 = vmul.f32 %v103, %v147
  %v175 = vmul.f32 %v104, %v147
  %v176 = vmul.f32 %v105, %v147
  %v177 = vmul.f32 %v106, %v147
  %v178 = vmul.f32 %v107, %v147
  %v179 = vmul.f32 %v108, %v147
  %v180 = vmul.f32 %v109, %v147
  %v181 = vmul.f32 %v110, %v147
  %v182 = vmul.f32 %v111, %v147
  %v183 = vmul.f32 %v112, %v147
  %v184 = vmul.f32 %v113, %v147
  %v185 = vmul.f32 %v114, %v147
  %v186 = vmul.f32 %v115, %v147
  %v187 = vmul.f32 %v116, %v147
  %v188 = vmul.f32 %v117, %v147
  %v189 = vmul.f32 %v118, %v147
  %v190 = vmul.f32 %v119, %v147
  %v191 = vmul.f32 %v120, %v147
  %v192 = vmul.f32 %v121, %v147
  %v193 = vmul.f32 %v122, %v147
  %v194 = vmul.f32 %v123, %v147
  %v195 = vmul.f32 %v124, %v147
  %v196 = vmul.f32 %v125, %v147
  %v197 = vmul.f32 %v126, %v147
  %v198 = vmul.f32 %v127, %v147
  %v199 = vmul.f32 %v128, %v147
  %v200 = vmul.f32 %v129, %v147
  %v201 = vmul.f32 %v130, %v147
  %v202 = vmul.f32 %v131, %v147
  %v203 = vmul.f32 %v132, %v147
  %v204 = vmul.f32 %v133, %v147
  %v205 = vmul.f32 %v134, %v147
  %v206 = vmul.f32 %v135, %v147
  %v207 = vmul.f32 %v136, %v147
  %v208 = vmul.f32 %v137, %v147
  %v209 = vmul.f32 %v138, %v147
  %v210 = vmul.f32 %v139, %v147
  %v211 = vmul.f32 %v140, %v147
  %v212 = vmul.f32 %v141, %v147
  %v213 = vld [vmem:[%s2] sm:$0x1]
  %v215 = vlaneseq
  %v216 = vshrl.u32 %v215, 7
  %v217 = vsub.s32 0, %v216
  %v218 = vrot.slane %v213, %v217
  %v220 = vadd.f32 %v149, %v218
  %v221 = vadd.f32 %v150, %v218
  %v222 = vadd.f32 %v151, %v218
  %v223 = vadd.f32 %v152, %v218
  %v224 = vadd.f32 %v153, %v218
  %v225 = vadd.f32 %v154, %v218
  %v226 = vadd.f32 %v155, %v218
  %v227 = vadd.f32 %v156, %v218
  %v228 = vadd.f32 %v157, %v218
  %v229 = vadd.f32 %v158, %v218
  %v230 = vadd.f32 %v159, %v218
  %v231 = vadd.f32 %v160, %v218
  %v232 = vadd.f32 %v161, %v218
  %v233 = vadd.f32 %v162, %v218
  %v234 = vadd.f32 %v163, %v218
  %v235 = vadd.f32 %v164, %v218
  %v236 = vadd.f32 %v165, %v218
  %v237 = vadd.f32 %v166, %v218
  %v238 = vadd.f32 %v167, %v218
  %v239 = vadd.f32 %v168, %v218
  %v240 = vadd.f32 %v169, %v218
  %v241 = vadd.f32 %v170, %v218
  %v242 = vadd.f32 %v171, %v218
  %v243 = vadd.f32 %v172, %v218
  %v244 = vadd.f32 %v173, %v218
  %v245 = vadd.f32 %v174, %v218
  %v246 = vadd.f32 %v175, %v218
  %v247 = vadd.f32 %v176, %v218
  %v248 = vadd.f32 %v177, %v218
  %v249 = vadd.f32 %v178, %v218
  %v250 = vadd.f32 %v179, %v218
  %v251 = vadd.f32 %v180, %v218
  %v252 = vadd.f32 %v181, %v218
  %v253 = vadd.f32 %v182, %v218
  %v254 = vadd.f32 %v183, %v218
  %v255 = vadd.f32 %v184, %v218
  %v256 = vadd.f32 %v185, %v218
  %v257 = vadd.f32 %v186, %v218
  %v258 = vadd.f32 %v187, %v218
  %v259 = vadd.f32 %v188, %v218
  %v260 = vadd.f32 %v189, %v218
  %v261 = vadd.f32 %v190, %v218
  %v262 = vadd.f32 %v191, %v218
  %v263 = vadd.f32 %v192, %v218
  %v264 = vadd.f32 %v193, %v218
  %v265 = vadd.f32 %v194, %v218
  %v266 = vadd.f32 %v195, %v218
  %v267 = vadd.f32 %v196, %v218
  %v268 = vadd.f32 %v197, %v218
  %v269 = vadd.f32 %v198, %v218
  %v270 = vadd.f32 %v199, %v218
  %v271 = vadd.f32 %v200, %v218
  %v272 = vadd.f32 %v201, %v218
  %v273 = vadd.f32 %v202, %v218
  %v274 = vadd.f32 %v203, %v218
  %v275 = vadd.f32 %v204, %v218
  %v276 = vadd.f32 %v205, %v218
  %v277 = vadd.f32 %v206, %v218
  %v278 = vadd.f32 %v207, %v218
  %v279 = vadd.f32 %v208, %v218
  %v280 = vadd.f32 %v209, %v218
  %v281 = vadd.f32 %v210, %v218
  %v282 = vadd.f32 %v211, %v218
  %v283 = vadd.f32 %v212, %v218
  %v284 = vmax.f32 %v220, 0.0
  %v285 = vmax.f32 %v221, 0.0
  %v286 = vmax.f32 %v222, 0.0
  %v287 = vmax.f32 %v223, 0.0
  %v288 = vmax.f32 %v224, 0.0
  %v289 = vmax.f32 %v225, 0.0
  %v290 = vmax.f32 %v226, 0.0
  %v291 = vmax.f32 %v227, 0.0
  %v292 = vmax.f32 %v228, 0.0
  %v293 = vmax.f32 %v229, 0.0
  %v294 = vmax.f32 %v230, 0.0
  %v295 = vmax.f32 %v231, 0.0
  %v296 = vmax.f32 %v232, 0.0
  %v297 = vmax.f32 %v233, 0.0
  %v298 = vmax.f32 %v234, 0.0
  %v299 = vmax.f32 %v235, 0.0
  %v300 = vmax.f32 %v236, 0.0
  %v301 = vmax.f32 %v237, 0.0
  %v302 = vmax.f32 %v238, 0.0
  %v303 = vmax.f32 %v239, 0.0
  %v304 = vmax.f32 %v240, 0.0
  %v305 = vmax.f32 %v241, 0.0
  %v306 = vmax.f32 %v242, 0.0
  %v307 = vmax.f32 %v243, 0.0
  %v308 = vmax.f32 %v244, 0.0
  %v309 = vmax.f32 %v245, 0.0
  %v310 = vmax.f32 %v246, 0.0
  %v311 = vmax.f32 %v247, 0.0
  %v312 = vmax.f32 %v248, 0.0
  %v313 = vmax.f32 %v249, 0.0
  %v314 = vmax.f32 %v250, 0.0
  %v315 = vmax.f32 %v251, 0.0
  %v316 = vmax.f32 %v252, 0.0
  %v317 = vmax.f32 %v253, 0.0
  %v318 = vmax.f32 %v254, 0.0
  %v319 = vmax.f32 %v255, 0.0
  %v320 = vmax.f32 %v256, 0.0
  %v321 = vmax.f32 %v257, 0.0
  %v322 = vmax.f32 %v258, 0.0
  %v323 = vmax.f32 %v259, 0.0
  %v324 = vmax.f32 %v260, 0.0
  %v325 = vmax.f32 %v261, 0.0
  %v326 = vmax.f32 %v262, 0.0
  %v327 = vmax.f32 %v263, 0.0
  %v328 = vmax.f32 %v264, 0.0
  %v329 = vmax.f32 %v265, 0.0
  %v330 = vmax.f32 %v266, 0.0
  %v331 = vmax.f32 %v267, 0.0
  %v332 = vmax.f32 %v268, 0.0
  %v333 = vmax.f32 %v269, 0.0
  %v334 = vmax.f32 %v270, 0.0
  %v335 = vmax.f32 %v271, 0.0
  %v336 = vmax.f32 %v272, 0.0
  %v337 = vmax.f32 %v273, 0.0
  %v338 = vmax.f32 %v274, 0.0
  %v339 = vmax.f32 %v275, 0.0
  %v340 = vmax.f32 %v276, 0.0
  %v341 = vmax.f32 %v277, 0.0
  %v342 = vmax.f32 %v278, 0.0
  %v343 = vmax.f32 %v279, 0.0
  %v344 = vmax.f32 %v280, 0.0
  %v345 = vmax.f32 %v281, 0.0
  %v346 = vmax.f32 %v282, 0.0
  %v347 = vmax.f32 %v283, 0.0
  %vm348 = vcmask 64512
  %349 = vst.msk [vmem:[%s3] sm:$0xff] %vm348, %v284
  %350 = vst.msk [vmem:[%s3 + $0x8] sm:$0xff] %vm348, %v285
  %351 = vst.msk [vmem:[%s3 + $0x10] sm:$0xff] %vm348, %v286
  %352 = vst.msk [vmem:[%s3 + $0x18] sm:$0xff] %vm348, %v287
  %353 = vst.msk [vmem:[%s3 + $0x20] sm:$0xff] %vm348, %v288
  %354 = vst.msk [vmem:[%s3 + $0x28] sm:$0xff] %vm348, %v289
  %355 = vst.msk [vmem:[%s3 + $0x30] sm:$0xff] %vm348, %v290
  %356 = vst.msk [vmem:[%s3 + $0x38] sm:$0xff] %vm348, %v291
  %357 = vst.msk [vmem:[%s3 + $0x40] sm:$0xff] %vm348, %v292
  %358 = vst.msk [vmem:[%s3 + $0x48] sm:$0xff] %vm348, %v293
  %359 = vst.msk [vmem:[%s3 + $0x50] sm:$0xff] %vm348, %v294
  %360 = vst.msk [vmem:[%s3 + $0x58] sm:$0xff] %vm348, %v295
  %361 = vst.msk [vmem:[%s3 + $0x60] sm:$0xff] %vm348, %v296
  %362 = vst.msk [vmem:[%s3 + $0x68] sm:$0xff] %vm348, %v297
  %363 = vst.msk [vmem:[%s3 + $0x70] sm:$0xff] %vm348, %v298
  %364 = vst.msk [vmem:[%s3 + $0x78] sm:$0xff] %vm348, %v299
  %365 = vst.msk [vmem:[%s3 + $0x80] sm:$0xff] %vm348, %v300
  %366 = vst.msk [vmem:[%s3 + $0x88] sm:$0xff] %vm348, %v301
  %367 = vst.msk [vmem:[%s3 + $0x90] sm:$0xff] %vm348, %v302
  %368 = vst.msk [vmem:[%s3 + $0x98] sm:$0xff] %vm348, %v303
  %369 = vst.msk [vmem:[%s3 + $0xa0] sm:$0xff] %vm348, %v304
  %370 = vst.msk [vmem:[%s3 + $0xa8] sm:$0xff] %vm348, %v305
  %371 = vst.msk [vmem:[%s3 + $0xb0] sm:$0xff] %vm348, %v306
  %372 = vst.msk [vmem:[%s3 + $0xb8] sm:$0xff] %vm348, %v307
  %373 = vst.msk [vmem:[%s3 + $0xc0] sm:$0xff] %vm348, %v308
  %374 = vst.msk [vmem:[%s3 + $0xc8] sm:$0xff] %vm348, %v309
  %375 = vst.msk [vmem:[%s3 + $0xd0] sm:$0xff] %vm348, %v310
  %376 = vst.msk [vmem:[%s3 + $0xd8] sm:$0xff] %vm348, %v311
  %377 = vst.msk [vmem:[%s3 + $0xe0] sm:$0xff] %vm348, %v312
  %378 = vst.msk [vmem:[%s3 + $0xe8] sm:$0xff] %vm348, %v313
  %379 = vst.msk [vmem:[%s3 + $0xf0] sm:$0xff] %vm348, %v314
  %380 = vst.msk [vmem:[%s3 + $0xf8] sm:$0xff] %vm348, %v315
  %381 = vst.msk [vmem:[%s3 + $0x100] sm:$0xff] %vm348, %v316
  %382 = vst.msk [vmem:[%s3 + $0x108] sm:$0xff] %vm348, %v317
  %383 = vst.msk [vmem:[%s3 + $0x110] sm:$0xff] %vm348, %v318
  %384 = vst.msk [vmem:[%s3 + $0x118] sm:$0xff] %vm348, %v319
  %385 = vst.msk [vmem:[%s3 + $0x120] sm:$0xff] %vm348, %v320
  %386 = vst.msk [vmem:[%s3 + $0x128] sm:$0xff] %vm348, %v321
  %387 = vst.msk [vmem:[%s3 + $0x130] sm:$0xff] %vm348, %v322
  %388 = vst.msk [vmem:[%s3 + $0x138] sm:$0xff] %vm348, %v323
  %389 = vst.msk [vmem:[%s3 + $0x140] sm:$0xff] %vm348, %v324
  %390 = vst.msk [vmem:[%s3 + $0x148] sm:$0xff] %vm348, %v325
  %391 = vst.msk [vmem:[%s3 + $0x150] sm:$0xff] %vm348, %v326
  %392 = vst.msk [vmem:[%s3 + $0x158] sm:$0xff] %vm348, %v327
  %393 = vst.msk [vmem:[%s3 + $0x160] sm:$0xff] %vm348, %v328
  %394 = vst.msk [vmem:[%s3 + $0x168] sm:$0xff] %vm348, %v329
  %395 = vst.msk [vmem:[%s3 + $0x170] sm:$0xff] %vm348, %v330
  %396 = vst.msk [vmem:[%s3 + $0x178] sm:$0xff] %vm348, %v331
  %397 = vst.msk [vmem:[%s3 + $0x180] sm:$0xff] %vm348, %v332
  %398 = vst.msk [vmem:[%s3 + $0x188] sm:$0xff] %vm348, %v333
  %399 = vst.msk [vmem:[%s3 + $0x190] sm:$0xff] %vm348, %v334
  %400 = vst.msk [vmem:[%s3 + $0x198] sm:$0xff] %vm348, %v335
  %401 = vst.msk [vmem:[%s3 + $0x1a0] sm:$0xff] %vm348, %v336
  %402 = vst.msk [vmem:[%s3 + $0x1a8] sm:$0xff] %vm348, %v337
  %403 = vst.msk [vmem:[%s3 + $0x1b0] sm:$0xff] %vm348, %v338
  %404 = vst.msk [vmem:[%s3 + $0x1b8] sm:$0xff] %vm348, %v339
  %405 = vst.msk [vmem:[%s3 + $0x1c0] sm:$0xff] %vm348, %v340
  %406 = vst.msk [vmem:[%s3 + $0x1c8] sm:$0xff] %vm348, %v341
  %407 = vst.msk [vmem:[%s3 + $0x1d0] sm:$0xff] %vm348, %v342
  %408 = vst.msk [vmem:[%s3 + $0x1d8] sm:$0xff] %vm348, %v343
  %409 = vst.msk [vmem:[%s3 + $0x1e0] sm:$0xff] %vm348, %v344
  %410 = vst.msk [vmem:[%s3 + $0x1e8] sm:$0xff] %vm348, %v345
  %411 = vst.msk [vmem:[%s3 + $0x1f0] sm:$0xff] %vm348, %v346
  %412 = vst.msk [vmem:[%s3 + $0x1f8] sm:$0xff] %vm348, %v347
  // Predicated region
  $region14: #{conv_block_forward.5} parent=0 // pred_check
    _
  $region15: #{conv_block_forward.5} parent=0 // pred_check_branch
    %414 = sbr.rel (0) target = $region17
  $region16: #{conv_block_forward.5} parent=0 // pred_region
    _
  $region17: #{conv_block_forward.5} parent=0 // pred_fallthru
    _
  // Predicated region
  $region18: #{conv_block_forward.5} parent=0 // pred_check
    _
  $region19: #{conv_block_forward.5} parent=0 // pred_check_branch
    %416 = sbr.rel (0) target = $region21
  $region20: #{conv_block_forward.5} parent=0 // pred_region
    _
  $region21: #{conv_block_forward.5} parent=0 // pred_fallthru
    _

// kernel: conv_block_forward.4
$region0: #{conv_block_forward.4}
  #allocation0 [shape = 'u32[]', space=smem, size = 0x4, offset = 0x4, fixed_abs, tag = 'smem constant byte address 0x4 - core index']
  #allocation1 [shape = 'u32[144,128]{1,0:T(1,128)}', space=vmem, size = 0x12000, scoped, tag = 'internal scratch']
  %s0 = inlined_call_operand.vmem [shape: bf16[512,8], index: 0, kind: input, shape index: {}, may-alias: {0,1,2}]
  %s1 = inlined_call_operand.vmem [shape: bf16[512,8], index: 1, kind: input, shape index: {}, may-alias: {0,1,2}]
  %s2 = inlined_call_operand.vmem [shape: bf16[512,8], index: 2, kind: input, shape index: {}, may-alias: {0,1,2}]
  %s3 = inlined_call_operand.vmem [shape: bf16[72,8], index: 3, kind: input, shape index: {}]
  %s4 = inlined_call_operand.vmem [shape: f32[1,8], index: 4, kind: input, shape index: {}]
  %s5 = inlined_call_operand.vmem [shape: f32[1,8], index: 5, kind: input, shape index: {}]
  %s6 = inlined_call_operand.vmem [shape: bf16[512,8], index: 6, kind: output, shape index: {0}]
  %s7 = inlined_call_operand.vmem [shape: f32[4,2,8], index: 7, kind: output, shape index: {1}]
  %8 = xla_tuple %s6, %s7
  %s9 = sld [smem:[#allocation0]]
  $region65: #{conv_block_forward.4} parent=0
    _
  %s11 = ssub.s32 1, %s9
  %s12 = scalar_select 0, %s11, %s9
  loop: start=0, step=1, limit=6
  $region2: #{conv_block_forward.4} parent=0 // loop_pre_header
    _
  $region3: #{conv_block_forward.4} parent=0 // loop_header
    %s14 = sphi 0, %s18
    %p15 = scmp.ge.s32.totalorder %s14, 6
    %s21 = sphi 0, %s33
    %s22 = sphi 0, %s29
    %s23 = sphi 0, %s21
    %s24 = sphi 0, %s22
    %s25 = sphi 0, %s23
    %s26 = sphi 0, %s24
    %s40 = sphi 0, %s42
    %s43 = sphi 0, %s40
    %s44 = sphi 0, %s43
    %s60 = sphi 0, %s44
    %s78 = sphi 0, %s80
    %s81 = sphi 0, %s78
    %s82 = sphi 0, %s81
    %s98 = sphi 0, %s82
    %s116 = sphi 0, %s118
    %s119 = sphi 0, %s116
    %s120 = sphi 0, %s119
    %s136 = sphi 0, %s120
    %s140 = sphi 0, %s140
    %s142 = sphi 0, %s140
    %s143 = sphi 0, %s142
    %s157 = sphi 0, %s143
    %s161 = sphi 0, %s161
    %s163 = sphi 0, %s161
    %s164 = sphi 0, %s163
    %s178 = sphi 0, %s164
    %s182 = sphi 0, %s182
    %s184 = sphi 0, %s182
    %s185 = sphi 0, %s184
    %s199 = sphi 0, %s185
    %s209 = sphi 0, %s211
    %s212 = sphi 0, %s209
    %s213 = sphi 0, %s212
    %s229 = sphi 0, %s213
    %s239 = sphi 0, %s241
    %s242 = sphi 0, %s239
    %s243 = sphi 0, %s242
    %s259 = sphi 0, %s243
  $region4: #{conv_block_forward.4} parent=0 // loop_header_branch
    %17 = sbr.rel (%p15) target = $region8
  $region5: #{conv_block_forward.4} parent=0 // loop_body
    %s19 = ssub.s32 %s14, 1
    %s20 = ssub.s32 %s14, 2
    %s27 = sadd.s32 1, %s22
    %p28 = scmp.ge.s32.totalorder %s27, 2
    %s29 = scalar_select %p28, 0, %s27
    %s30 = sadd.s32 1, %s21
    %s31 = scalar_select %p28, %s30, %s21
    %p32 = scmp.ge.s32.totalorder %s31, 2
    %s33 = scalar_select %p32, 0, %s31
    %s34 = smul.u32 %s21, 2
    %s35 = sadd.s32 %s34, %s22
    %s36 = smul.u32 %s33, 2
    %s37 = sadd.s32 %s36, %s29
    %s38 = ssub.s32 %s35, %s37
    %p39 = scmp.eq.s32.totalorder %s38, 0
    %s41 = sadd.s32 %s40, 1
    %s42 = scalar_select %p39, %s40, %s41
    %p45 = pneg %p39
    %p46 = scmp.eq.s32.totalorder %s14, 3
    %p47 = por %p45, %p46
    %p48 = scmp.ne.s32.totalorder %s40, %s43
    %p49 = scmp.eq.s32.totalorder %s14, 0
    %p50 = por %p48, %p49
    %p51 = scmp.ne.s32.totalorder %s40, %s43
    %p52 = scmp.eq.s32.totalorder %s19, 3
    %p53 = por %p51, %p52
    %p54 = scmp.ne.s32.totalorder %s43, %s44
    %p55 = scmp.eq.s32.totalorder %s19, 0
    %p56 = por %p54, %p55
    %p57 = scmp.ne.s32.totalorder %s43, %s44
    %p58 = scmp.eq.s32.totalorder %s20, 3
    %p59 = por %p57, %p58
    %p61 = scmp.ne.s32.totalorder %s44, %s60
    %p62 = scmp.eq.s32.totalorder %s20, 0
    %p63 = por %p61, %p62
    %s64 = smul.u32 %s21, 16
    %s65 = smul.u32 %s22, 8
    %s66 = sadd.s32 %s64, %s65
    %s67 = ssub.s32 %s66, 1
    %p68 = scmp.gt.s32.totalorder %s67, 0
    %s69 = scalar_select %p68, %s67, 0
    %s70 = smul.u32 %s33, 16
    %s71 = smul.u32 %s29, 8
    %s72 = sadd.s32 %s70, %s71
    %s73 = ssub.s32 %s72, 1
    %p74 = scmp.gt.s32.totalorder %s73, 0
    %s75 = scalar_select %p74, %s73, 0
    %s76 = ssub.s32 %s69, %s75
    %p77 = scmp.eq.s32.totalorder %s76, 0
    %s79 = sadd.s32 %s78, 1
    %s80 = scalar_select %p77, %s78, %s79
    %p83 = pneg %p77
    %p84 = scmp.eq.s32.totalorder %s14, 3
    %p85 = por %p83, %p84
    %p86 = scmp.ne.s32.totalorder %s78, %s81
    %p87 = scmp.eq.s32.totalorder %s14, 0
    %p88 = por %p86, %p87
    %p89 = scmp.ne.s32.totalorder %s78, %s81
    %p90 = scmp.eq.s32.totalorder %s19, 3
    %p91 = por %p89, %p90
    %p92 = scmp.ne.s32.totalorder %s81, %s82
    %p93 = scmp.eq.s32.totalorder %s19, 0
    %p94 = por %p92, %p93
    %p95 = scmp.ne.s32.totalorder %s81, %s82
    %p96 = scmp.eq.s32.totalorder %s20, 3
    %p97 = por %p95, %p96
    %p99 = scmp.ne.s32.totalorder %s82, %s98
    %p100 = scmp.eq.s32.totalorder %s20, 0
    %p101 = por %p99, %p100
    %s102 = smul.u32 %s21, 16
    %s103 = sadd.s32 %s22, 1
    %s104 = smul.u32 %s103, 8
    %s105 = sadd.s32 %s102, %s104
    %p106 = scmp.lt.s32.totalorder %s105, 31
    %s107 = scalar_select %p106, %s105, 31
    %s108 = smul.u32 %s33, 16
    %s109 = sadd.s32 %s29, 1
    %s110 = smul.u32 %s109, 8
    %s111 = sadd.s32 %s108, %s110
    %p112 = scmp.lt.s32.totalorder %s111, 31
    %s113 = scalar_select %p112, %s111, 31
    %s114 = ssub.s32 %s107, %s113
    %p115 = scmp.eq.s32.totalorder %s114, 0
    %s117 = sadd.s32 %s116, 1
    %s118 = scalar_select %p115, %s116, %s117
    %p121 = pneg %p115
    %p122 = scmp.eq.s32.totalorder %s14, 3
    %p123 = por %p121, %p122
    %p124 = scmp.ne.s32.totalorder %s116, %s119
    %p125 = scmp.eq.s32.totalorder %s14, 0
    %p126 = por %p124, %p125
    %p127 = scmp.ne.s32.totalorder %s116, %s119
    %p128 = scmp.eq.s32.totalorder %s19, 3
    %p129 = por %p127, %p128
    %p130 = scmp.ne.s32.totalorder %s119, %s120
    %p131 = scmp.eq.s32.totalorder %s19, 0
    %p132 = por %p130, %p131
    %p133 = scmp.ne.s32.totalorder %s119, %s120
    %p134 = scmp.eq.s32.totalorder %s20, 3
    %p135 = por %p133, %p134
    %p137 = scmp.ne.s32.totalorder %s120, %s136
    %p138 = scmp.eq.s32.totalorder %s20, 0
    %p139 = por %p137, %p138
    %s141 = sadd.s32 %s140, 1
    %p144 = scmp.eq.s32.totalorder %s14, 3
    %p145 = scmp.ne.s32.totalorder %s140, %s142
    %p146 = scmp.eq.s32.totalorder %s14, 0
    %p147 = por %p145, %p146
    %p148 = scmp.ne.s32.totalorder %s140, %s142
    %p149 = scmp.eq.s32.totalorder %s19, 3
    %p150 = por %p148, %p149
    %p151 = scmp.ne.s32.totalorder %s142, %s143
    %p152 = scmp.eq.s32.totalorder %s19, 0
    %p153 = por %p151, %p152
    %p154 = scmp.ne.s32.totalorder %s142, %s143
    %p155 = scmp.eq.s32.totalorder %s20, 3
    %p156 = por %p154, %p155
    %p158 = scmp.ne.s32.totalorder %s143, %s157
    %p159 = scmp.eq.s32.totalorder %s20, 0
    %p160 = por %p158, %p159
    %s162 = sadd.s32 %s161, 1
    %p165 = scmp.eq.s32.totalorder %s14, 3
    %p166 = scmp.ne.s32.totalorder %s161, %s163
    %p167 = scmp.eq.s32.totalorder %s14, 0
    %p168 = por %p166, %p167
    %p169 = scmp.ne.s32.totalorder %s161, %s163
    %p170 = scmp.eq.s32.totalorder %s19, 3
    %p171 = por %p169, %p170
    %p172 = scmp.ne.s32.totalorder %s163, %s164
    %p173 = scmp.eq.s32.totalorder %s19, 0
    %p174 = por %p172, %p173
    %p175 = scmp.ne.s32.totalorder %s163, %s164
    %p176 = scmp.eq.s32.totalorder %s20, 3
    %p177 = por %p175, %p176
    %p179 = scmp.ne.s32.totalorder %s164, %s178
    %p180 = scmp.eq.s32.totalorder %s20, 0
    %p181 = por %p179, %p180
    %s183 = sadd.s32 %s182, 1
    %p186 = scmp.eq.s32.totalorder %s14, 3
    %p187 = scmp.ne.s32.totalorder %s182, %s184
    %p188 = scmp.eq.s32.totalorder %s14, 0
    %p189 = por %p187, %p188
    %p190 = scmp.ne.s32.totalorder %s182, %s184
    %p191 = scmp.eq.s32.totalorder %s19, 3
    %p192 = por %p190, %p191
    %p193 = scmp.ne.s32.totalorder %s184, %s185
    %p194 = scmp.eq.s32.totalorder %s19, 0
    %p195 = por %p193, %p194
    %p196 = scmp.ne.s32.totalorder %s184, %s185
    %p197 = scmp.eq.s32.totalorder %s20, 3
    %p198 = por %p196, %p197
    %p200 = scmp.ne.s32.totalorder %s185, %s199
    %p201 = scmp.eq.s32.totalorder %s20, 0
    %p202 = por %p200, %p201
    %s203 = smul.u32 %s21, 2
    %s204 = sadd.s32 %s203, %s22
    %s205 = smul.u32 %s33, 2
    %s206 = sadd.s32 %s205, %s29
    %s207 = ssub.s32 %s204, %s206
    %p208 = scmp.eq.s32.totalorder %s207, 0
    %s210 = sadd.s32 %s209, 1
    %s211 = scalar_select %p208, %s209, %s210
    %p214 = pneg %p208
    %p215 = scmp.eq.s32.totalorder %s14, 3
    %p216 = por %p214, %p215
    %p217 = scmp.ne.s32.totalorder %s209, %s212
    %p218 = scmp.eq.s32.totalorder %s14, 0
    %p219 = por %p217, %p218
    %p220 = scmp.ne.s32.totalorder %s209, %s212
    %p221 = scmp.eq.s32.totalorder %s19, 3
    %p222 = por %p220, %p221
    %p223 = scmp.ne.s32.totalorder %s212, %s213
    %p224 = scmp.eq.s32.totalorder %s19, 0
    %p225 = por %p223, %p224
    %p226 = scmp.ne.s32.totalorder %s212, %s213
    %p227 = scmp.eq.s32.totalorder %s20, 3
    %p228 = por %p226, %p227
    %p230 = scmp.ne.s32.totalorder %s213, %s229
    %p231 = scmp.eq.s32.totalorder %s20, 0
    %p232 = por %p230, %p231
    %s233 = smul.u32 %s21, 2
    %s234 = sadd.s32 %s233, %s22
    %s235 = smul.u32 %s33, 2
    %s236 = sadd.s32 %s235, %s29
    %s237 = ssub.s32 %s234, %s236
    %p238 = scmp.eq.s32.totalorder %s237, 0
    %s240 = sadd.s32 %s239, 1
    %s241 = scalar_select %p238, %s239, %s240
    %p244 = pneg %p238
    %p245 = scmp.eq.s32.totalorder %s14, 3
    %p246 = por %p244, %p245
    %p247 = scmp.ne.s32.totalorder %s239, %s242
    %p248 = scmp.eq.s32.totalorder %s14, 0
    %p249 = por %p247, %p248
    %p250 = scmp.ne.s32.totalorder %s239, %s242
    %p251 = scmp.eq.s32.totalorder %s19, 3
    %p252 = por %p250, %p251
    %p253 = scmp.ne.s32.totalorder %s242, %s243
    %p254 = scmp.eq.s32.totalorder %s19, 0
    %p255 = por %p253, %p254
    %p256 = scmp.ne.s32.totalorder %s242, %s243
    %p257 = scmp.eq.s32.totalorder %s20, 3
    %p258 = por %p256, %p257
    %p260 = scmp.ne.s32.totalorder %s243, %s259
    %p261 = scmp.eq.s32.totalorder %s20, 0
    %p262 = por %p260, %p261
    %p263 = scmp.le.s32.totalorder 1, %s14
    %p264 = scmp.lt.s32.totalorder %s14, 5
    %p265 = pnand %p263, %p264
    %p266 = pneg %p265
    // Predicated region
    $region9: #{conv_block_forward.4} parent=5 // pred_check
      _
    $region10: #{conv_block_forward.4} parent=5 // pred_check_branch
      %268 = sbr.rel (%p265) target = $region12
    $region11: #{conv_block_forward.4} parent=5 // pred_region
      %s269 = ssub.s32 %s14, 1
      // Predicated region
      $region13: #{conv_block_forward.4} parent=11 // pred_check
        %p270 = pneg %p153
      $region14: #{conv_block_forward.4} parent=11 // pred_check_branch
        %272 = sbr.rel (%p270) target = $region16
      $region15: #{conv_block_forward.4} parent=11 // pred_region
        _
      $region16: #{conv_block_forward.4} parent=11 // pred_fallthru
        _
      // Predicated region
      $region17: #{conv_block_forward.4} parent=11 // pred_check
        %p273 = pneg %p174
      $region18: #{conv_block_forward.4} parent=11 // pred_check_branch
        %275 = sbr.rel (%p273) target = $region20
      $region19: #{conv_block_forward.4} parent=11 // pred_region
        _
      $region20: #{conv_block_forward.4} parent=11 // pred_fallthru
        _
      // Predicated region
      $region21: #{conv_block_forward.4} parent=11 // pred_check
        %p276 = pneg %p195
      $region22: #{conv_block_forward.4} parent=11 // pred_check_branch
        %278 = sbr.rel (%p276) target = $region24
      $region23: #{conv_block_forward.4} parent=11 // pred_region
        _
      $region24: #{conv_block_forward.4} parent=11 // pred_fallthru
        _
    $region12: #{conv_block_forward.4} parent=5 // pred_fallthru
      _
    %p279 = scmp.lt.s32.totalorder %s14, 4
    // Predicated region
    $region25: #{conv_block_forward.4} parent=5 // pred_check
      %p280 = pneg %p279
    $region26: #{conv_block_forward.4} parent=5 // pred_check_branch
      %282 = sbr.rel (%p280) target = $region28
    $region27: #{conv_block_forward.4} parent=5 // pred_region
      // Predicated region
      $region29: #{conv_block_forward.4} parent=27 // pred_check
        %p283 = pneg %p50
      $region30: #{conv_block_forward.4} parent=27 // pred_check_branch
        %285 = sbr.rel (%p283) target = $region32
      $region31: #{conv_block_forward.4} parent=27 // pred_region
        %s286 = smul.u32 %s21, 2
        %s287 = sadd.s32 %s286, %s22
        %s288 = smul.u32 16, %s287
        %p289 = scmp.lt.s32.totalorder %s288, 63
        %s290 = scalar_select %p289, %s288, 63
        %s291 = smul.addr %s290, 4
        %s292 = scalar_lea.vmem %s0, %s291
        %s293 = smul.u32 %s21, 2
        %s294 = sadd.s32 %s293, %s22
        %s295 = smul.u32 16, %s294
      $region32: #{conv_block_forward.4} parent=27 // pred_fallthru
        _
      // Predicated region
      $region33: #{conv_block_forward.4} parent=27 // pred_check
        %p296 = pneg %p88
      $region34: #{conv_block_forward.4} parent=27 // pred_check_branch
        %298 = sbr.rel (%p296) target = $region36
      $region35: #{conv_block_forward.4} parent=27 // pred_region
        %s299 = smul.u32 %s21, 16
        %s300 = smul.u32 %s22, 8
        %s301 = sadd.s32 %s299, %s300
        %s302 = ssub.s32 %s301, 1
        %p303 = scmp.gt.s32.totalorder %s302, 0
        %s304 = scalar_select %p303, %s302, 0
        %s305 = smul.u32 2, %s304
        %p306 = scmp.lt.s32.totalorder %s305, 63
        %s307 = scalar_select %p306, %s305, 63
        %s308 = smul.addr %s307, 4
        %s309 = scalar_lea.vmem %s1, %s308
        %s310 = smul.u32 %s21, 16
        %s311 = smul.u32 %s22, 8
        %s312 = sadd.s32 %s310, %s311
        %s313 = ssub.s32 %s312, 1
        %p314 = scmp.gt.s32.totalorder %s313, 0
        %s315 = scalar_select %p314, %s313, 0
        %s316 = smul.u32 2, %s315
      $region36: #{conv_block_forward.4} parent=27 // pred_fallthru
        _
      // Predicated region
      $region37: #{conv_block_forward.4} parent=27 // pred_check
        %p317 = pneg %p126
      $region38: #{conv_block_forward.4} parent=27 // pred_check_branch
        %319 = sbr.rel (%p317) target = $region40
      $region39: #{conv_block_forward.4} parent=27 // pred_region
        %s320 = smul.u32 %s21, 16
        %s321 = sadd.s32 %s22, 1
        %s322 = smul.u32 %s321, 8
        %s323 = sadd.s32 %s320, %s322
        %p324 = scmp.lt.s32.totalorder %s323, 31
        %s325 = scalar_select %p324, %s323, 31
        %s326 = smul.u32 2, %s325
        %p327 = scmp.lt.s32.totalorder %s326, 63
        %s328 = scalar_select %p327, %s326, 63
        %s329 = smul.addr %s328, 4
        %s330 = scalar_lea.vmem %s2, %s329
        %s331 = smul.u32 %s21, 16
        %s332 = sadd.s32 %s22, 1
        %s333 = smul.u32 %s332, 8
        %s334 = sadd.s32 %s331, %s333
        %p335 = scmp.lt.s32.totalorder %s334, 31
        %s336 = scalar_select %p335, %s334, 31
        %s337 = smul.u32 2, %s336
      $region40: #{conv_block_forward.4} parent=27 // pred_fallthru
        _
    $region28: #{conv_block_forward.4} parent=5 // pred_fallthru
      _
    %p338 = scmp.le.s32.totalorder 1, %s14
    %p339 = scmp.lt.s32.totalorder %s14, 5
    %p340 = pnand %p338, %p339
    %p341 = pneg %p340
    // Predicated region
    $region41: #{conv_block_forward.4} parent=5 // pred_check
      _
    $region42: #{conv_block_forward.4} parent=5 // pred_check_branch
      %343 = sbr.rel (%p340) target = $region44
    $region43: #{conv_block_forward.4} parent=5 // pred_region
      %s344 = ssub.s32 %s14, 1
      %s345 = smul.u32 %s23, 2
      %s346 = sadd.s32 %s345, %s24
      %s347 = smul.u32 16, %s346
      %p348 = scmp.lt.s32.totalorder %s347, 63
      %s349 = scalar_select %p348, %s347, 63
      %s350 = smul.addr %s349, 4
      %s351 = scalar_lea.vmem %s0, %s350
      %p352 = pneg %p56
      %p353 = pneg %p53
      %s354 = smul.u32 %s23, 16
      %s355 = smul.u32 %s24, 8
      %s356 = sadd.s32 %s354, %s355
      %s357 = ssub.s32 %s356, 1
      %p358 = scmp.gt.s32.totalorder %s357, 0
      %s359 = scalar_select %p358, %s357, 0
      %s360 = smul.u32 2, %s359
      %p361 = scmp.lt.s32.totalorder %s360, 63
      %s362 = scalar_select %p361, %s360, 63
      %s363 = smul.addr %s362, 4
      %s364 = scalar_lea.vmem %s1, %s363
      %p365 = pneg %p94
      %p366 = pneg %p91
      %s367 = smul.u32 %s23, 16
      %s368 = sadd.s32 %s24, 1
      %s369 = smul.u32 %s368, 8
      %s370 = sadd.s32 %s367, %s369
      %p371 = scmp.lt.s32.totalorder %s370, 31
      %s372 = scalar_select %p371, %s370, 31
      %s373 = smul.u32 2, %s372
      %p374 = scmp.lt.s32.totalorder %s373, 63
      %s375 = scalar_select %p374, %s373, 63
      %s376 = smul.addr %s375, 4
      %s377 = scalar_lea.vmem %s2, %s376
      %p378 = pneg %p132
      %p379 = pneg %p129
      %p380 = pneg %p153
      %p381 = pneg %p150
      %p382 = pneg %p174
      %p383 = pneg %p171
      %p384 = pneg %p195
      %p385 = pneg %p192
      %p386 = pneg %p225
      %p387 = pneg %p222
      %s388 = smul.u32 %s23, 2
      %s389 = sadd.s32 %s388, %s24
      %s390 = smul.u32 16, %s389
      %p391 = scmp.lt.s32.totalorder %s390, 63
      %s392 = scalar_select %p391, %s390, 63
      %s393 = smul.addr %s392, 4
      %s394 = scalar_lea.vmem %s6, %s393
      %p395 = pneg %p255
      %p396 = pneg %p252
      %s397 = smul.u32 %s23, 2
      %s398 = sadd.s32 %s397, %s24
      %p399 = scmp.lt.s32.totalorder %s398, 3
      %s400 = scalar_select %p399, %s398, 3
      %s401 = smul.addr %s400, 2
      %s402 = scalar_lea.vmem %s7, %s401
      %s403 = smul.u32 %s23, 2
      %s404 = sadd.s32 %s403, %s24
      %s405 = smul.u32 16, %s404
      %p406 = scmp.lt.s32.totalorder %s405, 63
      %s407 = scalar_select %p406, %s405, 63
      %s408 = smul.addr %s407, 4
      %s409 = scalar_lea.vmem %s0, %s408
      %s410 = smul.u32 %s23, 2
      %s411 = sadd.s32 %s410, %s24
      %s412 = smul.u32 16, %s411
      %s413 = smul.u32 %s23, 16
      %s414 = smul.u32 %s24, 8
      %s415 = sadd.s32 %s413, %s414
      %s416 = ssub.s32 %s415, 1
      %p417 = scmp.gt.s32.totalorder %s416, 0
      %s418 = scalar_select %p417, %s416, 0
      %s419 = smul.u32 2, %s418
      %p420 = scmp.lt.s32.totalorder %s419, 63
      %s421 = scalar_select %p420, %s419, 63
      %s422 = smul.addr %s421, 4
      %s423 = scalar_lea.vmem %s1, %s422
      %s424 = smul.u32 %s23, 16
      %s425 = smul.u32 %s24, 8
      %s426 = sadd.s32 %s424, %s425
      %s427 = ssub.s32 %s426, 1
      %p428 = scmp.gt.s32.totalorder %s427, 0
      %s429 = scalar_select %p428, %s427, 0
      %s430 = smul.u32 2, %s429
      %s431 = smul.u32 %s23, 16
      %s432 = sadd.s32 %s24, 1
      %s433 = smul.u32 %s432, 8
      %s434 = sadd.s32 %s431, %s433
      %p435 = scmp.lt.s32.totalorder %s434, 31
      %s436 = scalar_select %p435, %s434, 31
      %s437 = smul.u32 2, %s436
      %p438 = scmp.lt.s32.totalorder %s437, 63
      %s439 = scalar_select %p438, %s437, 63
      %s440 = smul.addr %s439, 4
      %s441 = scalar_lea.vmem %s2, %s440
      %s442 = smul.u32 %s23, 16
      %s443 = sadd.s32 %s24, 1
      %s444 = smul.u32 %s443, 8
      %s445 = sadd.s32 %s442, %s444
      %p446 = scmp.lt.s32.totalorder %s445, 31
      %s447 = scalar_select %p446, %s445, 31
      %s448 = smul.u32 2, %s447
      %s449 = smul.u32 %s23, 2
      %s450 = sadd.s32 %s449, %s24
      %s451 = smul.u32 16, %s450
      %p452 = scmp.lt.s32.totalorder %s451, 63
      %s453 = scalar_select %p452, %s451, 63
      %s454 = smul.addr %s453, 4
      %s455 = scalar_lea.vmem %s6, %s454
      %s456 = smul.u32 %s23, 2
      %s457 = sadd.s32 %s456, %s24
      %s458 = smul.u32 16, %s457
      %s459 = smul.u32 %s23, 2
      %s460 = sadd.s32 %s459, %s24
      %p461 = scmp.lt.s32.totalorder %s460, 3
      %s462 = scalar_select %p461, %s460, 3
      %s463 = smul.addr %s462, 2
      %s464 = scalar_lea.vmem %s7, %s463
      %s465 = smul.u32 %s23, 2
      %s466 = sadd.s32 %s465, %s24
      %v470 = vld [vmem:[%s423] sm:$0xf]
      %v471 = vld [vmem:[%s423 + $0x4] sm:$0xf]
      %v472 = vld [vmem:[%s409] sm:$0xf]
      %v473 = vld [vmem:[%s409 + $0x4] sm:$0xf]
      %v474 = vld [vmem:[%s409 + $0x8] sm:$0xf]
      %v475 = vld [vmem:[%s409 + $0xc] sm:$0xf]
      %v476 = vld [vmem:[%s409 + $0x10] sm:$0xf]
      %v477 = vld [vmem:[%s409 + $0x14] sm:$0xf]
      %v478 = vld [vmem:[%s409 + $0x18] sm:$0xf]
      %v479 = vld [vmem:[%s409 + $0x1c] sm:$0xf]
      %v480 = vld [vmem:[%s409 + $0x20] sm:$0xf]
      %v481 = vld [vmem:[%s409 + $0x24] sm:$0xf]
      %v482 = vld [vmem:[%s409 + $0x28] sm:$0xf]
      %v483 = vld [vmem:[%s409 + $0x2c] sm:$0xf]
      %v484 = vld [vmem:[%s409 + $0x30] sm:$0xf]
      %v485 = vld [vmem:[%s409 + $0x34] sm:$0xf]
      %v486 = vld [vmem:[%s409 + $0x38] sm:$0xf]
      %v487 = vld [vmem:[%s409 + $0x3c] sm:$0xf]
      %v488 = vld [vmem:[%s441] sm:$0xf]
      %v489 = vld [vmem:[%s441 + $0x4] sm:$0xf]
      %v492 = vunpack.c.l.b16 %v470
      %v493 = vunpack.c.l.b16 %v471
      %v494 = vpack.c.b16 %v493, %v492
      %v512 = vunpack.c.l.b16 %v472
      %v513 = vunpack.c.l.b16 %v473
      %v514 = vunpack.c.l.b16 %v474
      %v515 = vunpack.c.l.b16 %v475
      %v516 = vunpack.c.l.b16 %v476
      %v517 = vunpack.c.l.b16 %v477
      %v518 = vunpack.c.l.b16 %v478
      %v519 = vunpack.c.l.b16 %v479
      %v520 = vunpack.c.l.b16 %v480
      %v521 = vunpack.c.l.b16 %v481
      %v522 = vunpack.c.l.b16 %v482
      %v523 = vunpack.c.l.b16 %v483
      %v524 = vunpack.c.l.b16 %v484
      %v525 = vunpack.c.l.b16 %v485
      %v526 = vunpack.c.l.b16 %v486
      %v527 = vunpack.c.l.b16 %v487
      %v528 = vpack.c.b16 %v513, %v512
      %v529 = vpack.c.b16 %v515, %v514
      %v530 = vpack.c.b16 %v517, %v516
      %v531 = vpack.c.b16 %v519, %v518
      %v532 = vpack.c.b16 %v521, %v520
      %v533 = vpack.c.b16 %v523, %v522
      %v534 = vpack.c.b16 %v525, %v524
      %v535 = vpack.c.b16 %v527, %v526
      %v546 = vunpack.c.l.b16 %v488
      %v547 = vunpack.c.l.b16 %v489
      %v548 = vpack.c.b16 %v547, %v546
      %v550 = vunpack.c.l.bf16 %v494
      %v551 = vunpack.c.h.bf16 %v494
      %v552 = vunpack.c.l.bf16 %v528
      %v553 = vunpack.c.h.bf16 %v528
      %v554 = vunpack.c.l.bf16 %v529
      %v555 = vunpack.c.h.bf16 %v529
      %v556 = vunpack.c.l.bf16 %v530
      %v557 = vunpack.c.h.bf16 %v530
      %v558 = vunpack.c.l.bf16 %v531
      %v559 = vunpack.c.h.bf16 %v531
      %v560 = vunpack.c.l.bf16 %v532
      %v561 = vunpack.c.h.bf16 %v532
      %v562 = vunpack.c.l.bf16 %v533
      %v563 = vunpack.c.h.bf16 %v533
      %v564 = vunpack.c.l.bf16 %v534
      %v565 = vunpack.c.h.bf16 %v534
      %v566 = vunpack.c.l.bf16 %v535
      %v567 = vunpack.c.h.bf16 %v535
      %v568 = vunpack.c.l.bf16 %v548
      %v569 = vunpack.c.h.bf16 %v548
      %v570 = vld [vmem:[%s4] sm:$0x1]
      %v572 = vlaneseq
      %v573 = vshrl.u32 %v572, 7
      %v574 = vsub.s32 0, %v573
      %v575 = vrot.slane %v570, %v574
      %v577 = vmul.f32 %v550, %v575
      %v578 = vmul.f32 %v551, %v575
      %v579 = vmul.f32 %v552, %v575
      %v580 = vmul.f32 %v553, %v575
      %v581 = vmul.f32 %v554, %v575
      %v582 = vmul.f32 %v555, %v575
      %v583 = vmul.f32 %v556, %v575
      %v584 = vmul.f32 %v557, %v575
      %v585 = vmul.f32 %v558, %v575
      %v586 = vmul.f32 %v559, %v575
      %v587 = vmul.f32 %v560, %v575
      %v588 = vmul.f32 %v561, %v575
      %v589 = vmul.f32 %v562, %v575
      %v590 = vmul.f32 %v563, %v575
      %v591 = vmul.f32 %v564, %v575
      %v592 = vmul.f32 %v565, %v575
      %v593 = vmul.f32 %v566, %v575
      %v594 = vmul.f32 %v567, %v575
      %v595 = vmul.f32 %v568, %v575
      %v596 = vmul.f32 %v569, %v575
      %v597 = vld [vmem:[%s5] sm:$0x1]
      %v599 = vlaneseq
      %v600 = vshrl.u32 %v599, 7
      %v601 = vsub.s32 0, %v600
      %v602 = vrot.slane %v597, %v601
      %v604 = vadd.f32 %v577, %v602
      %v605 = vadd.f32 %v578, %v602
      %v606 = vadd.f32 %v579, %v602
      %v607 = vadd.f32 %v580, %v602
      %v608 = vadd.f32 %v581, %v602
      %v609 = vadd.f32 %v582, %v602
      %v610 = vadd.f32 %v583, %v602
      %v611 = vadd.f32 %v584, %v602
      %v612 = vadd.f32 %v585, %v602
      %v613 = vadd.f32 %v586, %v602
      %v614 = vadd.f32 %v587, %v602
      %v615 = vadd.f32 %v588, %v602
      %v616 = vadd.f32 %v589, %v602
      %v617 = vadd.f32 %v590, %v602
      %v618 = vadd.f32 %v591, %v602
      %v619 = vadd.f32 %v592, %v602
      %v620 = vadd.f32 %v593, %v602
      %v621 = vadd.f32 %v594, %v602
      %v622 = vadd.f32 %v595, %v602
      %v623 = vadd.f32 %v596, %v602
      %v624 = vmax.f32 %v604, 0.0
      %v625 = vmax.f32 %v605, 0.0
      %v626 = vmax.f32 %v606, 0.0
      %v627 = vmax.f32 %v607, 0.0
      %v628 = vmax.f32 %v608, 0.0
      %v629 = vmax.f32 %v609, 0.0
      %v630 = vmax.f32 %v610, 0.0
      %v631 = vmax.f32 %v611, 0.0
      %v632 = vmax.f32 %v612, 0.0
      %v633 = vmax.f32 %v613, 0.0
      %v634 = vmax.f32 %v614, 0.0
      %v635 = vmax.f32 %v615, 0.0
      %v636 = vmax.f32 %v616, 0.0
      %v637 = vmax.f32 %v617, 0.0
      %v638 = vmax.f32 %v618, 0.0
      %v639 = vmax.f32 %v619, 0.0
      %v640 = vmax.f32 %v620, 0.0
      %v641 = vmax.f32 %v621, 0.0
      %v642 = vmax.f32 %v622, 0.0
      %v643 = vmax.f32 %v623, 0.0
      %v644 = vlaneseq
      %v645 = vshrl.u32 %v644, 7
      %v646 = vadd.s32 %v645, 8
      %v647 = vadd.s32 %v645, 16
      %v648 = vadd.s32 %v645, 24
      %v649 = vadd.s32 %v645, 32
      %v650 = vadd.s32 %v645, 40
      %v651 = vadd.s32 %v645, 48
      %v652 = vadd.s32 %v645, 56
      %v653 = vadd.s32 %v645, 64
      %v654 = vadd.s32 %v645, 72
      %v655 = vadd.s32 %v645, 80
      %v656 = vadd.s32 %v645, 88
      %v657 = vadd.s32 %v645, 96
      %v658 = vadd.s32 %v645, 104
      %v659 = vadd.s32 %v645, 112
      %v660 = vadd.s32 %v645, 120
      %v661 = vadd.s32 %v645, 128
      %v662 = vadd.s32 %v645, 136
      %v663 = vadd.s32 %v645, 144
      %v664 = vadd.s32 %v645, 152
      %vm665 = vcmp.ge.s32.totalorder %v645, 16
      %vm666 = vcmp.ge.s32.totalorder %v646, 16
      %vm667 = vcmp.ge.s32.totalorder %v647, 16
      %vm668 = vcmp.ge.s32.totalorder %v648, 16
      %vm669 = vcmp.ge.s32.totalorder %v649, 16
      %vm670 = vcmp.ge.s32.totalorder %v650, 16
      %vm671 = vcmp.ge.s32.totalorder %v651, 16
      %vm672 = vcmp.ge.s32.totalorder %v652, 16
      %vm673 = vcmp.ge.s32.totalorder %v653, 16
      %vm674 = vcmp.ge.s32.totalorder %v654, 16
      %vm675 = vcmp.ge.s32.totalorder %v655, 16
      %vm676 = vcmp.ge.s32.totalorder %v656, 16
      %vm677 = vcmp.ge.s32.totalorder %v657, 16
      %vm678 = vcmp.ge.s32.totalorder %v658, 16
      %vm679 = vcmp.ge.s32.totalorder %v659, 16
      %vm680 = vcmp.ge.s32.totalorder %v660, 16
      %vm681 = vcmp.ge.s32.totalorder %v661, 16
      %vm682 = vcmp.ge.s32.totalorder %v662, 16
      %vm683 = vcmp.ge.s32.totalorder %v663, 16
      %vm684 = vcmp.ge.s32.totalorder %v664, 16
      %p685 = scmp.gt.s32.totalorder %s24, 0
      %s686 = scalar_select %p685, 1, 0
      %v687 = vstv %s686
      %vm688 = vcmp.eq.s32.totalorder %v687, 1
      %vm689 = vmor %vm665, %vm688
      %vm690 = vmor %vm666, %vm688
      %vm691 = vmor %vm667, %vm688
      %vm692 = vmor %vm668, %vm688
      %vm693 = vmor %vm669, %vm688
      %vm694 = vmor %vm670, %vm688
      %vm695 = vmor %vm671, %vm688
      %vm696 = vmor %vm672, %vm688
      %vm697 = vmor %vm673, %vm688
      %vm698 = vmor %vm674, %vm688
      %vm699 = vmor %vm675, %vm688
      %vm700 = vmor %vm676, %vm688
      %vm701 = vmor %vm677, %vm688
      %vm702 = vmor %vm678, %vm688
      %vm703 = vmor %vm679, %vm688
      %vm704 = vmor %vm680, %vm688
      %vm705 = vmor %vm681, %vm688
      %vm706 = vmor %vm682, %vm688
      %vm707 = vmor %vm683, %vm688
      %vm708 = vmor %vm684, %vm688
      %vm709 = vcmp.lt.s32.totalorder %v645, 144
      %vm710 = vcmp.lt.s32.totalorder %v646, 144
      %vm711 = vcmp.lt.s32.totalorder %v647, 144
      %vm712 = vcmp.lt.s32.totalorder %v648, 144
      %vm713 = vcmp.lt.s32.totalorder %v649, 144
      %vm714 = vcmp.lt.s32.totalorder %v650, 144
      %vm715 = vcmp.lt.s32.totalorder %v651, 144
      %vm716 = vcmp.lt.s32.totalorder %v652, 144
      %vm717 = vcmp.lt.s32.totalorder %v653, 144
      %vm718 = vcmp.lt.s32.totalorder %v654, 144
      %vm719 = vcmp.lt.s32.totalorder %v655, 144
      %vm720 = vcmp.lt.s32.totalorder %v656, 144
      %vm721 = vcmp.lt.s32.totalorder %v657, 144
      %vm722 = vcmp.lt.s32.totalorder %v658, 144
      %vm723 = vcmp.lt.s32.totalorder %v659, 144
      %vm724 = vcmp.lt.s32.totalorder %v660, 144
      %vm725 = vcmp.lt.s32.totalorder %v661, 144
      %vm726 = vcmp.lt.s32.totalorder %v662, 144
      %vm727 = vcmp.lt.s32.totalorder %v663, 144
      %vm728 = vcmp.lt.s32.totalorder %v664, 144
      %s729 = sadd.s32 %s24, 1
      %p730 = scmp.lt.s32.totalorder %s729, 2
      %s731 = scalar_select %p730, 1, 0
      %v732 = vstv %s731
      %vm733 = vcmp.eq.s32.totalorder %v732, 1
      %vm734 = vmor %vm709, %vm733
      %vm735 = vmor %vm710, %vm733
      %vm736 = vmor %vm711, %vm733
      %vm737 = vmor %vm712, %vm733
      %vm738 = vmor %vm713, %vm733
      %vm739 = vmor %vm714, %vm733
      %vm740 = vmor %vm715, %vm733
      %vm741 = vmor %vm716, %vm733
      %vm742 = vmor %vm717, %vm733
      %vm743 = vmor %vm718, %vm733
      %vm744 = vmor %vm719, %vm733
      %vm745 = vmor %vm720, %vm733
      %vm746 = vmor %vm721, %vm733
      %vm747 = vmor %vm722, %vm733
      %vm748 = vmor %vm723, %vm733
      %vm749 = vmor %vm724, %vm733
      %vm750 = vmor %vm725, %vm733
      %vm751 = vmor %vm726, %vm733
      %vm752 = vmor %vm727, %vm733
      %vm753 = vmor %vm728, %vm733
      %vm754 = vmand %vm689, %vm734
      %vm755 = vmand %vm690, %vm735
      %vm756 = vmand %vm691, %vm736
      %vm757 = vmand %vm692, %vm737
      %vm758 = vmand %vm693, %vm738
      %vm759 = vmand %vm694, %vm739
      %vm760 = vmand %vm695, %vm740
      %vm761 = vmand %vm696, %vm741
      %vm762 = vmand %vm697, %vm742
      %vm763 = vmand %vm698, %vm743
      %vm764 = vmand %vm699, %vm744
      %vm765 = vmand %vm700, %vm745
      %vm766 = vmand %vm701, %vm746
      %vm767 = vmand %vm702, %vm747
      %vm768 = vmand %vm703, %vm748
      %vm769 = vmand %vm704, %vm749
      %vm770 = vmand %vm705, %vm750
      %vm771 = vmand %vm706, %vm751
      %vm772 = vmand %vm707, %vm752
      %vm773 = vmand %vm708, %vm753
      %v774 = vsel %vm754, 1, 0
      %v775 = vsel %vm755, 1, 0
      %v776 = vsel %vm756, 1, 0
      %v777 = vsel %vm757, 1, 0
      %v778 = vsel %vm758, 1, 0
      %v779 = vsel %vm759, 1, 0
      %v780 = vsel %vm760, 1, 0
      %v781 = vsel %vm761, 1, 0
      %v782 = vsel %vm762, 1, 0
      %v783 = vsel %vm763, 1, 0
      %v784 = vsel %vm764, 1, 0
      %v785 = vsel %vm765, 1, 0
      %v786 = vsel %vm766, 1, 0
      %v787 = vsel %vm767, 1, 0
      %v788 = vsel %vm768, 1, 0
      %v789 = vsel %vm769, 1, 0
      %v790 = vsel %vm770, 1, 0
      %v791 = vsel %vm771, 1, 0
      %v792 = vsel %vm772, 1, 0
      %v793 = vsel %vm773, 1, 0
      %vm794 = vcmp.eq.s32.totalorder %v774, 1
      %vm795 = vcmp.eq.s32.totalorder %v775, 1
      %vm796 = vcmp.eq.s32.totalorder %v776, 1
      %vm797 = vcmp.eq.s32.totalorder %v777, 1
      %vm798 = vcmp.eq.s32.totalorder %v778, 1
      %vm799 = vcmp.eq.s32.totalorder %v779, 1
      %vm800 = vcmp.eq.s32.totalorder %v780, 1
      %vm801 = vcmp.eq.s32.totalorder %v781, 1
      %vm802 = vcmp.eq.s32.totalorder %v782, 1
      %vm803 = vcmp.eq.s32.totalorder %v783, 1
      %vm804 = vcmp.eq.s32.totalorder %v784, 1
      %vm805 = vcmp.eq.s32.totalorder %v785, 1
      %vm806 = vcmp.eq.s32.totalorder %v786, 1
      %vm807 = vcmp.eq.s32.totalorder %v787, 1
      %vm808 = vcmp.eq.s32.totalorder %v788, 1
      %vm809 = vcmp.eq.s32.totalorder %v789, 1
      %vm810 = vcmp.eq.s32.totalorder %v790, 1
      %vm811 = vcmp.eq.s32.totalorder %v791, 1
      %vm812 = vcmp.eq.s32.totalorder %v792, 1
      %vm813 = vcmp.eq.s32.totalorder %v793, 1
      %v814 = vsel %vm794, %v624, 0.0
      %v815 = vsel %vm795, %v625, 0.0
      %v816 = vsel %vm796, %v626, 0.0
      %v817 = vsel %vm797, %v627, 0.0
      %v818 = vsel %vm798, %v628, 0.0
      %v819 = vsel %vm799, %v629, 0.0
      %v820 = vsel %vm800, %v630, 0.0
      %v821 = vsel %vm801, %v631, 0.0
      %v822 = vsel %vm802, %v632, 0.0
      %v823 = vsel %vm803, %v633, 0.0
      %v824 = vsel %vm804, %v634, 0.0
      %v825 = vsel %vm805, %v635, 0.0
      %v826 = vsel %vm806, %v636, 0.0
      %v827 = vsel %vm807, %v637, 0.0
      %v828 = vsel %vm808, %v638, 0.0
      %v829 = vsel %vm809, %v639, 0.0
      %v830 = vsel %vm810, %v640, 0.0
      %v831 = vsel %vm811, %v641, 0.0
      %v832 = vsel %vm812, %v642, 0.0
      %v833 = vsel %vm813, %v643, 0.0
      %v834 = vpack.c.bf16 %v815, %v814
      %v835 = vpack.c.bf16 %v817, %v816
      %v836 = vpack.c.bf16 %v819, %v818
      %v837 = vpack.c.bf16 %v821, %v820
      %v838 = vpack.c.bf16 %v823, %v822
      %v839 = vpack.c.bf16 %v825, %v824
      %v840 = vpack.c.bf16 %v827, %v826
      %v841 = vpack.c.bf16 %v829, %v828
      %v842 = vpack.c.bf16 %v831, %v830
      %v843 = vpack.c.bf16 %v833, %v832
      %vm844 = vsmask.f32 256
      %v846 = vshrl.u32 %v834, 16
      %v848 = vrot.slane %v846, 7
      %v849 = vshll.u32 %v834, 16
      %v851 = vor.u32 %v848, %v849
      %v853 = vshrl.u32 %v835, 16
      %v855 = vrot.slane %v853, 7
      %v856 = vshll.u32 %v835, 16
      %v858 = vor.u32 %v855, %v856
      %v859 = vsel %vm844, %v848, %v858
      %v861 = vshrl.u32 %v836, 16
      %v863 = vrot.slane %v861, 7
      %v864 = vshll.u32 %v836, 16
      %v866 = vor.u32 %v863, %v864
      %v867 = vsel %vm844, %v855, %v866
      %v869 = vshrl.u32 %v837, 16
      %v871 = vrot.slane %v869, 7
      %v872 = vshll.u32 %v837, 16
      %v874 = vor.u32 %v871, %v872
      %v875 = vsel %vm844, %v863, %v874
      %v877 = vshrl.u32 %v838, 16
      %v879 = vrot.slane %v877, 7
      %v880 = vshll.u32 %v838, 16
      %v882 = vor.u32 %v879, %v880
      %v883 = vsel %vm844, %v871, %v882
      %v885 = vshrl.u32 %v839, 16
      %v887 = vrot.slane %v885, 7
      %v888 = vshll.u32 %v839, 16
      %v890 = vor.u32 %v887, %v888
      %v891 = vsel %vm844, %v879, %v890
      %v893 = vshrl.u32 %v840, 16
      %v895 = vrot.slane %v893, 7
      %v896 = vshll.u32 %v840, 16
      %v898 = vor.u32 %v895, %v896
      %v899 = vsel %vm844, %v887, %v898
      %v901 = vshrl.u32 %v841, 16
      %v903 = vrot.slane %v901, 7
      %v904 = vshll.u32 %v841, 16
      %v906 = vor.u32 %v903, %v904
      %v907 = vsel %vm844, %v895, %v906
      %v909 = vshrl.u32 %v842, 16
      %v911 = vrot.slane %v909, 7
      %v912 = vshll.u32 %v842, 16
      %v914 = vor.u32 %v911, %v912
      %v915 = vsel %vm844, %v903, %v914
      %v917 = vshrl.u32 %v843, 16
      %v919 = vrot.slane %v917, 7
      %v920 = vshll.u32 %v843, 16
      %v922 = vor.u32 %v919, %v920
      %v923 = vsel %vm844, %v911, %v922
      %vm935 = vcmask 1040384
      %vm936 = vmand %vm935, %vm844
      %v937 = vsel %vm936, 0, %v851
      %v938 = vsel %vm936, %v919, 0
      %vm939 = vcmp.lt.s32.totalorder %v645, 0
      %v940 = vsub.s32 0, %v645
      %v941 = vsel %vm939, %v940, %v645
      %v942 = vshrl.u32 %v941, 4
      %v943 = vand.u32 %v941, 15
      %v944 = vsub.s32 0, %v943
      %v945 = vsel %vm939, %v944, %v943
      %vm946 = vcmp.lt.s32.totalorder %v646, 0
      %v947 = vsub.s32 0, %v646
      %v948 = vsel %vm946, %v947, %v646
      %v949 = vshrl.u32 %v948, 4
      %v950 = vand.u32 %v948, 15
      %v951 = vsub.s32 0, %v950
      %v952 = vsel %vm946, %v951, %v950
      %vm953 = vcmp.lt.s32.totalorder %v647, 0
      %v954 = vsub.s32 0, %v647
      %v955 = vsel %vm953, %v954, %v647
      %v956 = vshrl.u32 %v955, 4
      %v957 = vand.u32 %v955, 15
      %v958 = vsub.s32 0, %v957
      %v959 = vsel %vm953, %v958, %v957
      %vm960 = vcmp.lt.s32.totalorder %v648, 0
      %v961 = vsub.s32 0, %v648
      %v962 = vsel %vm960, %v961, %v648
      %v963 = vshrl.u32 %v962, 4
      %v964 = vand.u32 %v962, 15
      %v965 = vsub.s32 0, %v964
      %v966 = vsel %vm960, %v965, %v964
      %vm967 = vcmp.lt.s32.totalorder %v649, 0
      %v968 = vsub.s32 0, %v649
      %v969 = vsel %vm967, %v968, %v649
      %v970 = vshrl.u32 %v969, 4
      %v971 = vand.u32 %v969, 15
      %v972 = vsub.s32 0, %v971
      %v973 = vsel %vm967, %v972, %v971
      %vm974 = vcmp.lt.s32.totalorder %v650, 0
      %v975 = vsub.s32 0, %v650
      %v976 = vsel %vm974, %v975, %v650
      %v977 = vshrl.u32 %v976, 4
      %v978 = vand.u32 %v976, 15
      %v979 = vsub.s32 0, %v978
      %v980 = vsel %vm974, %v979, %v978
      %vm981 = vcmp.lt.s32.totalorder %v651, 0
      %v982 = vsub.s32 0, %v651
      %v983 = vsel %vm981, %v982, %v651
      %v984 = vshrl.u32 %v983, 4
      %v985 = vand.u32 %v983, 15
      %v986 = vsub.s32 0, %v985
      %v987 = vsel %vm981, %v986, %v985
      %vm988 = vcmp.lt.s32.totalorder %v652, 0
      %v989 = vsub.s32 0, %v652
      %v990 = vsel %vm988, %v989, %v652
      %v991 = vshrl.u32 %v990, 4
      %v992 = vand.u32 %v990, 15
      %v993 = vsub.s32 0, %v992
      %v994 = vsel %vm988, %v993, %v992
      %vm995 = vcmp.lt.s32.totalorder %v653, 0
      %v996 = vsub.s32 0, %v653
      %v997 = vsel %vm995, %v996, %v653
      %v998 = vshrl.u32 %v997, 4
      %v999 = vand.u32 %v997, 15
      %v1000 = vsub.s32 0, %v999
      %v1001 = vsel %vm995, %v1000, %v999
      %vm1002 = vcmp.lt.s32.totalorder %v654, 0
      %v1003 = vsub.s32 0, %v654
      %v1004 = vsel %vm1002, %v1003, %v654
      %v1005 = vshrl.u32 %v1004, 4
      %v1006 = vand.u32 %v1004, 15
      %v1007 = vsub.s32 0, %v1006
      %v1008 = vsel %vm1002, %v1007, %v1006
      %vm1009 = vcmp.lt.s32.totalorder %v655, 0
      %v1010 = vsub.s32 0, %v655
      %v1011 = vsel %vm1009, %v1010, %v655
      %v1012 = vshrl.u32 %v1011, 4
      %v1013 = vand.u32 %v1011, 15
      %v1014 = vsub.s32 0, %v1013
      %v1015 = vsel %vm1009, %v1014, %v1013
      %vm1016 = vcmp.lt.s32.totalorder %v656, 0
      %v1017 = vsub.s32 0, %v656
      %v1018 = vsel %vm1016, %v1017, %v656
      %v1019 = vshrl.u32 %v1018, 4
      %v1020 = vand.u32 %v1018, 15
      %v1021 = vsub.s32 0, %v1020
      %v1022 = vsel %vm1016, %v1021, %v1020
      %vm1023 = vcmp.lt.s32.totalorder %v657, 0
      %v1024 = vsub.s32 0, %v657
      %v1025 = vsel %vm1023, %v1024, %v657
      %v1026 = vshrl.u32 %v1025, 4
      %v1027 = vand.u32 %v1025, 15
      %v1028 = vsub.s32 0, %v1027
      %v1029 = vsel %vm1023, %v1028, %v1027
      %vm1030 = vcmp.lt.s32.totalorder %v658, 0
      %v1031 = vsub.s32 0, %v658
      %v1032 = vsel %vm1030, %v1031, %v658
      %v1033 = vshrl.u32 %v1032, 4
      %v1034 = vand.u32 %v1032, 15
      %v1035 = vsub.s32 0, %v1034
      %v1036 = vsel %vm1030, %v1035, %v1034
      %vm1037 = vcmp.lt.s32.totalorder %v659, 0
      %v1038 = vsub.s32 0, %v659
      %v1039 = vsel %vm1037, %v1038, %v659
      %v1040 = vshrl.u32 %v1039, 4
      %v1041 = vand.u32 %v1039, 15
      %v1042 = vsub.s32 0, %v1041
      %v1043 = vsel %vm1037, %v1042, %v1041
      %vm1044 = vcmp.lt.s32.totalorder %v660, 0
      %v1045 = vsub.s32 0, %v660
      %v1046 = vsel %vm1044, %v1045, %v660
      %v1047 = vshrl.u32 %v1046, 4
      %v1048 = vand.u32 %v1046, 15
      %v1049 = vsub.s32 0, %v1048
      %v1050 = vsel %vm1044, %v1049, %v1048
      %vm1051 = vcmp.ne.s32.totalorder %v945, 0
      %vm1052 = vcmp.ne.s32.totalorder %v952, 0
      %vm1053 = vcmp.ne.s32.totalorder %v959, 0
      %vm1054 = vcmp.ne.s32.totalorder %v966, 0
      %vm1055 = vcmp.ne.s32.totalorder %v973, 0
      %vm1056 = vcmp.ne.s32.totalorder %v980, 0
      %vm1057 = vcmp.ne.s32.totalorder %v987, 0
      %vm1058 = vcmp.ne.s32.totalorder %v994, 0
      %vm1059 = vcmp.ne.s32.totalorder %v1001, 0
      %vm1060 = vcmp.ne.s32.totalorder %v1008, 0
      %vm1061 = vcmp.ne.s32.totalorder %v1015, 0
      %vm1062 = vcmp.ne.s32.totalorder %v1022, 0
      %vm1063 = vcmp.ne.s32.totalorder %v1029, 0
      %vm1064 = vcmp.ne.s32.totalorder %v1036, 0
      %vm1065 = vcmp.ne.s32.totalorder %v1043, 0
      %vm1066 = vcmp.ne.s32.totalorder %v1050, 0
      %vm1067 = vcmp.lt.s32.totalorder %v945, 0
      %vm1068 = vcmp.lt.s32.totalorder %v952, 0
      %vm1069 = vcmp.lt.s32.totalorder %v959, 0
      %vm1070 = vcmp.lt.s32.totalorder %v966, 0
      %vm1071 = vcmp.lt.s32.totalorder %v973, 0
      %vm1072 = vcmp.lt.s32.totalorder %v980, 0
      %vm1073 = vcmp.lt.s32.totalorder %v987, 0
      %vm1074 = vcmp.lt.s32.totalorder %v994, 0
      %vm1075 = vcmp.lt.s32.totalorder %v1001, 0
      %vm1076 = vcmp.lt.s32.totalorder %v1008, 0
      %vm1077 = vcmp.lt.s32.totalorder %v1015, 0
      %vm1078 = vcmp.lt.s32.totalorder %v1022, 0
      %vm1079 = vcmp.lt.s32.totalorder %v1029, 0
      %vm1080 = vcmp.lt.s32.totalorder %v1036, 0
      %vm1081 = vcmp.lt.s32.totalorder %v1043, 0
      %vm1082 = vcmp.lt.s32.totalorder %v1050, 0
      %vm1083 = vmand %vm1067, %vm1051
      %vm1084 = vmand %vm1068, %vm1052
      %vm1085 = vmand %vm1069, %vm1053
      %vm1086 = vmand %vm1070, %vm1054
      %vm1087 = vmand %vm1071, %vm1055
      %vm1088 = vmand %vm1072, %vm1056
      %vm1089 = vmand %vm1073, %vm1057
      %vm1090 = vmand %vm1074, %vm1058
      %vm1091 = vmand %vm1075, %vm1059
      %vm1092 = vmand %vm1076, %vm1060
      %vm1093 = vmand %vm1077, %vm1061
      %vm1094 = vmand %vm1078, %vm1062
      %vm1095 = vmand %vm1079, %vm1063
      %vm1096 = vmand %vm1080, %vm1064
      %vm1097 = vmand %vm1081, %vm1065
      %vm1098 = vmand %vm1082, %vm1066
      %v1099 = vadd.s32 %v945, 16
      %v1100 = vadd.s32 %v952, 16
      %v1101 = vadd.s32 %v959, 16
      %v1102 = vadd.s32 %v966, 16
      %v1103 = vadd.s32 %v973, 16
      %v1104 = vadd.s32 %v980, 16
      %v1105 = vadd.s32 %v987, 16
      %v1106 = vadd.s32 %v994, 16
      %v1107 = vadd.s32 %v1001, 16
      %v1108 = vadd.s32 %v1008, 16
      %v1109 = vadd.s32 %v1015, 16
      %v1110 = vadd.s32 %v1022, 16
      %v1111 = vadd.s32 %v1029, 16
      %v1112 = vadd.s32 %v1036, 16
      %v1113 = vadd.s32 %v1043, 16
      %v1114 = vadd.s32 %v1050, 16
      %v1115 = vsel %vm1083, %v1099, %v945
      %v1116 = vsel %vm1084, %v1100, %v952
      %v1117 = vsel %vm1085, %v1101, %v959
      %v1118 = vsel %vm1086, %v1102, %v966
      %v1119 = vsel %vm1087, %v1103, %v973
      %v1120 = vsel %vm1088, %v1104, %v980
      %v1121 = vsel %vm1089, %v1105, %v987
      %v1122 = vsel %vm1090, %v1106, %v994
      %v1123 = vsel %vm1091, %v1107, %v1001
      %v1124 = vsel %vm1092, %v1108, %v1008
      %v1125 = vsel %vm1093, %v1109, %v1015
      %v1126 = vsel %vm1094, %v1110, %v1022
      %v1127 = vsel %vm1095, %v1111, %v1029
      %v1128 = vsel %vm1096, %v1112, %v1036
      %v1129 = vsel %vm1097, %v1113, %v1043
      %v1130 = vsel %vm1098, %v1114, %v1050
      %vm1131 = vcmp.ne.s32.totalorder %v1115, 0
      %vm1132 = vcmp.ne.s32.totalorder %v1116, 0
      %vm1133 = vcmp.ne.s32.totalorder %v1117, 0
      %vm1134 = vcmp.ne.s32.totalorder %v1118, 0
      %vm1135 = vcmp.ne.s32.totalorder %v1119, 0
      %vm1136 = vcmp.ne.s32.totalorder %v1120, 0
      %vm1137 = vcmp.ne.s32.totalorder %v1121, 0
      %vm1138 = vcmp.ne.s32.totalorder %v1122, 0
      %vm1139 = vcmp.ne.s32.totalorder %v1123, 0
      %vm1140 = vcmp.ne.s32.totalorder %v1124, 0
      %vm1141 = vcmp.ne.s32.totalorder %v1125, 0
      %vm1142 = vcmp.ne.s32.totalorder %v1126, 0
      %vm1143 = vcmp.ne.s32.totalorder %v1127, 0
      %vm1144 = vcmp.ne.s32.totalorder %v1128, 0
      %vm1145 = vcmp.ne.s32.totalorder %v1129, 0
      %vm1146 = vcmp.ne.s32.totalorder %v1130, 0
      %vm1147 = vcmp.ne.s32.totalorder %v1115, 15
      %vm1148 = vcmp.ne.s32.totalorder %v1116, 15
      %vm1149 = vcmp.ne.s32.totalorder %v1117, 15
      %vm1150 = vcmp.ne.s32.totalorder %v1118, 15
      %vm1151 = vcmp.ne.s32.totalorder %v1119, 15
      %vm1152 = vcmp.ne.s32.totalorder %v1120, 15
      %vm1153 = vcmp.ne.s32.totalorder %v1121, 15
      %vm1154 = vcmp.ne.s32.totalorder %v1122, 15
      %vm1155 = vcmp.ne.s32.totalorder %v1123, 15
      %vm1156 = vcmp.ne.s32.totalorder %v1124, 15
      %vm1157 = vcmp.ne.s32.totalorder %v1125, 15
      %vm1158 = vcmp.ne.s32.totalorder %v1126, 15
      %vm1159 = vcmp.ne.s32.totalorder %v1127, 15
      %vm1160 = vcmp.ne.s32.totalorder %v1128, 15
      %vm1161 = vcmp.ne.s32.totalorder %v1129, 15
      %vm1162 = vcmp.ne.s32.totalorder %v1130, 15
      %v1163 = vsel %vm1131, 1, 0
      %v1164 = vsel %vm1132, 1, 0
      %v1165 = vsel %vm1133, 1, 0
      %v1166 = vsel %vm1134, 1, 0
      %v1167 = vsel %vm1135, 1, 0
      %v1168 = vsel %vm1136, 1, 0
      %v1169 = vsel %vm1137, 1, 0
      %v1170 = vsel %vm1138, 1, 0
      %v1171 = vsel %vm1139, 1, 0
      %v1172 = vsel %vm1140, 1, 0
      %v1173 = vsel %vm1141, 1, 0
      %v1174 = vsel %vm1142, 1, 0
      %v1175 = vsel %vm1143, 1, 0
      %v1176 = vsel %vm1144, 1, 0
      %v1177 = vsel %vm1145, 1, 0
      %v1178 = vsel %vm1146, 1, 0
      %vm1179 = vcmp.eq.s32.totalorder %v1163, 1
      %vm1180 = vcmp.eq.s32.totalorder %v1164, 1
      %vm1181 = vcmp.eq.s32.totalorder %v1165, 1
      %vm1182 = vcmp.eq.s32.totalorder %v1166, 1
      %vm1183 = vcmp.eq.s32.totalorder %v1167, 1
      %vm1184 = vcmp.eq.s32.totalorder %v1168, 1
      %vm1185 = vcmp.eq.s32.totalorder %v1169, 1
      %vm1186 = vcmp.eq.s32.totalorder %v1170, 1
      %vm1187 = vcmp.eq.s32.totalorder %v1171, 1
      %vm1188 = vcmp.eq.s32.totalorder %v1172, 1
      %vm1189 = vcmp.eq.s32.totalorder %v1173, 1
      %vm1190 = vcmp.eq.s32.totalorder %v1174, 1
      %vm1191 = vcmp.eq.s32.totalorder %v1175, 1
      %vm1192 = vcmp.eq.s32.totalorder %v1176, 1
      %vm1193 = vcmp.eq.s32.totalorder %v1177, 1
      %vm1194 = vcmp.eq.s32.totalorder %v1178, 1
      %vm1195 = vmpackc.low %vm1179, %vm1179
      %vm1196 = vmpackc.low %vm1180, %vm1180
      %vm1197 = vmpackc.low %vm1181, %vm1181
      %vm1198 = vmpackc.low %vm1182, %vm1182
      %vm1199 = vmpackc.low %vm1183, %vm1183
      %vm1200 = vmpackc.low %vm1184, %vm1184
      %vm1201 = vmpackc.low %vm1185, %vm1185
      %vm1202 = vmpackc.low %vm1186, %vm1186
      %vm1203 = vmpackc.low %vm1187, %vm1187
      %vm1204 = vmpackc.low %vm1188, %vm1188
      %vm1205 = vmpackc.low %vm1189, %vm1189
      %vm1206 = vmpackc.low %vm1190, %vm1190
      %vm1207 = vmpackc.low %vm1191, %vm1191
      %vm1208 = vmpackc.low %vm1192, %vm1192
      %vm1209 = vmpackc.low %vm1193, %vm1193
      %vm1210 = vmpackc.low %vm1194, %vm1194
      %v1211 = vsel %vm1195, 65537, 0
      %v1212 = vsel %vm1196, 65537, 0
      %v1213 = vsel %vm1197, 65537, 0
      %v1214 = vsel %vm1198, 65537, 0
      %v1215 = vsel %vm1199, 65537, 0
      %v1216 = vsel %vm1200, 65537, 0
      %v1217 = vsel %vm1201, 65537, 0
      %v1218 = vsel %vm1202, 65537, 0
      %v1219 = vsel %vm1203, 65537, 0
      %v1220 = vsel %vm1204, 65537, 0
      %v1221 = vsel %vm1205, 65537, 0
      %v1222 = vsel %vm1206, 65537, 0
      %v1223 = vsel %vm1207, 65537, 0
      %v1224 = vsel %vm1208, 65537, 0
      %v1225 = vsel %vm1209, 65537, 0
      %v1226 = vsel %vm1210, 65537, 0
      %v1227 = vunpack.c.l.b16 %v1211
      %v1228 = vunpack.c.l.b16 %v1212
      %v1229 = vunpack.c.l.b16 %v1213
      %v1230 = vunpack.c.l.b16 %v1214
      %v1231 = vunpack.c.l.b16 %v1215
      %v1232 = vunpack.c.l.b16 %v1216
      %v1233 = vunpack.c.l.b16 %v1217
      %v1234 = vunpack.c.l.b16 %v1218
      %v1235 = vunpack.c.l.b16 %v1219
      %v1236 = vunpack.c.l.b16 %v1220
      %v1237 = vunpack.c.l.b16 %v1221
      %v1238 = vunpack.c.l.b16 %v1222
      %v1239 = vunpack.c.l.b16 %v1223
      %v1240 = vunpack.c.l.b16 %v1224
      %v1241 = vunpack.c.l.b16 %v1225
      %v1242 = vunpack.c.l.b16 %v1226
      %v1243 = vpack.c.b16 %v1228, %v1227
      %v1244 = vpack.c.b16 %v1230, %v1229
      %v1245 = vpack.c.b16 %v1232, %v1231
      %v1246 = vpack.c.b16 %v1234, %v1233
      %v1247 = vpack.c.b16 %v1236, %v1235
      %v1248 = vpack.c.b16 %v1238, %v1237
      %v1249 = vpack.c.b16 %v1240, %v1239
      %v1250 = vpack.c.b16 %v1242, %v1241
      %vm1251 = vcmp.ne.s16.totalorder %v1243, 0
      %vm1252 = vcmp.ne.s16.totalorder %v1244, 0
      %vm1253 = vcmp.ne.s16.totalorder %v1245, 0
      %vm1254 = vcmp.ne.s16.totalorder %v1246, 0
      %vm1255 = vcmp.ne.s16.totalorder %v1247, 0
      %vm1256 = vcmp.ne.s16.totalorder %v1248, 0
      %vm1257 = vcmp.ne.s16.totalorder %v1249, 0
      %vm1258 = vcmp.ne.s16.totalorder %v1250, 0
      %v1259 = vsel %vm1251, %v937, 0
      %v1260 = vsel %vm1252, %v859, 0
      %v1261 = vsel %vm1253, %v867, 0
      %v1262 = vsel %vm1254, %v875, 0
      %v1263 = vsel %vm1255, %v883, 0
      %v1264 = vsel %vm1256, %v891, 0
      %v1265 = vsel %vm1257, %v899, 0
      %v1266 = vsel %vm1258, %v907, 0
      %v1267 = vsel %vm1147, 1, 0
      %v1268 = vsel %vm1148, 1, 0
      %v1269 = vsel %vm1149, 1, 0
      %v1270 = vsel %vm1150, 1, 0
      %v1271 = vsel %vm1151, 1, 0
      %v1272 = vsel %vm1152, 1, 0
      %v1273 = vsel %vm1153, 1, 0
      %v1274 = vsel %vm1154, 1, 0
      %v1275 = vsel %vm1155, 1, 0
      %v1276 = vsel %vm1156, 1, 0
      %v1277 = vsel %vm1157, 1, 0
      %v1278 = vsel %vm1158, 1, 0
      %v1279 = vsel %vm1159, 1, 0
      %v1280 = vsel %vm1160, 1, 0
      %v1281 = vsel %vm1161, 1, 0
      %v1282 = vsel %vm1162, 1, 0
      %vm1283 = vcmp.eq.s32.totalorder %v1267, 1
      %vm1284 = vcmp.eq.s32.totalorder %v1268, 1
      %vm1285 = vcmp.eq.s32.totalorder %v1269, 1
      %vm1286 = vcmp.eq.s32.totalorder %v1270, 1
      %vm1287 = vcmp.eq.s32.totalorder %v1271, 1
      %vm1288 = vcmp.eq.s32.totalorder %v1272, 1
      %vm1289 = vcmp.eq.s32.totalorder %v1273, 1
      %vm1290 = vcmp.eq.s32.totalorder %v1274, 1
      %vm1291 = vcmp.eq.s32.totalorder %v1275, 1
      %vm1292 = vcmp.eq.s32.totalorder %v1276, 1
      %vm1293 = vcmp.eq.s32.totalorder %v1277, 1
      %vm1294 = vcmp.eq.s32.totalorder %v1278, 1
      %vm1295 = vcmp.eq.s32.totalorder %v1279, 1
      %vm1296 = vcmp.eq.s32.totalorder %v1280, 1
      %vm1297 = vcmp.eq.s32.totalorder %v1281, 1
      %vm1298 = vcmp.eq.s32.totalorder %v1282, 1
      %vm1299 = vmpackc.low %vm1283, %vm1283
      %vm1300 = vmpackc.low %vm1284, %vm1284
      %vm1301 = vmpackc.low %vm1285, %vm1285
      %vm1302 = vmpackc.low %vm1286, %vm1286
      %vm1303 = vmpackc.low %vm1287, %vm1287
      %vm1304 = vmpackc.low %vm1288, %vm1288
      %vm1305 = vmpackc.low %vm1289, %vm1289
      %vm1306 = vmpackc.low %vm1290, %vm1290
      %vm1307 = vmpackc.low %vm1291, %vm1291
      %vm1308 = vmpackc.low %vm1292, %vm1292
      %vm1309 = vmpackc.low %vm1293, %vm1293
      %vm1310 = vmpackc.low %vm1294, %vm1294
      %vm1311 = vmpackc.low %vm1295, %vm1295
      %vm1312 = vmpackc.low %vm1296, %vm1296
      %vm1313 = vmpackc.low %vm1297, %vm1297
      %vm1314 = vmpackc.low %vm1298, %vm1298
      %v1315 = vsel %vm1299, 65537, 0
      %v1316 = vsel %vm1300, 65537, 0
      %v1317 = vsel %vm1301, 65537, 0
      %v1318 = vsel %vm1302, 65537, 0
      %v1319 = vsel %vm1303, 65537, 0
      %v1320 = vsel %vm1304, 65537, 0
      %v1321 = vsel %vm1305, 65537, 0
      %v1322 = vsel %vm1306, 65537, 0
      %v1323 = vsel %vm1307, 65537, 0
      %v1324 = vsel %vm1308, 65537, 0
      %v1325 = vsel %vm1309, 65537, 0
      %v1326 = vsel %vm1310, 65537, 0
      %v1327 = vsel %vm1311, 65537, 0
      %v1328 = vsel %vm1312, 65537, 0
      %v1329 = vsel %vm1313, 65537, 0
      %v1330 = vsel %vm1314, 65537, 0
      %v1331 = vunpack.c.l.b16 %v1315
      %v1332 = vunpack.c.l.b16 %v1316
      %v1333 = vunpack.c.l.b16 %v1317
      %v1334 = vunpack.c.l.b16 %v1318
      %v1335 = vunpack.c.l.b16 %v1319
      %v1336 = vunpack.c.l.b16 %v1320
      %v1337 = vunpack.c.l.b16 %v1321
      %v1338 = vunpack.c.l.b16 %v1322
      %v1339 = vunpack.c.l.b16 %v1323
      %v1340 = vunpack.c.l.b16 %v1324
      %v1341 = vunpack.c.l.b16 %v1325
      %v1342 = vunpack.c.l.b16 %v1326
      %v1343 = vunpack.c.l.b16 %v1327
      %v1344 = vunpack.c.l.b16 %v1328
      %v1345 = vunpack.c.l.b16 %v1329
      %v1346 = vunpack.c.l.b16 %v1330
      %v1347 = vpack.c.b16 %v1332, %v1331
      %v1348 = vpack.c.b16 %v1334, %v1333
      %v1349 = vpack.c.b16 %v1336, %v1335
      %v1350 = vpack.c.b16 %v1338, %v1337
      %v1351 = vpack.c.b16 %v1340, %v1339
      %v1352 = vpack.c.b16 %v1342, %v1341
      %v1353 = vpack.c.b16 %v1344, %v1343
      %v1354 = vpack.c.b16 %v1346, %v1345
      %v1355 = vrot.slane %v1347, 7
      %v1356 = vrot.slane %v1348, 7
      %v1357 = vsel %vm935, %v1355, %v1356
      %v1358 = vrot.slane %v1349, 7
      %v1359 = vsel %vm935, %v1356, %v1358
      %v1360 = vrot.slane %v1350, 7
      %v1361 = vsel %vm935, %v1358, %v1360
      %v1362 = vrot.slane %v1351, 7
      %v1363 = vsel %vm935, %v1360, %v1362
      %v1364 = vrot.slane %v1352, 7
      %v1365 = vsel %vm935, %v1362, %v1364
      %v1366 = vrot.slane %v1353, 7
      %v1367 = vsel %vm935, %v1364, %v1366
      %v1368 = vrot.slane %v1354, 7
      %v1369 = vsel %vm935, %v1366, %v1368
      %vm1370 = vcmp.ne.s16.totalorder %v1355, 0
      %vm1371 = vcmp.ne.s16.totalorder %v1357, 0
      %vm1372 = vcmp.ne.s16.totalorder %v1359, 0
      %vm1373 = vcmp.ne.s16.totalorder %v1361, 0
      %vm1374 = vcmp.ne.s16.totalorder %v1363, 0
      %vm1375 = vcmp.ne.s16.totalorder %v1365, 0
      %vm1376 = vcmp.ne.s16.totalorder %v1367, 0
      %vm1377 = vcmp.ne.s16.totalorder %v1369, 0
      %vm1378 = vcmp.ne.s16.totalorder %v1368, 0
      %v1379 = vsel %vm1370, %v937, 0
      %v1380 = vsel %vm1371, %v859, 0
      %v1381 = vsel %vm1372, %v867, 0
      %v1382 = vsel %vm1373, %v875, 0
      %v1383 = vsel %vm1374, %v883, 0
      %v1384 = vsel %vm1375, %v891, 0
      %v1385 = vsel %vm1376, %v899, 0
      %v1386 = vsel %vm1377, %v907, 0
      %v1387 = vsel %vm1378, %v915, 0
      %v1388 = vsel %vm1251, %v859, 0
      %v1389 = vsel %vm1252, %v867, 0
      %v1390 = vsel %vm1253, %v875, 0
      %v1391 = vsel %vm1254, %v883, 0
      %v1392 = vsel %vm1255, %v891, 0
      %v1393 = vsel %vm1256, %v899, 0
      %v1394 = vsel %vm1257, %v907, 0
      %v1395 = vsel %vm1258, %v915, 0
      %v1396 = vsel %vm1370, %v859, 0
      %v1397 = vsel %vm1371, %v867, 0
      %v1398 = vsel %vm1372, %v875, 0
      %v1399 = vsel %vm1373, %v883, 0
      %v1400 = vsel %vm1374, %v891, 0
      %v1401 = vsel %vm1375, %v899, 0
      %v1402 = vsel %vm1376, %v907, 0
      %v1403 = vsel %vm1377, %v915, 0
      %v1404 = vsel %vm1378, %v923, 0
      %v1405 = vsel %vm1251, %v867, 0
      %v1406 = vsel %vm1252, %v875, 0
      %v1407 = vsel %vm1253, %v883, 0
      %v1408 = vsel %vm1254, %v891, 0
      %v1409 = vsel %vm1255, %v899, 0
      %v1410 = vsel %vm1256, %v907, 0
      %v1411 = vsel %vm1257, %v915, 0
      %v1412 = vsel %vm1258, %v923, 0
      %v1413 = vsel %vm1370, %v867, 0
      %v1414 = vsel %vm1371, %v875, 0
      %v1415 = vsel %vm1372, %v883, 0
      %v1416 = vsel %vm1373, %v891, 0
      %v1417 = vsel %vm1374, %v899, 0
      %v1418 = vsel %vm1375, %v907, 0
      %v1419 = vsel %vm1376, %v915, 0
      %v1420 = vsel %vm1377, %v923, 0
      %v1421 = vsel %vm1378, %v938, 0
      %vm1422 = vsmask.f32 7424
      %v1424 = vshrl.u32 %v937, 16
      %v1426 = vshll.u32 %v937, 16
      %v1428 = vrot.slane %v1426, 1
      %v1429 = vor.u32 %v1424, %v1428
      %v1431 = vshll.u32 %v859, 16
      %v1433 = vrot.slane %v1431, 1
      %v1434 = vsel %vm1422, %v1429, %v1433
      %v1435 = vshrl.u32 %v859, 16
      %v1437 = vor.u32 %v1435, %v1433
      %v1439 = vshll.u32 %v867, 16
      %v1441 = vrot.slane %v1439, 1
      %v1442 = vsel %vm1422, %v1437, %v1441
      %v1443 = vshrl.u32 %v867, 16
      %v1445 = vor.u32 %v1443, %v1441
      %v1447 = vshll.u32 %v875, 16
      %v1449 = vrot.slane %v1447, 1
      %v1450 = vsel %vm1422, %v1445, %v1449
      %v1451 = vshrl.u32 %v875, 16
      %v1453 = vor.u32 %v1451, %v1449
      %v1455 = vshll.u32 %v883, 16
      %v1457 = vrot.slane %v1455, 1
      %v1458 = vsel %vm1422, %v1453, %v1457
      %v1459 = vshrl.u32 %v883, 16
      %v1461 = vor.u32 %v1459, %v1457
      %v1463 = vshll.u32 %v891, 16
      %v1465 = vrot.slane %v1463, 1
      %v1466 = vsel %vm1422, %v1461, %v1465
      %v1467 = vshrl.u32 %v891, 16
      %v1469 = vor.u32 %v1467, %v1465
      %v1471 = vshll.u32 %v899, 16
      %v1473 = vrot.slane %v1471, 1
      %v1474 = vsel %vm1422, %v1469, %v1473
      %v1475 = vshrl.u32 %v899, 16
      %v1477 = vor.u32 %v1475, %v1473
      %v1479 = vshll.u32 %v907, 16
      %v1481 = vrot.slane %v1479, 1
      %v1482 = vsel %vm1422, %v1477, %v1481
      %v1483 = vshrl.u32 %v907, 16
      %v1485 = vor.u32 %v1483, %v1481
      %v1487 = vshll.u32 %v915, 16
      %v1489 = vrot.slane %v1487, 1
      %v1490 = vsel %vm1422, %v1485, %v1489
      %1491 = vrot.lane.b32.xlu0 %v1434, 8
      %v1492 = vpop.permute.xlu0 %1491
      %1493 = vrot.lane.b32.xlu0 %v1442, 8
      %v1494 = vpop.permute.xlu0 %1493
      %1495 = vrot.lane.b32.xlu0 %v1450, 8
      %v1496 = vpop.permute.xlu0 %1495
      %1497 = vrot.lane.b32.xlu0 %v1458, 8
      %v1498 = vpop.permute.xlu0 %1497
      %1499 = vrot.lane.b32.xlu0 %v1466, 8
      %v1500 = vpop.permute.xlu0 %1499
      %1501 = vrot.lane.b32.xlu0 %v1474, 8
      %v1502 = vpop.permute.xlu0 %1501
      %1503 = vrot.lane.b32.xlu0 %v1482, 8
      %v1504 = vpop.permute.xlu0 %1503
      %1505 = vrot.lane.b32.xlu0 %v1490, 8
      %v1506 = vpop.permute.xlu0 %1505
      %vm1516 = vcmask 1046528
      %v1517 = vrot.slane %v1379, 1
      %v1518 = vrot.slane %v1380, 1
      %v1519 = vsel %vm1516, %v1517, %v1518
      %v1520 = vrot.slane %v1381, 1
      %v1521 = vsel %vm1516, %v1518, %v1520
      %v1522 = vrot.slane %v1382, 1
      %v1523 = vsel %vm1516, %v1520, %v1522
      %v1524 = vrot.slane %v1383, 1
      %v1525 = vsel %vm1516, %v1522, %v1524
      %v1526 = vrot.slane %v1384, 1
      %v1527 = vsel %vm1516, %v1524, %v1526
      %v1528 = vrot.slane %v1385, 1
      %v1529 = vsel %vm1516, %v1526, %v1528
      %v1530 = vrot.slane %v1386, 1
      %v1531 = vsel %vm1516, %v1528, %v1530
      %v1532 = vrot.slane %v1387, 1
      %v1533 = vsel %vm1516, %v1530, %v1532
      %1534 = vrot.lane.b32.xlu0 %v1519, 16
      %v1535 = vpop.permute.xlu0 %1534
      %1536 = vrot.lane.b32.xlu0 %v1521, 16
      %v1537 = vpop.permute.xlu0 %1536
      %1538 = vrot.lane.b32.xlu0 %v1523, 16
      %v1539 = vpop.permute.xlu0 %1538
      %1540 = vrot.lane.b32.xlu0 %v1525, 16
      %v1541 = vpop.permute.xlu0 %1540
      %1542 = vrot.lane.b32.xlu0 %v1527, 16
      %v1543 = vpop.permute.xlu0 %1542
      %1544 = vrot.lane.b32.xlu0 %v1529, 16
      %v1545 = vpop.permute.xlu0 %1544
      %1546 = vrot.lane.b32.xlu0 %v1531, 16
      %v1547 = vpop.permute.xlu0 %1546
      %1548 = vrot.lane.b32.xlu0 %v1533, 16
      %v1549 = vpop.permute.xlu0 %1548
      %1558 = vrot.lane.b32.xlu0 %v1388, 24
      %v1559 = vpop.permute.xlu0 %1558
      %1560 = vrot.lane.b32.xlu0 %v1389, 24
      %v1561 = vpop.permute.xlu0 %1560
      %1562 = vrot.lane.b32.xlu0 %v1390, 24
      %v1563 = vpop.permute.xlu0 %1562
      %1564 = vrot.lane.b32.xlu0 %v1391, 24
      %v1565 = vpop.permute.xlu0 %1564
      %1566 = vrot.lane.b32.xlu0 %v1392, 24
      %v1567 = vpop.permute.xlu0 %1566
      %1568 = vrot.lane.b32.xlu0 %v1393, 24
      %v1569 = vpop.permute.xlu0 %1568
      %1570 = vrot.lane.b32.xlu0 %v1394, 24
      %v1571 = vpop.permute.xlu0 %1570
      %1572 = vrot.lane.b32.xlu0 %v1395, 24
      %v1573 = vpop.permute.xlu0 %1572
      %v1574 = vshrl.u32 %v915, 16
      %v1576 = vor.u32 %v1574, %v1489
      %v1578 = vshll.u32 %v923, 16
      %v1580 = vrot.slane %v1578, 1
      %v1581 = vsel %vm1422, %v1576, %v1580
      %1582 = vrot.lane.b32.xlu0 %v1442, 32
      %v1583 = vpop.permute.xlu0 %1582
      %1584 = vrot.lane.b32.xlu0 %v1450, 32
      %v1585 = vpop.permute.xlu0 %1584
      %1586 = vrot.lane.b32.xlu0 %v1458, 32
      %v1587 = vpop.permute.xlu0 %1586
      %1588 = vrot.lane.b32.xlu0 %v1466, 32
      %v1589 = vpop.permute.xlu0 %1588
      %1590 = vrot.lane.b32.xlu0 %v1474, 32
      %v1591 = vpop.permute.xlu0 %1590
      %1592 = vrot.lane.b32.xlu0 %v1482, 32
      %v1593 = vpop.permute.xlu0 %1592
      %1594 = vrot.lane.b32.xlu0 %v1490, 32
      %v1595 = vpop.permute.xlu0 %1594
      %1596 = vrot.lane.b32.xlu0 %v1581, 32
      %v1597 = vpop.permute.xlu0 %1596
      %v1607 = vrot.slane %v1396, 1
      %v1608 = vrot.slane %v1397, 1
      %v1609 = vsel %vm1516, %v1607, %v1608
      %v1610 = vrot.slane %v1398, 1
      %v1611 = vsel %vm1516, %v1608, %v1610
      %v1612 = vrot.slane %v1399, 1
      %v1613 = vsel %vm1516, %v1610, %v1612
      %v1614 = vrot.slane %v1400, 1
      %v1615 = vsel %vm1516, %v1612, %v1614
      %v1616 = vrot.slane %v1401, 1
      %v1617 = vsel %vm1516, %v1614, %v1616
      %v1618 = vrot.slane %v1402, 1
      %v1619 = vsel %vm1516, %v1616, %v1618
      %v1620 = vrot.slane %v1403, 1
      %v1621 = vsel %vm1516, %v1618, %v1620
      %v1622 = vrot.slane %v1404, 1
      %v1623 = vsel %vm1516, %v1620, %v1622
      %1624 = vrot.lane.b32.xlu0 %v1609, 40
      %v1625 = vpop.permute.xlu0 %1624
      %1626 = vrot.lane.b32.xlu0 %v1611, 40
      %v1627 = vpop.permute.xlu0 %1626
      %1628 = vrot.lane.b32.xlu0 %v1613, 40
      %v1629 = vpop.permute.xlu0 %1628
      %1630 = vrot.lane.b32.xlu0 %v1615, 40
      %v1631 = vpop.permute.xlu0 %1630
      %1632 = vrot.lane.b32.xlu0 %v1617, 40
      %v1633 = vpop.permute.xlu0 %1632
      %1634 = vrot.lane.b32.xlu0 %v1619, 40
      %v1635 = vpop.permute.xlu0 %1634
      %1636 = vrot.lane.b32.xlu0 %v1621, 40
      %v1637 = vpop.permute.xlu0 %1636
      %1638 = vrot.lane.b32.xlu0 %v1623, 40
      %v1639 = vpop.permute.xlu0 %1638
      %1648 = vrot.lane.b32.xlu0 %v1405, 48
      %v1649 = vpop.permute.xlu0 %1648
      %1650 = vrot.lane.b32.xlu0 %v1406, 48
      %v1651 = vpop.permute.xlu0 %1650
      %1652 = vrot.lane.b32.xlu0 %v1407, 48
      %v1653 = vpop.permute.xlu0 %1652
      %1654 = vrot.lane.b32.xlu0 %v1408, 48
      %v1655 = vpop.permute.xlu0 %1654
      %1656 = vrot.lane.b32.xlu0 %v1409, 48
      %v1657 = vpop.permute.xlu0 %1656
      %1658 = vrot.lane.b32.xlu0 %v1410, 48
      %v1659 = vpop.permute.xlu0 %1658
      %1660 = vrot.lane.b32.xlu0 %v1411, 48
      %v1661 = vpop.permute.xlu0 %1660
      %1662 = vrot.lane.b32.xlu0 %v1412, 48
      %v1663 = vpop.permute.xlu0 %1662
      %v1664 = vshrl.u32 %v923, 16
      %v1666 = vor.u32 %v1664, %v1580
      %v1668 = vshll.u32 %v938, 16
      %v1670 = vrot.slane %v1668, 1
      %v1671 = vsel %vm1422, %v1666, %v1670
      %1672 = vrot.lane.b32.xlu0 %v1450, 56
      %v1673 = vpop.permute.xlu0 %1672
      %1674 = vrot.lane.b32.xlu0 %v1458, 56
      %v1675 = vpop.permute.xlu0 %1674
      %1676 = vrot.lane.b32.xlu0 %v1466, 56
      %v1677 = vpop.permute.xlu0 %1676
      %1678 = vrot.lane.b32.xlu0 %v1474, 56
      %v1679 = vpop.permute.xlu0 %1678
      %1680 = vrot.lane.b32.xlu0 %v1482, 56
      %v1681 = vpop.permute.xlu0 %1680
      %1682 = vrot.lane.b32.xlu0 %v1490, 56
      %v1683 = vpop.permute.xlu0 %1682
      %1684 = vrot.lane.b32.xlu0 %v1581, 56
      %v1685 = vpop.permute.xlu0 %1684
      %1686 = vrot.lane.b32.xlu0 %v1671, 56
      %v1687 = vpop.permute.xlu0 %1686
      %v1697 = vrot.slane %v1413, 1
      %v1698 = vrot.slane %v1414, 1
      %v1699 = vsel %vm1516, %v1697, %v1698
      %v1700 = vrot.slane %v1415, 1
      %v1701 = vsel %vm1516, %v1698, %v1700
      %v1702 = vrot.slane %v1416, 1
      %v1703 = vsel %vm1516, %v1700, %v1702
      %v1704 = vrot.slane %v1417, 1
      %v1705 = vsel %vm1516, %v1702, %v1704
      %v1706 = vrot.slane %v1418, 1
      %v1707 = vsel %vm1516, %v1704, %v1706
      %v1708 = vrot.slane %v1419, 1
      %v1709 = vsel %vm1516, %v1706, %v1708
      %v1710 = vrot.slane %v1420, 1
      %v1711 = vsel %vm1516, %v1708, %v1710
      %v1712 = vrot.slane %v1421, 1
      %v1713 = vsel %vm1516, %v1710, %v1712
      %1714 = vrot.lane.b32.xlu0 %v1699, 64
      %v1715 = vpop.permute.xlu0 %1714
      %1716 = vrot.lane.b32.xlu0 %v1701, 64
      %v1717 = vpop.permute.xlu0 %1716
      %1718 = vrot.lane.b32.xlu0 %v1703, 64
      %v1719 = vpop.permute.xlu0 %1718
      %1720 = vrot.lane.b32.xlu0 %v1705, 64
      %v1721 = vpop.permute.xlu0 %1720
      %1722 = vrot.lane.b32.xlu0 %v1707, 64
      %v1723 = vpop.permute.xlu0 %1722
      %1724 = vrot.lane.b32.xlu0 %v1709, 64
      %v1725 = vpop.permute.xlu0 %1724
      %1726 = vrot.lane.b32.xlu0 %v1711, 64
      %v1727 = vpop.permute.xlu0 %1726
      %1728 = vrot.lane.b32.xlu0 %v1713, 64
      %v1729 = vpop.permute.xlu0 %1728
      %vm1730 = vcmask 64512
      %v1733 = vsel %vm1730, %v1259, %v1492
      %v1736 = vsel %vm1730, %v1260, %v1494
      %v1739 = vsel %vm1730, %v1261, %v1496
      %v1742 = vsel %vm1730, %v1262, %v1498
      %v1745 = vsel %vm1730, %v1263, %v1500
      %v1748 = vsel %vm1730, %v1264, %v1502
      %v1751 = vsel %vm1730, %v1265, %v1504
      %v1754 = vsel %vm1730, %v1266, %v1506
      %vm1755 = vcmask 130048
      %v1757 = vsel %vm1755, %v1733, %v1535
      %v1759 = vsel %vm1755, %v1736, %v1537
      %v1761 = vsel %vm1755, %v1739, %v1539
      %v1763 = vsel %vm1755, %v1742, %v1541
      %v1765 = vsel %vm1755, %v1745, %v1543
      %v1767 = vsel %vm1755, %v1748, %v1545
      %v1769 = vsel %vm1755, %v1751, %v1547
      %v1771 = vsel %vm1755, %v1754, %v1549
      %vm1772 = vcmask 195584
      %v1774 = vsel %vm1772, %v1757, %v1559
      %v1776 = vsel %vm1772, %v1759, %v1561
      %v1778 = vsel %vm1772, %v1761, %v1563
      %v1780 = vsel %vm1772, %v1763, %v1565
      %v1782 = vsel %vm1772, %v1765, %v1567
      %v1784 = vsel %vm1772, %v1767, %v1569
      %v1786 = vsel %vm1772, %v1769, %v1571
      %v1788 = vsel %vm1772, %v1771, %v1573
      %vm1789 = vcmask 261120
      %v1791 = vsel %vm1789, %v1774, %v1583
      %v1793 = vsel %vm1789, %v1776, %v1585
      %v1795 = vsel %vm1789, %v1778, %v1587
      %v1797 = vsel %vm1789, %v1780, %v1589
      %v1799 = vsel %vm1789, %v1782, %v1591
      %v1801 = vsel %vm1789, %v1784, %v1593
      %v1803 = vsel %vm1789, %v1786, %v1595
      %v1805 = vsel %vm1789, %v1788, %v1597
      %vm1806 = vcmask 326656
      %v1808 = vsel %vm1806, %v1791, %v1625
      %v1810 = vsel %vm1806, %v1793, %v1627
      %v1812 = vsel %vm1806, %v1795, %v1629
      %v1814 = vsel %vm1806, %v1797, %v1631
      %v1816 = vsel %vm1806, %v1799, %v1633
      %v1818 = vsel %vm1806, %v1801, %v1635
      %v1820 = vsel %vm1806, %v1803, %v1637
      %v1822 = vsel %vm1806, %v1805, %v1639
      %vm1823 = vcmask 392192
      %v1825 = vsel %vm1823, %v1808, %v1649
      %v1827 = vsel %vm1823, %v1810, %v1651
      %v1829 = vsel %vm1823, %v1812, %v1653
      %v1831 = vsel %vm1823, %v1814, %v1655
      %v1833 = vsel %vm1823, %v1816, %v1657
      %v1835 = vsel %vm1823, %v1818, %v1659
      %v1837 = vsel %vm1823, %v1820, %v1661
      %v1839 = vsel %vm1823, %v1822, %v1663
      %vm1840 = vcmask 457728
      %v1842 = vsel %vm1840, %v1825, %v1673
      %v1844 = vsel %vm1840, %v1827, %v1675
      %v1846 = vsel %vm1840, %v1829, %v1677
      %v1848 = vsel %vm1840, %v1831, %v1679
      %v1850 = vsel %vm1840, %v1833, %v1681
      %v1852 = vsel %vm1840, %v1835, %v1683
      %v1854 = vsel %vm1840, %v1837, %v1685
      %v1856 = vsel %vm1840, %v1839, %v1687
      %vm1857 = vcmask 523264
      %v1859 = vsel %vm1857, %v1842, %v1715
      %v1861 = vsel %vm1857, %v1844, %v1717
      %v1863 = vsel %vm1857, %v1846, %v1719
      %v1865 = vsel %vm1857, %v1848, %v1721
      %v1867 = vsel %vm1857, %v1850, %v1723
      %v1869 = vsel %vm1857, %v1852, %v1725
      %v1871 = vsel %vm1857, %v1854, %v1727
      %v1873 = vsel %vm1857, %v1856, %v1729
      %v1874 = vld [vmem:[%s3] sm:$0xf]
      %v1875 = vld [vmem:[%s3 + $0x4] sm:$0xf]
      %v1876 = vld [vmem:[%s3 + $0x8] sm:$0xf]
      %v1877 = vld [vmem:[%s3 + $0xc] sm:$0xf]
      %v1878 = vld [vmem:[%s3 + $0x10] sm:$0xf]
      %v1879 = vld [vmem:[%s3 + $0x14] sm:$0xf]
      %v1880 = vld [vmem:[%s3 + $0x18] sm:$0xf]
      %v1881 = vld [vmem:[%s3 + $0x1c] sm:$0xf]
      %v1882 = vld [vmem:[%s3 + $0x20] sm:$0xf]
      %v1892 = vunpack.c.l.b16 %v1874
      %v1893 = vunpack.c.l.b16 %v1875
      %v1894 = vunpack.c.l.b16 %v1876
      %v1895 = vunpack.c.l.b16 %v1877
      %v1896 = vunpack.c.l.b16 %v1878
      %v1897 = vunpack.c.l.b16 %v1879
      %v1898 = vunpack.c.l.b16 %v1880
      %v1899 = vunpack.c.l.b16 %v1881
      %v1900 = vunpack.c.l.b16 %v1882
      %v1901 = vpack.c.b16 %v1893, %v1892
      %v1902 = vpack.c.b16 %v1895, %v1894
      %v1903 = vpack.c.b16 %v1897, %v1896
      %v1904 = vpack.c.b16 %v1899, %v1898
      %v1905 = vpack.c.b16 %v1900, %v1900
      %vm1910 = vcmask 588800
      %v1911 = vsel %vm1910, %v1859, 0
      %v1913 = vsel %vm1910, %v1861, 0
      %v1915 = vsel %vm1910, %v1863, 0
      %v1917 = vsel %vm1910, %v1865, 0
      %v1919 = vsel %vm1910, %v1867, 0
      %v1921 = vsel %vm1910, %v1869, 0
      %v1923 = vsel %vm1910, %v1871, 0
      %v1925 = vsel %vm1910, %v1873, 0
      %vm1927 = vcmask 1043456
      %v1929 = vsel %vm1927, %v1905, 0
      %1931 = vmatprep.subr.bf16.mxu0 0
      %1932 = vmatpush1.bf16.msra.mxu0 0
      %1933 = vmatprep.subr.bf16.mxu0 0
      %1934 = vmatpush1.bf16.msra.mxu0 0
      %1935 = vmatprep.subr.bf16.mxu0 0
      %1936 = vmatpush1.bf16.msra.mxu0 0
      %1937 = vmatprep.subr.bf16.mxu0 0
      %1938 = vmatpush1.bf16.msra.mxu0 %v1929
      %1939 = vmatprep.subr.bf16.mxu0 0
      %1940 = vmatpush1.bf16.msra.mxu0 %v1904
      %1941 = vmatprep.subr.bf16.mxu0 0
      %1942 = vmatpush1.bf16.msra.mxu0 %v1903
      %1943 = vmatprep.subr.bf16.mxu0 0
      %1944 = vmatpush1.bf16.msra.mxu0 %v1902
      %1945 = vmatprep.subr.bf16.mxu0 0
      %1946 = vmatpush1.bf16.msra.mxu0 %v1901
      %1947 = vmatprep.subr.bf16.mxu0 0
      %1948 = vmatpush2.bf16.msra.mxu0 0
      %1949 = vmatprep.subr.bf16.mxu0 0
      %1950 = vmatpush2.bf16.msra.mxu0 0
      %1951 = vmatprep.subr.bf16.mxu0 0
      %1952 = vmatpush2.bf16.msra.mxu0 0
      %1953 = vmatprep.subr.bf16.mxu0 0
      %1954 = vmatpush2.bf16.msra.mxu0 0
      %1955 = vmatprep.subr.bf16.mxu0 0
      %1956 = vmatpush2.bf16.msra.mxu0 0
      %1957 = vmatprep.subr.bf16.mxu0 0
      %1958 = vmatpush2.bf16.msra.mxu0 0
      %1959 = vmatprep.subr.bf16.mxu0 0
      %1960 = vmatpush2.bf16.msra.mxu0 0
      %1961 = vmatprep.subr.bf16.mxu0 0
      %1962 = vmatpush2.bf16.msra.mxu0 0
      %1963 = vmatprep.mubr.bf16.mxu0 0
      %1964 = vmatmul.mubr.bf16.gmra.mxu0 %v1911
      %v1965 = vpop.f32.mrf.mxu0
      %v1966 = vadd.f32 0.0, %v1965
      %v1967 = vpop.f32.mrf.mxu0
      %v1968 = vpop.f32.mrf.mxu0
      %v1969 = vadd.f32 0.0, %v1968
      %v1970 = vpop.f32.mrf.mxu0
      %1971 = vmatprep.mubr.bf16.mxu0 0
      %1972 = vmatmul.mubr.bf16.gmra.mxu0 %v1913
      %v1973 = vpop.f32.mrf.mxu0
      %v1974 = vadd.f32 0.0, %v1973
      %v1975 = vpop.f32.mrf.mxu0
      %v1976 = vpop.f32.mrf.mxu0
      %v1977 = vadd.f32 0.0, %v1976
      %v1978 = vpop.f32.mrf.mxu0
      %1979 = vmatprep.mubr.bf16.mxu0 0
      %1980 = vmatmul.mubr.bf16.gmra.mxu0 %v1915
      %v1981 = vpop.f32.mrf.mxu0
      %v1982 = vadd.f32 0.0, %v1981
      %v1983 = vpop.f32.mrf.mxu0
      %v1984 = vpop.f32.mrf.mxu0
      %v1985 = vadd.f32 0.0, %v1984
      %v1986 = vpop.f32.mrf.mxu0
      %1987 = vmatprep.mubr.bf16.mxu0 0
      %1988 = vmatmul.mubr.bf16.gmra.mxu0 %v1917
      %v1989 = vpop.f32.mrf.mxu0
      %v1990 = vadd.f32 0.0, %v1989
      %v1991 = vpop.f32.mrf.mxu0
      %v1992 = vpop.f32.mrf.mxu0
      %v1993 = vadd.f32 0.0, %v1992
      %v1994 = vpop.f32.mrf.mxu0
      %1995 = vmatprep.mubr.bf16.mxu0 0
      %1996 = vmatmul.mubr.bf16.gmra.mxu0 %v1919
      %v1997 = vpop.f32.mrf.mxu0
      %v1998 = vadd.f32 0.0, %v1997
      %v1999 = vpop.f32.mrf.mxu0
      %v2000 = vpop.f32.mrf.mxu0
      %v2001 = vadd.f32 0.0, %v2000
      %v2002 = vpop.f32.mrf.mxu0
      %2003 = vmatprep.mubr.bf16.mxu0 0
      %2004 = vmatmul.mubr.bf16.gmra.mxu0 %v1921
      %v2005 = vpop.f32.mrf.mxu0
      %v2006 = vadd.f32 0.0, %v2005
      %v2007 = vpop.f32.mrf.mxu0
      %v2008 = vpop.f32.mrf.mxu0
      %v2009 = vadd.f32 0.0, %v2008
      %v2010 = vpop.f32.mrf.mxu0
      %2011 = vmatprep.mubr.bf16.mxu0 0
      %2012 = vmatmul.mubr.bf16.gmra.mxu0 %v1923
      %v2013 = vpop.f32.mrf.mxu0
      %v2014 = vadd.f32 0.0, %v2013
      %v2015 = vpop.f32.mrf.mxu0
      %v2016 = vpop.f32.mrf.mxu0
      %v2017 = vadd.f32 0.0, %v2016
      %v2018 = vpop.f32.mrf.mxu0
      %2019 = vmatprep.mubr.bf16.mxu0 0
      %2020 = vmatmul.mubr.bf16.gmra.mxu0 %v1925
      %v2021 = vpop.f32.mrf.mxu0
      %v2022 = vadd.f32 0.0, %v2021
      %v2023 = vpop.f32.mrf.mxu0
      %v2024 = vpop.f32.mrf.mxu0
      %v2025 = vadd.f32 0.0, %v2024
      %v2026 = vpop.f32.mrf.mxu0
      %2027 = vdwg.mxu0
      %v2028 = vsel %vm1730, %v1966, 0.0
      %v2029 = vsel %vm1730, %v1969, 0.0
      %v2030 = vadd.f32 %v2028, %v2029
      %v2031 = vsel %vm1730, %v1974, 0.0
      %v2032 = vadd.f32 %v2030, %v2031
      %v2033 = vsel %vm1730, %v1977, 0.0
      %v2034 = vadd.f32 %v2032, %v2033
      %v2035 = vsel %vm1730, %v1982, 0.0
      %v2036 = vadd.f32 %v2034, %v2035
      %v2037 = vsel %vm1730, %v1985, 0.0
      %v2038 = vadd.f32 %v2036, %v2037
      %v2039 = vsel %vm1730, %v1990, 0.0
      %v2040 = vadd.f32 %v2038, %v2039
      %v2041 = vsel %vm1730, %v1993, 0.0
      %v2042 = vadd.f32 %v2040, %v2041
      %v2043 = vsel %vm1730, %v1998, 0.0
      %v2044 = vadd.f32 %v2042, %v2043
      %v2045 = vsel %vm1730, %v2001, 0.0
      %v2046 = vadd.f32 %v2044, %v2045
      %v2047 = vsel %vm1730, %v2006, 0.0
      %v2048 = vadd.f32 %v2046, %v2047
      %v2049 = vsel %vm1730, %v2009, 0.0
      %v2050 = vadd.f32 %v2048, %v2049
      %v2051 = vsel %vm1730, %v2014, 0.0
      %v2052 = vadd.f32 %v2050, %v2051
      %v2053 = vsel %vm1730, %v2017, 0.0
      %v2054 = vadd.f32 %v2052, %v2053
      %v2055 = vsel %vm1730, %v2022, 0.0
      %v2056 = vadd.f32 %v2054, %v2055
      %v2057 = vsel %vm1730, %v2025, 0.0
      %v2058 = vadd.f32 %v2056, %v2057
      %v2059 = vrot.slane %v2058, 4
      %v2060 = vadd.f32 %v2058, %v2059
      %v2061 = vrot.slane %v2060, 2
      %v2062 = vadd.f32 %v2060, %v2061
      %v2063 = vrot.slane %v2062, 1
      %v2064 = vadd.f32 %v2062, %v2063
      %v2065 = vmul.f32 %v1966, %v1966
      %v2066 = vmul.f32 %v1969, %v1969
      %v2067 = vmul.f32 %v1974, %v1974
      %v2068 = vmul.f32 %v1977, %v1977
      %v2069 = vmul.f32 %v1982, %v1982
      %v2070 = vmul.f32 %v1985, %v1985
      %v2071 = vmul.f32 %v1990, %v1990
      %v2072 = vmul.f32 %v1993, %v1993
      %v2073 = vmul.f32 %v1998, %v1998
      %v2074 = vmul.f32 %v2001, %v2001
      %v2075 = vmul.f32 %v2006, %v2006
      %v2076 = vmul.f32 %v2009, %v2009
      %v2077 = vmul.f32 %v2014, %v2014
      %v2078 = vmul.f32 %v2017, %v2017
      %v2079 = vmul.f32 %v2022, %v2022
      %v2080 = vmul.f32 %v2025, %v2025
      %v2081 = vsel %vm1730, %v2065, 0.0
      %v2082 = vsel %vm1730, %v2066, 0.0
      %v2083 = vadd.f32 %v2081, %v2082
      %v2084 = vsel %vm1730, %v2067, 0.0
      %v2085 = vadd.f32 %v2083, %v2084
      %v2086 = vsel %vm1730, %v2068, 0.0
      %v2087 = vadd.f32 %v2085, %v2086
      %v2088 = vsel %vm1730, %v2069, 0.0
      %v2089 = vadd.f32 %v2087, %v2088
      %v2090 = vsel %vm1730, %v2070, 0.0
      %v2091 = vadd.f32 %v2089, %v2090
      %v2092 = vsel %vm1730, %v2071, 0.0
      %v2093 = vadd.f32 %v2091, %v2092
      %v2094 = vsel %vm1730, %v2072, 0.0
      %v2095 = vadd.f32 %v2093, %v2094
      %v2096 = vsel %vm1730, %v2073, 0.0
      %v2097 = vadd.f32 %v2095, %v2096
      %v2098 = vsel %vm1730, %v2074, 0.0
      %v2099 = vadd.f32 %v2097, %v2098
      %v2100 = vsel %vm1730, %v2075, 0.0
      %v2101 = vadd.f32 %v2099, %v2100
      %v2102 = vsel %vm1730, %v2076, 0.0
      %v2103 = vadd.f32 %v2101, %v2102
      %v2104 = vsel %vm1730, %v2077, 0.0
      %v2105 = vadd.f32 %v2103, %v2104
      %v2106 = vsel %vm1730, %v2078, 0.0
      %v2107 = vadd.f32 %v2105, %v2106
      %v2108 = vsel %vm1730, %v2079, 0.0
      %v2109 = vadd.f32 %v2107, %v2108
      %v2110 = vsel %vm1730, %v2080, 0.0
      %v2111 = vadd.f32 %v2109, %v2110
      %v2112 = vrot.slane %v2111, 4
      %v2113 = vadd.f32 %v2111, %v2112
      %v2114 = vrot.slane %v2113, 2
      %v2115 = vadd.f32 %v2113, %v2114
      %v2116 = vrot.slane %v2115, 1
      %v2117 = vadd.f32 %v2115, %v2116
      %vm2118 = vcmask 1040384
      %v2119 = vsel %vm2118, %v2064, %v2117
      %vm2120 = vcmask 58368
      %2121 = vst.msk [vmem:[%s464] sm:$0x3] %vm2120, %v2119
      %v2122 = vpack.c.bf16 %v1969, %v1966
      %v2123 = vpack.c.bf16 %v1977, %v1974
      %v2124 = vpack.c.bf16 %v1985, %v1982
      %v2125 = vpack.c.bf16 %v1993, %v1990
      %v2126 = vpack.c.bf16 %v2001, %v1998
      %v2127 = vpack.c.bf16 %v2009, %v2006
      %v2128 = vpack.c.bf16 %v2017, %v2014
      %v2129 = vpack.c.bf16 %v2025, %v2022
      %v2138 = vunpack.c.l.b16 %v2122
      %v2139 = vunpack.c.h.b16 %v2122
      %v2140 = vunpack.c.l.b16 %v2123
      %v2141 = vunpack.c.h.b16 %v2123
      %v2142 = vunpack.c.l.b16 %v2124
      %v2143 = vunpack.c.h.b16 %v2124
      %v2144 = vunpack.c.l.b16 %v2125
      %v2145 = vunpack.c.h.b16 %v2125
      %v2146 = vunpack.c.l.b16 %v2126
      %v2147 = vunpack.c.h.b16 %v2126
      %v2148 = vunpack.c.l.b16 %v2127
      %v2149 = vunpack.c.h.b16 %v2127
      %v2150 = vunpack.c.l.b16 %v2128
      %v2151 = vunpack.c.h.b16 %v2128
      %v2152 = vunpack.c.l.b16 %v2129
      %v2153 = vunpack.c.h.b16 %v2129
      %v2154 = vpack.c.b16 %v2138, %v2138
      %v2155 = vpack.c.b16 %v2139, %v2139
      %v2156 = vpack.c.b16 %v2140, %v2140
      %v2157 = vpack.c.b16 %v2141, %v2141
      %v2158 = vpack.c.b16 %v2142, %v2142
      %v2159 = vpack.c.b16 %v2143, %v2143
      %v2160 = vpack.c.b16 %v2144, %v2144
      %v2161 = vpack.c.b16 %v2145, %v2145
      %v2162 = vpack.c.b16 %v2146, %v2146
      %v2163 = vpack.c.b16 %v2147, %v2147
      %v2164 = vpack.c.b16 %v2148, %v2148
      %v2165 = vpack.c.b16 %v2149, %v2149
      %v2166 = vpack.c.b16 %v2150, %v2150
      %v2167 = vpack.c.b16 %v2151, %v2151
      %v2168 = vpack.c.b16 %v2152, %v2152
      %v2169 = vpack.c.b16 %v2153, %v2153
      %vm2186 = vcmask 60416
      %2187 = vst.msk [vmem:[%s455] sm:$0xf] %vm2186, %v2154
      %2188 = vst.msk [vmem:[%s455 + $0x4] sm:$0xf] %vm2186, %v2155
      %2189 = vst.msk [vmem:[%s455 + $0x8] sm:$0xf] %vm2186, %v2156
      %2190 = vst.msk [vmem:[%s455 + $0xc] sm:$0xf] %vm2186, %v2157
      %2191 = vst.msk [vmem:[%s455 + $0x10] sm:$0xf] %vm2186, %v2158
      %2192 = vst.msk [vmem:[%s455 + $0x14] sm:$0xf] %vm2186, %v2159
      %2193 = vst.msk [vmem:[%s455 + $0x18] sm:$0xf] %vm2186, %v2160
      %2194 = vst.msk [vmem:[%s455 + $0x1c] sm:$0xf] %vm2186, %v2161
      %2195 = vst.msk [vmem:[%s455 + $0x20] sm:$0xf] %vm2186, %v2162
      %2196 = vst.msk [vmem:[%s455 + $0x24] sm:$0xf] %vm2186, %v2163
      %2197 = vst.msk [vmem:[%s455 + $0x28] sm:$0xf] %vm2186, %v2164
      %2198 = vst.msk [vmem:[%s455 + $0x2c] sm:$0xf] %vm2186, %v2165
      %2199 = vst.msk [vmem:[%s455 + $0x30] sm:$0xf] %vm2186, %v2166
      %2200 = vst.msk [vmem:[%s455 + $0x34] sm:$0xf] %vm2186, %v2167
      %2201 = vst.msk [vmem:[%s455 + $0x38] sm:$0xf] %vm2186, %v2168
      %2202 = vst.msk [vmem:[%s455 + $0x3c] sm:$0xf] %vm2186, %v2169
      %s2203 = smul.u32 %s23, 2
      %s2204 = sadd.s32 %s2203, %s24
      %s2205 = smul.u32 16, %s2204
      %p2206 = scmp.lt.s32.totalorder %s2205, 63
      %s2207 = scalar_select %p2206, %s2205, 63
      %s2208 = smul.addr %s2207, 4
      %s2209 = scalar_lea.vmem %s6, %s2208
      %s2210 = smul.u32 %s23, 2
      %s2211 = sadd.s32 %s2210, %s24
      %p2212 = scmp.lt.s32.totalorder %s2211, 3
      %s2213 = scalar_select %p2212, %s2211, 3
      %s2214 = smul.addr %s2213, 2
      %s2215 = scalar_lea.vmem %s7, %s2214
      // Predicated region
      $region45: #{conv_block_forward.4} parent=43 // pred_check
        %p2216 = pneg %p222
      $region46: #{conv_block_forward.4} parent=43 // pred_check_branch
        %2218 = sbr.rel (%p2216) target = $region48
      $region47: #{conv_block_forward.4} parent=43 // pred_region
        %s2219 = smul.u32 %s23, 2
        %s2220 = sadd.s32 %s2219, %s24
        %s2221 = smul.u32 16, %s2220
      $region48: #{conv_block_forward.4} parent=43 // pred_fallthru
        _
      // Predicated region
      $region49: #{conv_block_forward.4} parent=43 // pred_check
        %p2222 = pneg %p252
      $region50: #{conv_block_forward.4} parent=43 // pred_check_branch
        %2224 = sbr.rel (%p2222) target = $region52
      $region51: #{conv_block_forward.4} parent=43 // pred_region
        %s2225 = smul.u32 %s23, 2
        %s2226 = sadd.s32 %s2225, %s24
      $region52: #{conv_block_forward.4} parent=43 // pred_fallthru
        _
    $region44: #{conv_block_forward.4} parent=5 // pred_fallthru
      _
    %p2227 = scmp.le.s32.totalorder 2, %s14
    // Predicated region
    $region53: #{conv_block_forward.4} parent=5 // pred_check
      %p2228 = pneg %p2227
    $region54: #{conv_block_forward.4} parent=5 // pred_check_branch
      %2230 = sbr.rel (%p2228) target = $region56
    $region55: #{conv_block_forward.4} parent=5 // pred_region
      %s2231 = ssub.s32 %s14, 2
      // Predicated region
      $region57: #{conv_block_forward.4} parent=55 // pred_check
        %p2232 = pneg %p228
      $region58: #{conv_block_forward.4} parent=55 // pred_check_branch
        %2234 = sbr.rel (%p2232) target = $region60
      $region59: #{conv_block_forward.4} parent=55 // pred_region
        %s2235 = smul.u32 %s25, 2
        %s2236 = sadd.s32 %s2235, %s26
        %s2237 = smul.u32 16, %s2236
        %p2238 = scmp.lt.s32.totalorder %s2237, 63
        %s2239 = scalar_select %p2238, %s2237, 63
        %s2240 = smul.addr %s2239, 4
        %s2241 = scalar_lea.vmem %s6, %s2240
      $region60: #{conv_block_forward.4} parent=55 // pred_fallthru
        _
      // Predicated region
      $region61: #{conv_block_forward.4} parent=55 // pred_check
        %p2242 = pneg %p258
      $region62: #{conv_block_forward.4} parent=55 // pred_check_branch
        %2244 = sbr.rel (%p2242) target = $region64
      $region63: #{conv_block_forward.4} parent=55 // pred_region
        %s2245 = smul.u32 %s25, 2
        %s2246 = sadd.s32 %s2245, %s26
        %p2247 = scmp.lt.s32.totalorder %s2246, 3
        %s2248 = scalar_select %p2247, %s2246, 3
        %s2249 = smul.addr %s2248, 2
        %s2250 = scalar_lea.vmem %s7, %s2249
      $region64: #{conv_block_forward.4} parent=55 // pred_fallthru
        _
    $region56: #{conv_block_forward.4} parent=5 // pred_fallthru
      _
  $region6: #{conv_block_forward.4} parent=0 // loop_footer
    %s18 = sadd.s32 1, %s14
  $region7: #{conv_block_forward.4} parent=0 // loop_footer_branch
    %13 = sbr.rel target = $region3
  $region8: #{conv_block_forward.4} parent=0 // loop_exit
    _

// kernel: conv_block_forward.3
$region0: #{conv_block_forward.3}
  #allocation0 [shape = 'u32[]', space=smem, size = 0x4, offset = 0x4, fixed_abs, tag = 'smem constant byte address 0x4 - core index']
  #allocation1 [shape = 'u32[144,128]{1,0:T(1,128)}', space=vmem, size = 0x12000, scoped, tag = 'internal scratch']
  %s0 = inlined_call_operand.vmem [shape: bf16[512,4], index: 0, kind: input, shape index: {}, may-alias: {0,1,2}]
  %s1 = inlined_call_operand.vmem [shape: bf16[512,4], index: 1, kind: input, shape index: {}, may-alias: {0,1,2}]
  %s2 = inlined_call_operand.vmem [shape: bf16[512,4], index: 2, kind: input, shape index: {}, may-alias: {0,1,2}]
  %s3 = inlined_call_operand.vmem [shape: bf16[36,8], index: 3, kind: input, shape index: {}]
  %s4 = inlined_call_operand.vmem [shape: bf16[512,8], index: 4, kind: output, shape index: {0}]
  %s5 = inlined_call_operand.vmem [shape: f32[4,2,8], index: 5, kind: output, shape index: {1}]
  %6 = xla_tuple %s4, %s5
  %s7 = sld [smem:[#allocation0]]
  $region57: #{conv_block_forward.3} parent=0
    _
  %s9 = ssub.s32 1, %s7
  %s10 = scalar_select 0, %s9, %s7
  loop: start=0, step=1, limit=6
  $region2: #{conv_block_forward.3} parent=0 // loop_pre_header
    _
  $region3: #{conv_block_forward.3} parent=0 // loop_header
    %s12 = sphi 0, %s16
    %p13 = scmp.ge.s32.totalorder %s12, 6
    %s19 = sphi 0, %s31
    %s20 = sphi 0, %s27
    %s21 = sphi 0, %s19
    %s22 = sphi 0, %s20
    %s23 = sphi 0, %s21
    %s24 = sphi 0, %s22
    %s38 = sphi 0, %s40
    %s41 = sphi 0, %s38
    %s42 = sphi 0, %s41
    %s58 = sphi 0, %s42
    %s76 = sphi 0, %s78
    %s79 = sphi 0, %s76
    %s80 = sphi 0, %s79
    %s96 = sphi 0, %s80
    %s114 = sphi 0, %s116
    %s117 = sphi 0, %s114
    %s118 = sphi 0, %s117
    %s134 = sphi 0, %s118
    %s138 = sphi 0, %s138
    %s140 = sphi 0, %s138
    %s141 = sphi 0, %s140
    %s155 = sphi 0, %s141
    %s165 = sphi 0, %s167
    %s168 = sphi 0, %s165
    %s169 = sphi 0, %s168
    %s185 = sphi 0, %s169
    %s195 = sphi 0, %s197
    %s198 = sphi 0, %s195
    %s199 = sphi 0, %s198
    %s215 = sphi 0, %s199
  $region4: #{conv_block_forward.3} parent=0 // loop_header_branch
    %15 = sbr.rel (%p13) target = $region8
  $region5: #{conv_block_forward.3} parent=0 // loop_body
    %s17 = ssub.s32 %s12, 1
    %s18 = ssub.s32 %s12, 2
    %s25 = sadd.s32 1, %s20
    %p26 = scmp.ge.s32.totalorder %s25, 2
    %s27 = scalar_select %p26, 0, %s25
    %s28 = sadd.s32 1, %s19
    %s29 = scalar_select %p26, %s28, %s19
    %p30 = scmp.ge.s32.totalorder %s29, 2
    %s31 = scalar_select %p30, 0, %s29
    %s32 = smul.u32 %s19, 2
    %s33 = sadd.s32 %s32, %s20
    %s34 = smul.u32 %s31, 2
    %s35 = sadd.s32 %s34, %s27
    %s36 = ssub.s32 %s33, %s35
    %p37 = scmp.eq.s32.totalorder %s36, 0
    %s39 = sadd.s32 %s38, 1
    %s40 = scalar_select %p37, %s38, %s39
    %p43 = pneg %p37
    %p44 = scmp.eq.s32.totalorder %s12, 3
    %p45 = por %p43, %p44
    %p46 = scmp.ne.s32.totalorder %s38, %s41
    %p47 = scmp.eq.s32.totalorder %s12, 0
    %p48 = por %p46, %p47
    %p49 = scmp.ne.s32.totalorder %s38, %s41
    %p50 = scmp.eq.s32.totalorder %s17, 3
    %p51 = por %p49, %p50
    %p52 = scmp.ne.s32.totalorder %s41, %s42
    %p53 = scmp.eq.s32.totalorder %s17, 0
    %p54 = por %p52, %p53
    %p55 = scmp.ne.s32.totalorder %s41, %s42
    %p56 = scmp.eq.s32.totalorder %s18, 3
    %p57 = por %p55, %p56
    %p59 = scmp.ne.s32.totalorder %s42, %s58
    %p60 = scmp.eq.s32.totalorder %s18, 0
    %p61 = por %p59, %p60
    %s62 = smul.u32 %s19, 16
    %s63 = smul.u32 %s20, 8
    %s64 = sadd.s32 %s62, %s63
    %s65 = ssub.s32 %s64, 1
    %p66 = scmp.gt.s32.totalorder %s65, 0
    %s67 = scalar_select %p66, %s65, 0
    %s68 = smul.u32 %s31, 16
    %s69 = smul.u32 %s27, 8
    %s70 = sadd.s32 %s68, %s69
    %s71 = ssub.s32 %s70, 1
    %p72 = scmp.gt.s32.totalorder %s71, 0
    %s73 = scalar_select %p72, %s71, 0
    %s74 = ssub.s32 %s67, %s73
    %p75 = scmp.eq.s32.totalorder %s74, 0
    %s77 = sadd.s32 %s76, 1
    %s78 = scalar_select %p75, %s76, %s77
    %p81 = pneg %p75
    %p82 = scmp.eq.s32.totalorder %s12, 3
    %p83 = por %p81, %p82
    %p84 = scmp.ne.s32.totalorder %s76, %s79
    %p85 = scmp.eq.s32.totalorder %s12, 0
    %p86 = por %p84, %p85
    %p87 = scmp.ne.s32.totalorder %s76, %s79
    %p88 = scmp.eq.s32.totalorder %s17, 3
    %p89 = por %p87, %p88
    %p90 = scmp.ne.s32.totalorder %s79, %s80
    %p91 = scmp.eq.s32.totalorder %s17, 0
    %p92 = por %p90, %p91
    %p93 = scmp.ne.s32.totalorder %s79, %s80
    %p94 = scmp.eq.s32.totalorder %s18, 3
    %p95 = por %p93, %p94
    %p97 = scmp.ne.s32.totalorder %s80, %s96
    %p98 = scmp.eq.s32.totalorder %s18, 0
    %p99 = por %p97, %p98
    %s100 = smul.u32 %s19, 16
    %s101 = sadd.s32 %s20, 1
    %s102 = smul.u32 %s101, 8
    %s103 = sadd.s32 %s100, %s102
    %p104 = scmp.lt.s32.totalorder %s103, 31
    %s105 = scalar_select %p104, %s103, 31
    %s106 = smul.u32 %s31, 16
    %s107 = sadd.s32 %s27, 1
    %s108 = smul.u32 %s107, 8
    %s109 = sadd.s32 %s106, %s108
    %p110 = scmp.lt.s32.totalorder %s109, 31
    %s111 = scalar_select %p110, %s109, 31
    %s112 = ssub.s32 %s105, %s111
    %p113 = scmp.eq.s32.totalorder %s112, 0
    %s115 = sadd.s32 %s114, 1
    %s116 = scalar_select %p113, %s114, %s115
    %p119 = pneg %p113
    %p120 = scmp.eq.s32.totalorder %s12, 3
    %p121 = por %p119, %p120
    %p122 = scmp.ne.s32.totalorder %s114, %s117
    %p123 = scmp.eq.s32.totalorder %s12, 0
    %p124 = por %p122, %p123
    %p125 = scmp.ne.s32.totalorder %s114, %s117
    %p126 = scmp.eq.s32.totalorder %s17, 3
    %p127 = por %p125, %p126
    %p128 = scmp.ne.s32.totalorder %s117, %s118
    %p129 = scmp.eq.s32.totalorder %s17, 0
    %p130 = por %p128, %p129
    %p131 = scmp.ne.s32.totalorder %s117, %s118
    %p132 = scmp.eq.s32.totalorder %s18, 3
    %p133 = por %p131, %p132
    %p135 = scmp.ne.s32.totalorder %s118, %s134
    %p136 = scmp.eq.s32.totalorder %s18, 0
    %p137 = por %p135, %p136
    %s139 = sadd.s32 %s138, 1
    %p142 = scmp.eq.s32.totalorder %s12, 3
    %p143 = scmp.ne.s32.totalorder %s138, %s140
    %p144 = scmp.eq.s32.totalorder %s12, 0
    %p145 = por %p143, %p144
    %p146 = scmp.ne.s32.totalorder %s138, %s140
    %p147 = scmp.eq.s32.totalorder %s17, 3
    %p148 = por %p146, %p147
    %p149 = scmp.ne.s32.totalorder %s140, %s141
    %p150 = scmp.eq.s32.totalorder %s17, 0
    %p151 = por %p149, %p150
    %p152 = scmp.ne.s32.totalorder %s140, %s141
    %p153 = scmp.eq.s32.totalorder %s18, 3
    %p154 = por %p152, %p153
    %p156 = scmp.ne.s32.totalorder %s141, %s155
    %p157 = scmp.eq.s32.totalorder %s18, 0
    %p158 = por %p156, %p157
    %s159 = smul.u32 %s19, 2
    %s160 = sadd.s32 %s159, %s20
    %s161 = smul.u32 %s31, 2
    %s162 = sadd.s32 %s161, %s27
    %s163 = ssub.s32 %s160, %s162
    %p164 = scmp.eq.s32.totalorder %s163, 0
    %s166 = sadd.s32 %s165, 1
    %s167 = scalar_select %p164, %s165, %s166
    %p170 = pneg %p164
    %p171 = scmp.eq.s32.totalorder %s12, 3
    %p172 = por %p170, %p171
    %p173 = scmp.ne.s32.totalorder %s165, %s168
    %p174 = scmp.eq.s32.totalorder %s12, 0
    %p175 = por %p173, %p174
    %p176 = scmp.ne.s32.totalorder %s165, %s168
    %p177 = scmp.eq.s32.totalorder %s17, 3
    %p178 = por %p176, %p177
    %p179 = scmp.ne.s32.totalorder %s168, %s169
    %p180 = scmp.eq.s32.totalorder %s17, 0
    %p181 = por %p179, %p180
    %p182 = scmp.ne.s32.totalorder %s168, %s169
    %p183 = scmp.eq.s32.totalorder %s18, 3
    %p184 = por %p182, %p183
    %p186 = scmp.ne.s32.totalorder %s169, %s185
    %p187 = scmp.eq.s32.totalorder %s18, 0
    %p188 = por %p186, %p187
    %s189 = smul.u32 %s19, 2
    %s190 = sadd.s32 %s189, %s20
    %s191 = smul.u32 %s31, 2
    %s192 = sadd.s32 %s191, %s27
    %s193 = ssub.s32 %s190, %s192
    %p194 = scmp.eq.s32.totalorder %s193, 0
    %s196 = sadd.s32 %s195, 1
    %s197 = scalar_select %p194, %s195, %s196
    %p200 = pneg %p194
    %p201 = scmp.eq.s32.totalorder %s12, 3
    %p202 = por %p200, %p201
    %p203 = scmp.ne.s32.totalorder %s195, %s198
    %p204 = scmp.eq.s32.totalorder %s12, 0
    %p205 = por %p203, %p204
    %p206 = scmp.ne.s32.totalorder %s195, %s198
    %p207 = scmp.eq.s32.totalorder %s17, 3
    %p208 = por %p206, %p207
    %p209 = scmp.ne.s32.totalorder %s198, %s199
    %p210 = scmp.eq.s32.totalorder %s17, 0
    %p211 = por %p209, %p210
    %p212 = scmp.ne.s32.totalorder %s198, %s199
    %p213 = scmp.eq.s32.totalorder %s18, 3
    %p214 = por %p212, %p213
    %p216 = scmp.ne.s32.totalorder %s199, %s215
    %p217 = scmp.eq.s32.totalorder %s18, 0
    %p218 = por %p216, %p217
    %p219 = scmp.le.s32.totalorder 1, %s12
    %p220 = scmp.lt.s32.totalorder %s12, 5
    %p221 = pnand %p219, %p220
    %p222 = pneg %p221
    // Predicated region
    $region9: #{conv_block_forward.3} parent=5 // pred_check
      _
    $region10: #{conv_block_forward.3} parent=5 // pred_check_branch
      %224 = sbr.rel (%p221) target = $region12
    $region11: #{conv_block_forward.3} parent=5 // pred_region
      %s225 = ssub.s32 %s12, 1
      // Predicated region
      $region13: #{conv_block_forward.3} parent=11 // pred_check
        %p226 = pneg %p151
      $region14: #{conv_block_forward.3} parent=11 // pred_check_branch
        %228 = sbr.rel (%p226) target = $region16
      $region15: #{conv_block_forward.3} parent=11 // pred_region
        _
      $region16: #{conv_block_forward.3} parent=11 // pred_fallthru
        _
    $region12: #{conv_block_forward.3} parent=5 // pred_fallthru
      _
    %p229 = scmp.lt.s32.totalorder %s12, 4
    // Predicated region
    $region17: #{conv_block_forward.3} parent=5 // pred_check
      %p230 = pneg %p229
    $region18: #{conv_block_forward.3} parent=5 // pred_check_branch
      %232 = sbr.rel (%p230) target = $region20
    $region19: #{conv_block_forward.3} parent=5 // pred_region
      // Predicated region
      $region21: #{conv_block_forward.3} parent=19 // pred_check
        %p233 = pneg %p48
      $region22: #{conv_block_forward.3} parent=19 // pred_check_branch
        %235 = sbr.rel (%p233) target = $region24
      $region23: #{conv_block_forward.3} parent=19 // pred_region
        %s236 = smul.u32 %s19, 2
        %s237 = sadd.s32 %s236, %s20
        %s238 = smul.u32 16, %s237
        %p239 = scmp.lt.s32.totalorder %s238, 63
        %s240 = scalar_select %p239, %s238, 63
        %s241 = smul.addr %s240, 4
        %s242 = scalar_lea.vmem %s0, %s241
        %s243 = smul.u32 %s19, 2
        %s244 = sadd.s32 %s243, %s20
        %s245 = smul.u32 16, %s244
      $region24: #{conv_block_forward.3} parent=19 // pred_fallthru
        _
      // Predicated region
      $region25: #{conv_block_forward.3} parent=19 // pred_check
        %p246 = pneg %p86
      $region26: #{conv_block_forward.3} parent=19 // pred_check_branch
        %248 = sbr.rel (%p246) target = $region28
      $region27: #{conv_block_forward.3} parent=19 // pred_region
        %s249 = smul.u32 %s19, 16
        %s250 = smul.u32 %s20, 8
        %s251 = sadd.s32 %s249, %s250
        %s252 = ssub.s32 %s251, 1
        %p253 = scmp.gt.s32.totalorder %s252, 0
        %s254 = scalar_select %p253, %s252, 0
        %s255 = smul.u32 2, %s254
        %p256 = scmp.lt.s32.totalorder %s255, 63
        %s257 = scalar_select %p256, %s255, 63
        %s258 = smul.addr %s257, 4
        %s259 = scalar_lea.vmem %s1, %s258
        %s260 = smul.u32 %s19, 16
        %s261 = smul.u32 %s20, 8
        %s262 = sadd.s32 %s260, %s261
        %s263 = ssub.s32 %s262, 1
        %p264 = scmp.gt.s32.totalorder %s263, 0
        %s265 = scalar_select %p264, %s263, 0
        %s266 = smul.u32 2, %s265
      $region28: #{conv_block_forward.3} parent=19 // pred_fallthru
        _
      // Predicated region
      $region29: #{conv_block_forward.3} parent=19 // pred_check
        %p267 = pneg %p124
      $region30: #{conv_block_forward.3} parent=19 // pred_check_branch
        %269 = sbr.rel (%p267) target = $region32
      $region31: #{conv_block_forward.3} parent=19 // pred_region
        %s270 = smul.u32 %s19, 16
        %s271 = sadd.s32 %s20, 1
        %s272 = smul.u32 %s271, 8
        %s273 = sadd.s32 %s270, %s272
        %p274 = scmp.lt.s32.totalorder %s273, 31
        %s275 = scalar_select %p274, %s273, 31
        %s276 = smul.u32 2, %s275
        %p277 = scmp.lt.s32.totalorder %s276, 63
        %s278 = scalar_select %p277, %s276, 63
        %s279 = smul.addr %s278, 4
        %s280 = scalar_lea.vmem %s2, %s279
        %s281 = smul.u32 %s19, 16
        %s282 = sadd.s32 %s20, 1
        %s283 = smul.u32 %s282, 8
        %s284 = sadd.s32 %s281, %s283
        %p285 = scmp.lt.s32.totalorder %s284, 31
        %s286 = scalar_select %p285, %s284, 31
        %s287 = smul.u32 2, %s286
      $region32: #{conv_block_forward.3} parent=19 // pred_fallthru
        _
    $region20: #{conv_block_forward.3} parent=5 // pred_fallthru
      _
    %p288 = scmp.le.s32.totalorder 1, %s12
    %p289 = scmp.lt.s32.totalorder %s12, 5
    %p290 = pnand %p288, %p289
    %p291 = pneg %p290
    // Predicated region
    $region33: #{conv_block_forward.3} parent=5 // pred_check
      _
    $region34: #{conv_block_forward.3} parent=5 // pred_check_branch
      %293 = sbr.rel (%p290) target = $region36
    $region35: #{conv_block_forward.3} parent=5 // pred_region
      %s294 = ssub.s32 %s12, 1
      %s295 = smul.u32 %s21, 2
      %s296 = sadd.s32 %s295, %s22
      %s297 = smul.u32 16, %s296
      %p298 = scmp.lt.s32.totalorder %s297, 63
      %s299 = scalar_select %p298, %s297, 63
      %s300 = smul.addr %s299, 4
      %s301 = scalar_lea.vmem %s0, %s300
      %p302 = pneg %p54
      %p303 = pneg %p51
      %s304 = smul.u32 %s21, 16
      %s305 = smul.u32 %s22, 8
      %s306 = sadd.s32 %s304, %s305
      %s307 = ssub.s32 %s306, 1
      %p308 = scmp.gt.s32.totalorder %s307, 0
      %s309 = scalar_select %p308, %s307, 0
      %s310 = smul.u32 2, %s309
      %p311 = scmp.lt.s32.totalorder %s310, 63
      %s312 = scalar_select %p311, %s310, 63
      %s313 = smul.addr %s312, 4
      %s314 = scalar_lea.vmem %s1, %s313
      %p315 = pneg %p92
      %p316 = pneg %p89
      %s317 = smul.u32 %s21, 16
      %s318 = sadd.s32 %s22, 1
      %s319 = smul.u32 %s318, 8
      %s320 = sadd.s32 %s317, %s319
      %p321 = scmp.lt.s32.totalorder %s320, 31
      %s322 = scalar_select %p321, %s320, 31
      %s323 = smul.u32 2, %s322
      %p324 = scmp.lt.s32.totalorder %s323, 63
      %s325 = scalar_select %p324, %s323, 63
      %s326 = smul.addr %s325, 4
      %s327 = scalar_lea.vmem %s2, %s326
      %p328 = pneg %p130
      %p329 = pneg %p127
      %p330 = pneg %p151
      %p331 = pneg %p148
      %p332 = pneg %p181
      %p333 = pneg %p178
      %s334 = smul.u32 %s21, 2
      %s335 = sadd.s32 %s334, %s22
      %s336 = smul.u32 16, %s335
      %p337 = scmp.lt.s32.totalorder %s336, 63
      %s338 = scalar_select %p337, %s336, 63
      %s339 = smul.addr %s338, 4
      %s340 = scalar_lea.vmem %s4, %s339
      %p341 = pneg %p211
      %p342 = pneg %p208
      %s343 = smul.u32 %s21, 2
      %s344 = sadd.s32 %s343, %s22
      %p345 = scmp.lt.s32.totalorder %s344, 3
      %s346 = scalar_select %p345, %s344, 3
      %s347 = smul.addr %s346, 2
      %s348 = scalar_lea.vmem %s5, %s347
      %s349 = smul.u32 %s21, 2
      %s350 = sadd.s32 %s349, %s22
      %s351 = smul.u32 16, %s350
      %p352 = scmp.lt.s32.totalorder %s351, 63
      %s353 = scalar_select %p352, %s351, 63
      %s354 = smul.addr %s353, 4
      %s355 = scalar_lea.vmem %s0, %s354
      %s356 = smul.u32 %s21, 2
      %s357 = sadd.s32 %s356, %s22
      %s358 = smul.u32 16, %s357
      %s359 = smul.u32 %s21, 16
      %s360 = smul.u32 %s22, 8
      %s361 = sadd.s32 %s359, %s360
      %s362 = ssub.s32 %s361, 1
      %p363 = scmp.gt.s32.totalorder %s362, 0
      %s364 = scalar_select %p363, %s362, 0
      %s365 = smul.u32 2, %s364
      %p366 = scmp.lt.s32.totalorder %s365, 63
      %s367 = scalar_select %p366, %s365, 63
      %s368 = smul.addr %s367, 4
      %s369 = scalar_lea.vmem %s1, %s368
      %s370 = smul.u32 %s21, 16
      %s371 = smul.u32 %s22, 8
      %s372 = sadd.s32 %s370, %s371
      %s373 = ssub.s32 %s372, 1
      %p374 = scmp.gt.s32.totalorder %s373, 0
      %s375 = scalar_select %p374, %s373, 0
      %s376 = smul.u32 2, %s375
      %s377 = smul.u32 %s21, 16
      %s378 = sadd.s32 %s22, 1
      %s379 = smul.u32 %s378, 8
      %s380 = sadd.s32 %s377, %s379
      %p381 = scmp.lt.s32.totalorder %s380, 31
      %s382 = scalar_select %p381, %s380, 31
      %s383 = smul.u32 2, %s382
      %p384 = scmp.lt.s32.totalorder %s383, 63
      %s385 = scalar_select %p384, %s383, 63
      %s386 = smul.addr %s385, 4
      %s387 = scalar_lea.vmem %s2, %s386
      %s388 = smul.u32 %s21, 16
      %s389 = sadd.s32 %s22, 1
      %s390 = smul.u32 %s389, 8
      %s391 = sadd.s32 %s388, %s390
      %p392 = scmp.lt.s32.totalorder %s391, 31
      %s393 = scalar_select %p392, %s391, 31
      %s394 = smul.u32 2, %s393
      %s395 = smul.u32 %s21, 2
      %s396 = sadd.s32 %s395, %s22
      %s397 = smul.u32 16, %s396
      %p398 = scmp.lt.s32.totalorder %s397, 63
      %s399 = scalar_select %p398, %s397, 63
      %s400 = smul.addr %s399, 4
      %s401 = scalar_lea.vmem %s4, %s400
      %s402 = smul.u32 %s21, 2
      %s403 = sadd.s32 %s402, %s22
      %s404 = smul.u32 16, %s403
      %s405 = smul.u32 %s21, 2
      %s406 = sadd.s32 %s405, %s22
      %p407 = scmp.lt.s32.totalorder %s406, 3
      %s408 = scalar_select %p407, %s406, 3
      %s409 = smul.addr %s408, 2
      %s410 = scalar_lea.vmem %s5, %s409
      %s411 = smul.u32 %s21, 2
      %s412 = sadd.s32 %s411, %s22
      %v416 = vld [vmem:[%s369] sm:$0xf]
      %v417 = vld [vmem:[%s369 + $0x4] sm:$0xf]
      %v418 = vld [vmem:[%s355] sm:$0xf]
      %v419 = vld [vmem:[%s355 + $0x4] sm:$0xf]
      %v420 = vld [vmem:[%s355 + $0x8] sm:$0xf]
      %v421 = vld [vmem:[%s355 + $0xc] sm:$0xf]
      %v422 = vld [vmem:[%s355 + $0x10] sm:$0xf]
      %v423 = vld [vmem:[%s355 + $0x14] sm:$0xf]
      %v424 = vld [vmem:[%s355 + $0x18] sm:$0xf]
      %v425 = vld [vmem:[%s355 + $0x1c] sm:$0xf]
      %v426 = vld [vmem:[%s355 + $0x20] sm:$0xf]
      %v427 = vld [vmem:[%s355 + $0x24] sm:$0xf]
      %v428 = vld [vmem:[%s355 + $0x28] sm:$0xf]
      %v429 = vld [vmem:[%s355 + $0x2c] sm:$0xf]
      %v430 = vld [vmem:[%s355 + $0x30] sm:$0xf]
      %v431 = vld [vmem:[%s355 + $0x34] sm:$0xf]
      %v432 = vld [vmem:[%s355 + $0x38] sm:$0xf]
      %v433 = vld [vmem:[%s355 + $0x3c] sm:$0xf]
      %v434 = vld [vmem:[%s387] sm:$0xf]
      %v435 = vld [vmem:[%s387 + $0x4] sm:$0xf]
      %v438 = vunpack.c.l.b16 %v416
      %v439 = vunpack.c.l.b16 %v417
      %v440 = vpack.c.b16 %v439, %v438
      %v458 = vunpack.c.l.b16 %v418
      %v459 = vunpack.c.l.b16 %v419
      %v460 = vunpack.c.l.b16 %v420
      %v461 = vunpack.c.l.b16 %v421
      %v462 = vunpack.c.l.b16 %v422
      %v463 = vunpack.c.l.b16 %v423
      %v464 = vunpack.c.l.b16 %v424
      %v465 = vunpack.c.l.b16 %v425
      %v466 = vunpack.c.l.b16 %v426
      %v467 = vunpack.c.l.b16 %v427
      %v468 = vunpack.c.l.b16 %v428
      %v469 = vunpack.c.l.b16 %v429
      %v470 = vunpack.c.l.b16 %v430
      %v471 = vunpack.c.l.b16 %v431
      %v472 = vunpack.c.l.b16 %v432
      %v473 = vunpack.c.l.b16 %v433
      %v474 = vpack.c.b16 %v459, %v458
      %v475 = vpack.c.b16 %v461, %v460
      %v476 = vpack.c.b16 %v463, %v462
      %v477 = vpack.c.b16 %v465, %v464
      %v478 = vpack.c.b16 %v467, %v466
      %v479 = vpack.c.b16 %v469, %v468
      %v480 = vpack.c.b16 %v471, %v470
      %v481 = vpack.c.b16 %v473, %v472
      %v492 = vunpack.c.l.b16 %v434
      %v493 = vunpack.c.l.b16 %v435
      %v494 = vpack.c.b16 %v493, %v492
      %v496 = vunpack.c.l.bf16 %v440
      %v497 = vunpack.c.h.bf16 %v440
      %v498 = vunpack.c.l.bf16 %v474
      %v499 = vunpack.c.h.bf16 %v474
      %v500 = vunpack.c.l.bf16 %v475
      %v501 = vunpack.c.h.bf16 %v475
      %v502 = vunpack.c.l.bf16 %v476
      %v503 = vunpack.c.h.bf16 %v476
      %v504 = vunpack.c.l.bf16 %v477
      %v505 = vunpack.c.h.bf16 %v477
      %v506 = vunpack.c.l.bf16 %v478
      %v507 = vunpack.c.h.bf16 %v478
      %v508 = vunpack.c.l.bf16 %v479
      %v509 = vunpack.c.h.bf16 %v479
      %v510 = vunpack.c.l.bf16 %v480
      %v511 = vunpack.c.h.bf16 %v480
      %v512 = vunpack.c.l.bf16 %v481
      %v513 = vunpack.c.h.bf16 %v481
      %v514 = vunpack.c.l.bf16 %v494
      %v515 = vunpack.c.h.bf16 %v494
      %v516 = vlaneseq
      %v517 = vshrl.u32 %v516, 7
      %v518 = vadd.s32 %v517, 8
      %v519 = vadd.s32 %v517, 16
      %v520 = vadd.s32 %v517, 24
      %v521 = vadd.s32 %v517, 32
      %v522 = vadd.s32 %v517, 40
      %v523 = vadd.s32 %v517, 48
      %v524 = vadd.s32 %v517, 56
      %v525 = vadd.s32 %v517, 64
      %v526 = vadd.s32 %v517, 72
      %v527 = vadd.s32 %v517, 80
      %v528 = vadd.s32 %v517, 88
      %v529 = vadd.s32 %v517, 96
      %v530 = vadd.s32 %v517, 104
      %v531 = vadd.s32 %v517, 112
      %v532 = vadd.s32 %v517, 120
      %v533 = vadd.s32 %v517, 128
      %v534 = vadd.s32 %v517, 136
      %v535 = vadd.s32 %v517, 144
      %v536 = vadd.s32 %v517, 152
      %vm537 = vcmp.ge.s32.totalorder %v517, 16
      %vm538 = vcmp.ge.s32.totalorder %v518, 16
      %vm539 = vcmp.ge.s32.totalorder %v519, 16
      %vm540 = vcmp.ge.s32.totalorder %v520, 16
      %vm541 = vcmp.ge.s32.totalorder %v521, 16
      %vm542 = vcmp.ge.s32.totalorder %v522, 16
      %vm543 = vcmp.ge.s32.totalorder %v523, 16
      %vm544 = vcmp.ge.s32.totalorder %v524, 16
      %vm545 = vcmp.ge.s32.totalorder %v525, 16
      %vm546 = vcmp.ge.s32.totalorder %v526, 16
      %vm547 = vcmp.ge.s32.totalorder %v527, 16
      %vm548 = vcmp.ge.s32.totalorder %v528, 16
      %vm549 = vcmp.ge.s32.totalorder %v529, 16
      %vm550 = vcmp.ge.s32.totalorder %v530, 16
      %vm551 = vcmp.ge.s32.totalorder %v531, 16
      %vm552 = vcmp.ge.s32.totalorder %v532, 16
      %vm553 = vcmp.ge.s32.totalorder %v533, 16
      %vm554 = vcmp.ge.s32.totalorder %v534, 16
      %vm555 = vcmp.ge.s32.totalorder %v535, 16
      %vm556 = vcmp.ge.s32.totalorder %v536, 16
      %p557 = scmp.gt.s32.totalorder %s22, 0
      %s558 = scalar_select %p557, 1, 0
      %v559 = vstv %s558
      %vm560 = vcmp.eq.s32.totalorder %v559, 1
      %vm561 = vmor %vm537, %vm560
      %vm562 = vmor %vm538, %vm560
      %vm563 = vmor %vm539, %vm560
      %vm564 = vmor %vm540, %vm560
      %vm565 = vmor %vm541, %vm560
      %vm566 = vmor %vm542, %vm560
      %vm567 = vmor %vm543, %vm560
      %vm568 = vmor %vm544, %vm560
      %vm569 = vmor %vm545, %vm560
      %vm570 = vmor %vm546, %vm560
      %vm571 = vmor %vm547, %vm560
      %vm572 = vmor %vm548, %vm560
      %vm573 = vmor %vm549, %vm560
      %vm574 = vmor %vm550, %vm560
      %vm575 = vmor %vm551, %vm560
      %vm576 = vmor %vm552, %vm560
      %vm577 = vmor %vm553, %vm560
      %vm578 = vmor %vm554, %vm560
      %vm579 = vmor %vm555, %vm560
      %vm580 = vmor %vm556, %vm560
      %vm581 = vcmp.lt.s32.totalorder %v517, 144
      %vm582 = vcmp.lt.s32.totalorder %v518, 144
      %vm583 = vcmp.lt.s32.totalorder %v519, 144
      %vm584 = vcmp.lt.s32.totalorder %v520, 144
      %vm585 = vcmp.lt.s32.totalorder %v521, 144
      %vm586 = vcmp.lt.s32.totalorder %v522, 144
      %vm587 = vcmp.lt.s32.totalorder %v523, 144
      %vm588 = vcmp.lt.s32.totalorder %v524, 144
      %vm589 = vcmp.lt.s32.totalorder %v525, 144
      %vm590 = vcmp.lt.s32.totalorder %v526, 144
      %vm591 = vcmp.lt.s32.totalorder %v527, 144
      %vm592 = vcmp.lt.s32.totalorder %v528, 144
      %vm593 = vcmp.lt.s32.totalorder %v529, 144
      %vm594 = vcmp.lt.s32.totalorder %v530, 144
      %vm595 = vcmp.lt.s32.totalorder %v531, 144
      %vm596 = vcmp.lt.s32.totalorder %v532, 144
      %vm597 = vcmp.lt.s32.totalorder %v533, 144
      %vm598 = vcmp.lt.s32.totalorder %v534, 144
      %vm599 = vcmp.lt.s32.totalorder %v535, 144
      %vm600 = vcmp.lt.s32.totalorder %v536, 144
      %s601 = sadd.s32 %s22, 1
      %p602 = scmp.lt.s32.totalorder %s601, 2
      %s603 = scalar_select %p602, 1, 0
      %v604 = vstv %s603
      %vm605 = vcmp.eq.s32.totalorder %v604, 1
      %vm606 = vmor %vm581, %vm605
      %vm607 = vmor %vm582, %vm605
      %vm608 = vmor %vm583, %vm605
      %vm609 = vmor %vm584, %vm605
      %vm610 = vmor %vm585, %vm605
      %vm611 = vmor %vm586, %vm605
      %vm612 = vmor %vm587, %vm605
      %vm613 = vmor %vm588, %vm605
      %vm614 = vmor %vm589, %vm605
      %vm615 = vmor %vm590, %vm605
      %vm616 = vmor %vm591, %vm605
      %vm617 = vmor %vm592, %vm605
      %vm618 = vmor %vm593, %vm605
      %vm619 = vmor %vm594, %vm605
      %vm620 = vmor %vm595, %vm605
      %vm621 = vmor %vm596, %vm605
      %vm622 = vmor %vm597, %vm605
      %vm623 = vmor %vm598, %vm605
      %vm624 = vmor %vm599, %vm605
      %vm625 = vmor %vm600, %vm605
      %vm626 = vmand %vm561, %vm606
      %vm627 = vmand %vm562, %vm607
      %vm628 = vmand %vm563, %vm608
      %vm629 = vmand %vm564, %vm609
      %vm630 = vmand %vm565, %vm610
      %vm631 = vmand %vm566, %vm611
      %vm632 = vmand %vm567, %vm612
      %vm633 = vmand %vm568, %vm613
      %vm634 = vmand %vm569, %vm614
      %vm635 = vmand %vm570, %vm615
      %vm636 = vmand %vm571, %vm616
      %vm637 = vmand %vm572, %vm617
      %vm638 = vmand %vm573, %vm618
      %vm639 = vmand %vm574, %vm619
      %vm640 = vmand %vm575, %vm620
      %vm641 = vmand %vm576, %vm621
      %vm642 = vmand %vm577, %vm622
      %vm643 = vmand %vm578, %vm623
      %vm644 = vmand %vm579, %vm624
      %vm645 = vmand %vm580, %vm625
      %v646 = vsel %vm626, 1, 0
      %v647 = vsel %vm627, 1, 0
      %v648 = vsel %vm628, 1, 0
      %v649 = vsel %vm629, 1, 0
      %v650 = vsel %vm630, 1, 0
      %v651 = vsel %vm631, 1, 0
      %v652 = vsel %vm632, 1, 0
      %v653 = vsel %vm633, 1, 0
      %v654 = vsel %vm634, 1, 0
      %v655 = vsel %vm635, 1, 0
      %v656 = vsel %vm636, 1, 0
      %v657 = vsel %vm637, 1, 0
      %v658 = vsel %vm638, 1, 0
      %v659 = vsel %vm639, 1, 0
      %v660 = vsel %vm640, 1, 0
      %v661 = vsel %vm641, 1, 0
      %v662 = vsel %vm642, 1, 0
      %v663 = vsel %vm643, 1, 0
      %v664 = vsel %vm644, 1, 0
      %v665 = vsel %vm645, 1, 0
      %vm666 = vcmp.eq.s32.totalorder %v646, 1
      %vm667 = vcmp.eq.s32.totalorder %v647, 1
      %vm668 = vcmp.eq.s32.totalorder %v648, 1
      %vm669 = vcmp.eq.s32.totalorder %v649, 1
      %vm670 = vcmp.eq.s32.totalorder %v650, 1
      %vm671 = vcmp.eq.s32.totalorder %v651, 1
      %vm672 = vcmp.eq.s32.totalorder %v652, 1
      %vm673 = vcmp.eq.s32.totalorder %v653, 1
      %vm674 = vcmp.eq.s32.totalorder %v654, 1
      %vm675 = vcmp.eq.s32.totalorder %v655, 1
      %vm676 = vcmp.eq.s32.totalorder %v656, 1
      %vm677 = vcmp.eq.s32.totalorder %v657, 1
      %vm678 = vcmp.eq.s32.totalorder %v658, 1
      %vm679 = vcmp.eq.s32.totalorder %v659, 1
      %vm680 = vcmp.eq.s32.totalorder %v660, 1
      %vm681 = vcmp.eq.s32.totalorder %v661, 1
      %vm682 = vcmp.eq.s32.totalorder %v662, 1
      %vm683 = vcmp.eq.s32.totalorder %v663, 1
      %vm684 = vcmp.eq.s32.totalorder %v664, 1
      %vm685 = vcmp.eq.s32.totalorder %v665, 1
      %v686 = vsel %vm666, %v496, 0.0
      %v687 = vsel %vm667, %v497, 0.0
      %v688 = vsel %vm668, %v498, 0.0
      %v689 = vsel %vm669, %v499, 0.0
      %v690 = vsel %vm670, %v500, 0.0
      %v691 = vsel %vm671, %v501, 0.0
      %v692 = vsel %vm672, %v502, 0.0
      %v693 = vsel %vm673, %v503, 0.0
      %v694 = vsel %vm674, %v504, 0.0
      %v695 = vsel %vm675, %v505, 0.0
      %v696 = vsel %vm676, %v506, 0.0
      %v697 = vsel %vm677, %v507, 0.0
      %v698 = vsel %vm678, %v508, 0.0
      %v699 = vsel %vm679, %v509, 0.0
      %v700 = vsel %vm680, %v510, 0.0
      %v701 = vsel %vm681, %v511, 0.0
      %v702 = vsel %vm682, %v512, 0.0
      %v703 = vsel %vm683, %v513, 0.0
      %v704 = vsel %vm684, %v514, 0.0
      %v705 = vsel %vm685, %v515, 0.0
      %v706 = vpack.c.bf16 %v687, %v686
      %v707 = vpack.c.bf16 %v689, %v688
      %v708 = vpack.c.bf16 %v691, %v690
      %v709 = vpack.c.bf16 %v693, %v692
      %v710 = vpack.c.bf16 %v695, %v694
      %v711 = vpack.c.bf16 %v697, %v696
      %v712 = vpack.c.bf16 %v699, %v698
      %v713 = vpack.c.bf16 %v701, %v700
      %v714 = vpack.c.bf16 %v703, %v702
      %v715 = vpack.c.bf16 %v705, %v704
      %vm716 = vsmask.f32 256
      %v718 = vshrl.u32 %v706, 16
      %v720 = vrot.slane %v718, 7
      %v721 = vshll.u32 %v706, 16
      %v723 = vor.u32 %v720, %v721
      %v725 = vshrl.u32 %v707, 16
      %v727 = vrot.slane %v725, 7
      %v728 = vshll.u32 %v707, 16
      %v730 = vor.u32 %v727, %v728
      %v731 = vsel %vm716, %v720, %v730
      %v733 = vshrl.u32 %v708, 16
      %v735 = vrot.slane %v733, 7
      %v736 = vshll.u32 %v708, 16
      %v738 = vor.u32 %v735, %v736
      %v739 = vsel %vm716, %v727, %v738
      %v741 = vshrl.u32 %v709, 16
      %v743 = vrot.slane %v741, 7
      %v744 = vshll.u32 %v709, 16
      %v746 = vor.u32 %v743, %v744
      %v747 = vsel %vm716, %v735, %v746
      %v749 = vshrl.u32 %v710, 16
      %v751 = vrot.slane %v749, 7
      %v752 = vshll.u32 %v710, 16
      %v754 = vor.u32 %v751, %v752
      %v755 = vsel %vm716, %v743, %v754
      %v757 = vshrl.u32 %v711, 16
      %v759 = vrot.slane %v757, 7
      %v760 = vshll.u32 %v711, 16
      %v762 = vor.u32 %v759, %v760
      %v763 = vsel %vm716, %v751, %v762
      %v765 = vshrl.u32 %v712, 16
      %v767 = vrot.slane %v765, 7
      %v768 = vshll.u32 %v712, 16
      %v770 = vor.u32 %v767, %v768
      %v771 = vsel %vm716, %v759, %v770
      %v773 = vshrl.u32 %v713, 16
      %v775 = vrot.slane %v773, 7
      %v776 = vshll.u32 %v713, 16
      %v778 = vor.u32 %v775, %v776
      %v779 = vsel %vm716, %v767, %v778
      %v781 = vshrl.u32 %v714, 16
      %v783 = vrot.slane %v781, 7
      %v784 = vshll.u32 %v714, 16
      %v786 = vor.u32 %v783, %v784
      %v787 = vsel %vm716, %v775, %v786
      %v789 = vshrl.u32 %v715, 16
      %v791 = vrot.slane %v789, 7
      %v792 = vshll.u32 %v715, 16
      %v794 = vor.u32 %v791, %v792
      %v795 = vsel %vm716, %v783, %v794
      %vm807 = vcmask 1040384
      %vm808 = vmand %vm807, %vm716
      %v809 = vsel %vm808, 0, %v723
      %v810 = vsel %vm808, %v791, 0
      %vm811 = vcmp.lt.s32.totalorder %v517, 0
      %v812 = vsub.s32 0, %v517
      %v813 = vsel %vm811, %v812, %v517
      %v814 = vshrl.u32 %v813, 4
      %v815 = vand.u32 %v813, 15
      %v816 = vsub.s32 0, %v815
      %v817 = vsel %vm811, %v816, %v815
      %vm818 = vcmp.lt.s32.totalorder %v518, 0
      %v819 = vsub.s32 0, %v518
      %v820 = vsel %vm818, %v819, %v518
      %v821 = vshrl.u32 %v820, 4
      %v822 = vand.u32 %v820, 15
      %v823 = vsub.s32 0, %v822
      %v824 = vsel %vm818, %v823, %v822
      %vm825 = vcmp.lt.s32.totalorder %v519, 0
      %v826 = vsub.s32 0, %v519
      %v827 = vsel %vm825, %v826, %v519
      %v828 = vshrl.u32 %v827, 4
      %v829 = vand.u32 %v827, 15
      %v830 = vsub.s32 0, %v829
      %v831 = vsel %vm825, %v830, %v829
      %vm832 = vcmp.lt.s32.totalorder %v520, 0
      %v833 = vsub.s32 0, %v520
      %v834 = vsel %vm832, %v833, %v520
      %v835 = vshrl.u32 %v834, 4
      %v836 = vand.u32 %v834, 15
      %v837 = vsub.s32 0, %v836
      %v838 = vsel %vm832, %v837, %v836
      %vm839 = vcmp.lt.s32.totalorder %v521, 0
      %v840 = vsub.s32 0, %v521
      %v841 = vsel %vm839, %v840, %v521
      %v842 = vshrl.u32 %v841, 4
      %v843 = vand.u32 %v841, 15
      %v844 = vsub.s32 0, %v843
      %v845 = vsel %vm839, %v844, %v843
      %vm846 = vcmp.lt.s32.totalorder %v522, 0
      %v847 = vsub.s32 0, %v522
      %v848 = vsel %vm846, %v847, %v522
      %v849 = vshrl.u32 %v848, 4
      %v850 = vand.u32 %v848, 15
      %v851 = vsub.s32 0, %v850
      %v852 = vsel %vm846, %v851, %v850
      %vm853 = vcmp.lt.s32.totalorder %v523, 0
      %v854 = vsub.s32 0, %v523
      %v855 = vsel %vm853, %v854, %v523
      %v856 = vshrl.u32 %v855, 4
      %v857 = vand.u32 %v855, 15
      %v858 = vsub.s32 0, %v857
      %v859 = vsel %vm853, %v858, %v857
      %vm860 = vcmp.lt.s32.totalorder %v524, 0
      %v861 = vsub.s32 0, %v524
      %v862 = vsel %vm860, %v861, %v524
      %v863 = vshrl.u32 %v862, 4
      %v864 = vand.u32 %v862, 15
      %v865 = vsub.s32 0, %v864
      %v866 = vsel %vm860, %v865, %v864
      %vm867 = vcmp.lt.s32.totalorder %v525, 0
      %v868 = vsub.s32 0, %v525
      %v869 = vsel %vm867, %v868, %v525
      %v870 = vshrl.u32 %v869, 4
      %v871 = vand.u32 %v869, 15
      %v872 = vsub.s32 0, %v871
      %v873 = vsel %vm867, %v872, %v871
      %vm874 = vcmp.lt.s32.totalorder %v526, 0
      %v875 = vsub.s32 0, %v526
      %v876 = vsel %vm874, %v875, %v526
      %v877 = vshrl.u32 %v876, 4
      %v878 = vand.u32 %v876, 15
      %v879 = vsub.s32 0, %v878
      %v880 = vsel %vm874, %v879, %v878
      %vm881 = vcmp.lt.s32.totalorder %v527, 0
      %v882 = vsub.s32 0, %v527
      %v883 = vsel %vm881, %v882, %v527
      %v884 = vshrl.u32 %v883, 4
      %v885 = vand.u32 %v883, 15
      %v886 = vsub.s32 0, %v885
      %v887 = vsel %vm881, %v886, %v885
      %vm888 = vcmp.lt.s32.totalorder %v528, 0
      %v889 = vsub.s32 0, %v528
      %v890 = vsel %vm888, %v889, %v528
      %v891 = vshrl.u32 %v890, 4
      %v892 = vand.u32 %v890, 15
      %v893 = vsub.s32 0, %v892
      %v894 = vsel %vm888, %v893, %v892
      %vm895 = vcmp.lt.s32.totalorder %v529, 0
      %v896 = vsub.s32 0, %v529
      %v897 = vsel %vm895, %v896, %v529
      %v898 = vshrl.u32 %v897, 4
      %v899 = vand.u32 %v897, 15
      %v900 = vsub.s32 0, %v899
      %v901 = vsel %vm895, %v900, %v899
      %vm902 = vcmp.lt.s32.totalorder %v530, 0
      %v903 = vsub.s32 0, %v530
      %v904 = vsel %vm902, %v903, %v530
      %v905 = vshrl.u32 %v904, 4
      %v906 = vand.u32 %v904, 15
      %v907 = vsub.s32 0, %v906
      %v908 = vsel %vm902, %v907, %v906
      %vm909 = vcmp.lt.s32.totalorder %v531, 0
      %v910 = vsub.s32 0, %v531
      %v911 = vsel %vm909, %v910, %v531
      %v912 = vshrl.u32 %v911, 4
      %v913 = vand.u32 %v911, 15
      %v914 = vsub.s32 0, %v913
      %v915 = vsel %vm909, %v914, %v913
      %vm916 = vcmp.lt.s32.totalorder %v532, 0
      %v917 = vsub.s32 0, %v532
      %v918 = vsel %vm916, %v917, %v532
      %v919 = vshrl.u32 %v918, 4
      %v920 = vand.u32 %v918, 15
      %v921 = vsub.s32 0, %v920
      %v922 = vsel %vm916, %v921, %v920
      %vm923 = vcmp.ne.s32.totalorder %v817, 0
      %vm924 = vcmp.ne.s32.totalorder %v824, 0
      %vm925 = vcmp.ne.s32.totalorder %v831, 0
      %vm926 = vcmp.ne.s32.totalorder %v838, 0
      %vm927 = vcmp.ne.s32.totalorder %v845, 0
      %vm928 = vcmp.ne.s32.totalorder %v852, 0
      %vm929 = vcmp.ne.s32.totalorder %v859, 0
      %vm930 = vcmp.ne.s32.totalorder %v866, 0
      %vm931 = vcmp.ne.s32.totalorder %v873, 0
      %vm932 = vcmp.ne.s32.totalorder %v880, 0
      %vm933 = vcmp.ne.s32.totalorder %v887, 0
      %vm934 = vcmp.ne.s32.totalorder %v894, 0
      %vm935 = vcmp.ne.s32.totalorder %v901, 0
      %vm936 = vcmp.ne.s32.totalorder %v908, 0
      %vm937 = vcmp.ne.s32.totalorder %v915, 0
      %vm938 = vcmp.ne.s32.totalorder %v922, 0
      %vm939 = vcmp.lt.s32.totalorder %v817, 0
      %vm940 = vcmp.lt.s32.totalorder %v824, 0
      %vm941 = vcmp.lt.s32.totalorder %v831, 0
      %vm942 = vcmp.lt.s32.totalorder %v838, 0
      %vm943 = vcmp.lt.s32.totalorder %v845, 0
      %vm944 = vcmp.lt.s32.totalorder %v852, 0
      %vm945 = vcmp.lt.s32.totalorder %v859, 0
      %vm946 = vcmp.lt.s32.totalorder %v866, 0
      %vm947 = vcmp.lt.s32.totalorder %v873, 0
      %vm948 = vcmp.lt.s32.totalorder %v880, 0
      %vm949 = vcmp.lt.s32.totalorder %v887, 0
      %vm950 = vcmp.lt.s32.totalorder %v894, 0
      %vm951 = vcmp.lt.s32.totalorder %v901, 0
      %vm952 = vcmp.lt.s32.totalorder %v908, 0
      %vm953 = vcmp.lt.s32.totalorder %v915, 0
      %vm954 = vcmp.lt.s32.totalorder %v922, 0
      %vm955 = vmand %vm939, %vm923
      %vm956 = vmand %vm940, %vm924
      %vm957 = vmand %vm941, %vm925
      %vm958 = vmand %vm942, %vm926
      %vm959 = vmand %vm943, %vm927
      %vm960 = vmand %vm944, %vm928
      %vm961 = vmand %vm945, %vm929
      %vm962 = vmand %vm946, %vm930
      %vm963 = vmand %vm947, %vm931
      %vm964 = vmand %vm948, %vm932
      %vm965 = vmand %vm949, %vm933
      %vm966 = vmand %vm950, %vm934
      %vm967 = vmand %vm951, %vm935
      %vm968 = vmand %vm952, %vm936
      %vm969 = vmand %vm953, %vm937
      %vm970 = vmand %vm954, %vm938
      %v971 = vadd.s32 %v817, 16
      %v972 = vadd.s32 %v824, 16
      %v973 = vadd.s32 %v831, 16
      %v974 = vadd.s32 %v838, 16
      %v975 = vadd.s32 %v845, 16
      %v976 = vadd.s32 %v852, 16
      %v977 = vadd.s32 %v859, 16
      %v978 = vadd.s32 %v866, 16
      %v979 = vadd.s32 %v873, 16
      %v980 = vadd.s32 %v880, 16
      %v981 = vadd.s32 %v887, 16
      %v982 = vadd.s32 %v894, 16
      %v983 = vadd.s32 %v901, 16
      %v984 = vadd.s32 %v908, 16
      %v985 = vadd.s32 %v915, 16
      %v986 = vadd.s32 %v922, 16
      %v987 = vsel %vm955, %v971, %v817
      %v988 = vsel %vm956, %v972, %v824
      %v989 = vsel %vm957, %v973, %v831
      %v990 = vsel %vm958, %v974, %v838
      %v991 = vsel %vm959, %v975, %v845
      %v992 = vsel %vm960, %v976, %v852
      %v993 = vsel %vm961, %v977, %v859
      %v994 = vsel %vm962, %v978, %v866
      %v995 = vsel %vm963, %v979, %v873
      %v996 = vsel %vm964, %v980, %v880
      %v997 = vsel %vm965, %v981, %v887
      %v998 = vsel %vm966, %v982, %v894
      %v999 = vsel %vm967, %v983, %v901
      %v1000 = vsel %vm968, %v984, %v908
      %v1001 = vsel %vm969, %v985, %v915
      %v1002 = vsel %vm970, %v986, %v922
      %vm1003 = vcmp.ne.s32.totalorder %v987, 0
      %vm1004 = vcmp.ne.s32.totalorder %v988, 0
      %vm1005 = vcmp.ne.s32.totalorder %v989, 0
      %vm1006 = vcmp.ne.s32.totalorder %v990, 0
      %vm1007 = vcmp.ne.s32.totalorder %v991, 0
      %vm1008 = vcmp.ne.s32.totalorder %v992, 0
      %vm1009 = vcmp.ne.s32.totalorder %v993, 0
      %vm1010 = vcmp.ne.s32.totalorder %v994, 0
      %vm1011 = vcmp.ne.s32.totalorder %v995, 0
      %vm1012 = vcmp.ne.s32.totalorder %v996, 0
      %vm1013 = vcmp.ne.s32.totalorder %v997, 0
      %vm1014 = vcmp.ne.s32.totalorder %v998, 0
      %vm1015 = vcmp.ne.s32.totalorder %v999, 0
      %vm1016 = vcmp.ne.s32.totalorder %v1000, 0
      %vm1017 = vcmp.ne.s32.totalorder %v1001, 0
      %vm1018 = vcmp.ne.s32.totalorder %v1002, 0
      %vm1019 = vcmp.ne.s32.totalorder %v987, 15
      %vm1020 = vcmp.ne.s32.totalorder %v988, 15
      %vm1021 = vcmp.ne.s32.totalorder %v989, 15
      %vm1022 = vcmp.ne.s32.totalorder %v990, 15
      %vm1023 = vcmp.ne.s32.totalorder %v991, 15
      %vm1024 = vcmp.ne.s32.totalorder %v992, 15
      %vm1025 = vcmp.ne.s32.totalorder %v993, 15
      %vm1026 = vcmp.ne.s32.totalorder %v994, 15
      %vm1027 = vcmp.ne.s32.totalorder %v995, 15
      %vm1028 = vcmp.ne.s32.totalorder %v996, 15
      %vm1029 = vcmp.ne.s32.totalorder %v997, 15
      %vm1030 = vcmp.ne.s32.totalorder %v998, 15
      %vm1031 = vcmp.ne.s32.totalorder %v999, 15
      %vm1032 = vcmp.ne.s32.totalorder %v1000, 15
      %vm1033 = vcmp.ne.s32.totalorder %v1001, 15
      %vm1034 = vcmp.ne.s32.totalorder %v1002, 15
      %v1035 = vsel %vm1003, 1, 0
      %v1036 = vsel %vm1004, 1, 0
      %v1037 = vsel %vm1005, 1, 0
      %v1038 = vsel %vm1006, 1, 0
      %v1039 = vsel %vm1007, 1, 0
      %v1040 = vsel %vm1008, 1, 0
      %v1041 = vsel %vm1009, 1, 0
      %v1042 = vsel %vm1010, 1, 0
      %v1043 = vsel %vm1011, 1, 0
      %v1044 = vsel %vm1012, 1, 0
      %v1045 = vsel %vm1013, 1, 0
      %v1046 = vsel %vm1014, 1, 0
      %v1047 = vsel %vm1015, 1, 0
      %v1048 = vsel %vm1016, 1, 0
      %v1049 = vsel %vm1017, 1, 0
      %v1050 = vsel %vm1018, 1, 0
      %vm1051 = vcmp.eq.s32.totalorder %v1035, 1
      %vm1052 = vcmp.eq.s32.totalorder %v1036, 1
      %vm1053 = vcmp.eq.s32.totalorder %v1037, 1
      %vm1054 = vcmp.eq.s32.totalorder %v1038, 1
      %vm1055 = vcmp.eq.s32.totalorder %v1039, 1
      %vm1056 = vcmp.eq.s32.totalorder %v1040, 1
      %vm1057 = vcmp.eq.s32.totalorder %v1041, 1
      %vm1058 = vcmp.eq.s32.totalorder %v1042, 1
      %vm1059 = vcmp.eq.s32.totalorder %v1043, 1
      %vm1060 = vcmp.eq.s32.totalorder %v1044, 1
      %vm1061 = vcmp.eq.s32.totalorder %v1045, 1
      %vm1062 = vcmp.eq.s32.totalorder %v1046, 1
      %vm1063 = vcmp.eq.s32.totalorder %v1047, 1
      %vm1064 = vcmp.eq.s32.totalorder %v1048, 1
      %vm1065 = vcmp.eq.s32.totalorder %v1049, 1
      %vm1066 = vcmp.eq.s32.totalorder %v1050, 1
      %vm1067 = vmpackc.low %vm1051, %vm1051
      %vm1068 = vmpackc.low %vm1052, %vm1052
      %vm1069 = vmpackc.low %vm1053, %vm1053
      %vm1070 = vmpackc.low %vm1054, %vm1054
      %vm1071 = vmpackc.low %vm1055, %vm1055
      %vm1072 = vmpackc.low %vm1056, %vm1056
      %vm1073 = vmpackc.low %vm1057, %vm1057
      %vm1074 = vmpackc.low %vm1058, %vm1058
      %vm1075 = vmpackc.low %vm1059, %vm1059
      %vm1076 = vmpackc.low %vm1060, %vm1060
      %vm1077 = vmpackc.low %vm1061, %vm1061
      %vm1078 = vmpackc.low %vm1062, %vm1062
      %vm1079 = vmpackc.low %vm1063, %vm1063
      %vm1080 = vmpackc.low %vm1064, %vm1064
      %vm1081 = vmpackc.low %vm1065, %vm1065
      %vm1082 = vmpackc.low %vm1066, %vm1066
      %v1083 = vsel %vm1067, 65537, 0
      %v1084 = vsel %vm1068, 65537, 0
      %v1085 = vsel %vm1069, 65537, 0
      %v1086 = vsel %vm1070, 65537, 0
      %v1087 = vsel %vm1071, 65537, 0
      %v1088 = vsel %vm1072, 65537, 0
      %v1089 = vsel %vm1073, 65537, 0
      %v1090 = vsel %vm1074, 65537, 0
      %v1091 = vsel %vm1075, 65537, 0
      %v1092 = vsel %vm1076, 65537, 0
      %v1093 = vsel %vm1077, 65537, 0
      %v1094 = vsel %vm1078, 65537, 0
      %v1095 = vsel %vm1079, 65537, 0
      %v1096 = vsel %vm1080, 65537, 0
      %v1097 = vsel %vm1081, 65537, 0
      %v1098 = vsel %vm1082, 65537, 0
      %v1099 = vunpack.c.l.b16 %v1083
      %v1100 = vunpack.c.l.b16 %v1084
      %v1101 = vunpack.c.l.b16 %v1085
      %v1102 = vunpack.c.l.b16 %v1086
      %v1103 = vunpack.c.l.b16 %v1087
      %v1104 = vunpack.c.l.b16 %v1088
      %v1105 = vunpack.c.l.b16 %v1089
      %v1106 = vunpack.c.l.b16 %v1090
      %v1107 = vunpack.c.l.b16 %v1091
      %v1108 = vunpack.c.l.b16 %v1092
      %v1109 = vunpack.c.l.b16 %v1093
      %v1110 = vunpack.c.l.b16 %v1094
      %v1111 = vunpack.c.l.b16 %v1095
      %v1112 = vunpack.c.l.b16 %v1096
      %v1113 = vunpack.c.l.b16 %v1097
      %v1114 = vunpack.c.l.b16 %v1098
      %v1115 = vpack.c.b16 %v1100, %v1099
      %v1116 = vpack.c.b16 %v1102, %v1101
      %v1117 = vpack.c.b16 %v1104, %v1103
      %v1118 = vpack.c.b16 %v1106, %v1105
      %v1119 = vpack.c.b16 %v1108, %v1107
      %v1120 = vpack.c.b16 %v1110, %v1109
      %v1121 = vpack.c.b16 %v1112, %v1111
      %v1122 = vpack.c.b16 %v1114, %v1113
      %vm1123 = vcmp.ne.s16.totalorder %v1115, 0
      %vm1124 = vcmp.ne.s16.totalorder %v1116, 0
      %vm1125 = vcmp.ne.s16.totalorder %v1117, 0
      %vm1126 = vcmp.ne.s16.totalorder %v1118, 0
      %vm1127 = vcmp.ne.s16.totalorder %v1119, 0
      %vm1128 = vcmp.ne.s16.totalorder %v1120, 0
      %vm1129 = vcmp.ne.s16.totalorder %v1121, 0
      %vm1130 = vcmp.ne.s16.totalorder %v1122, 0
      %v1131 = vsel %vm1123, %v809, 0
      %v1132 = vsel %vm1124, %v731, 0
      %v1133 = vsel %vm1125, %v739, 0
      %v1134 = vsel %vm1126, %v747, 0
      %v1135 = vsel %vm1127, %v755, 0
      %v1136 = vsel %vm1128, %v763, 0
      %v1137 = vsel %vm1129, %v771, 0
      %v1138 = vsel %vm1130, %v779, 0
      %v1139 = vsel %vm1019, 1, 0
      %v1140 = vsel %vm1020, 1, 0
      %v1141 = vsel %vm1021, 1, 0
      %v1142 = vsel %vm1022, 1, 0
      %v1143 = vsel %vm1023, 1, 0
      %v1144 = vsel %vm1024, 1, 0
      %v1145 = vsel %vm1025, 1, 0
      %v1146 = vsel %vm1026, 1, 0
      %v1147 = vsel %vm1027, 1, 0
      %v1148 = vsel %vm1028, 1, 0
      %v1149 = vsel %vm1029, 1, 0
      %v1150 = vsel %vm1030, 1, 0
      %v1151 = vsel %vm1031, 1, 0
      %v1152 = vsel %vm1032, 1, 0
      %v1153 = vsel %vm1033, 1, 0
      %v1154 = vsel %vm1034, 1, 0
      %vm1155 = vcmp.eq.s32.totalorder %v1139, 1
      %vm1156 = vcmp.eq.s32.totalorder %v1140, 1
      %vm1157 = vcmp.eq.s32.totalorder %v1141, 1
      %vm1158 = vcmp.eq.s32.totalorder %v1142, 1
      %vm1159 = vcmp.eq.s32.totalorder %v1143, 1
      %vm1160 = vcmp.eq.s32.totalorder %v1144, 1
      %vm1161 = vcmp.eq.s32.totalorder %v1145, 1
      %vm1162 = vcmp.eq.s32.totalorder %v1146, 1
      %vm1163 = vcmp.eq.s32.totalorder %v1147, 1
      %vm1164 = vcmp.eq.s32.totalorder %v1148, 1
      %vm1165 = vcmp.eq.s32.totalorder %v1149, 1
      %vm1166 = vcmp.eq.s32.totalorder %v1150, 1
      %vm1167 = vcmp.eq.s32.totalorder %v1151, 1
      %vm1168 = vcmp.eq.s32.totalorder %v1152, 1
      %vm1169 = vcmp.eq.s32.totalorder %v1153, 1
      %vm1170 = vcmp.eq.s32.totalorder %v1154, 1
      %vm1171 = vmpackc.low %vm1155, %vm1155
      %vm1172 = vmpackc.low %vm1156, %vm1156
      %vm1173 = vmpackc.low %vm1157, %vm1157
      %vm1174 = vmpackc.low %vm1158, %vm1158
      %vm1175 = vmpackc.low %vm1159, %vm1159
      %vm1176 = vmpackc.low %vm1160, %vm1160
      %vm1177 = vmpackc.low %vm1161, %vm1161
      %vm1178 = vmpackc.low %vm1162, %vm1162
      %vm1179 = vmpackc.low %vm1163, %vm1163
      %vm1180 = vmpackc.low %vm1164, %vm1164
      %vm1181 = vmpackc.low %vm1165, %vm1165
      %vm1182 = vmpackc.low %vm1166, %vm1166
      %vm1183 = vmpackc.low %vm1167, %vm1167
      %vm1184 = vmpackc.low %vm1168, %vm1168
      %vm1185 = vmpackc.low %vm1169, %vm1169
      %vm1186 = vmpackc.low %vm1170, %vm1170
      %v1187 = vsel %vm1171, 65537, 0
      %v1188 = vsel %vm1172, 65537, 0
      %v1189 = vsel %vm1173, 65537, 0
      %v1190 = vsel %vm1174, 65537, 0
      %v1191 = vsel %vm1175, 65537, 0
      %v1192 = vsel %vm1176, 65537, 0
      %v1193 = vsel %vm1177, 65537, 0
      %v1194 = vsel %vm1178, 65537, 0
      %v1195 = vsel %vm1179, 65537, 0
      %v1196 = vsel %vm1180, 65537, 0
      %v1197 = vsel %vm1181, 65537, 0
      %v1198 = vsel %vm1182, 65537, 0
      %v1199 = vsel %vm1183, 65537, 0
      %v1200 = vsel %vm1184, 65537, 0
      %v1201 = vsel %vm1185, 65537, 0
      %v1202 = vsel %vm1186, 65537, 0
      %v1203 = vunpack.c.l.b16 %v1187
      %v1204 = vunpack.c.l.b16 %v1188
      %v1205 = vunpack.c.l.b16 %v1189
      %v1206 = vunpack.c.l.b16 %v1190
      %v1207 = vunpack.c.l.b16 %v1191
      %v1208 = vunpack.c.l.b16 %v1192
      %v1209 = vunpack.c.l.b16 %v1193
      %v1210 = vunpack.c.l.b16 %v1194
      %v1211 = vunpack.c.l.b16 %v1195
      %v1212 = vunpack.c.l.b16 %v1196
      %v1213 = vunpack.c.l.b16 %v1197
      %v1214 = vunpack.c.l.b16 %v1198
      %v1215 = vunpack.c.l.b16 %v1199
      %v1216 = vunpack.c.l.b16 %v1200
      %v1217 = vunpack.c.l.b16 %v1201
      %v1218 = vunpack.c.l.b16 %v1202
      %v1219 = vpack.c.b16 %v1204, %v1203
      %v1220 = vpack.c.b16 %v1206, %v1205
      %v1221 = vpack.c.b16 %v1208, %v1207
      %v1222 = vpack.c.b16 %v1210, %v1209
      %v1223 = vpack.c.b16 %v1212, %v1211
      %v1224 = vpack.c.b16 %v1214, %v1213
      %v1225 = vpack.c.b16 %v1216, %v1215
      %v1226 = vpack.c.b16 %v1218, %v1217
      %v1227 = vrot.slane %v1219, 7
      %v1228 = vrot.slane %v1220, 7
      %v1229 = vsel %vm807, %v1227, %v1228
      %v1230 = vrot.slane %v1221, 7
      %v1231 = vsel %vm807, %v1228, %v1230
      %v1232 = vrot.slane %v1222, 7
      %v1233 = vsel %vm807, %v1230, %v1232
      %v1234 = vrot.slane %v1223, 7
      %v1235 = vsel %vm807, %v1232, %v1234
      %v1236 = vrot.slane %v1224, 7
      %v1237 = vsel %vm807, %v1234, %v1236
      %v1238 = vrot.slane %v1225, 7
      %v1239 = vsel %vm807, %v1236, %v1238
      %v1240 = vrot.slane %v1226, 7
      %v1241 = vsel %vm807, %v1238, %v1240
      %vm1242 = vcmp.ne.s16.totalorder %v1227, 0
      %vm1243 = vcmp.ne.s16.totalorder %v1229, 0
      %vm1244 = vcmp.ne.s16.totalorder %v1231, 0
      %vm1245 = vcmp.ne.s16.totalorder %v1233, 0
      %vm1246 = vcmp.ne.s16.totalorder %v1235, 0
      %vm1247 = vcmp.ne.s16.totalorder %v1237, 0
      %vm1248 = vcmp.ne.s16.totalorder %v1239, 0
      %vm1249 = vcmp.ne.s16.totalorder %v1241, 0
      %vm1250 = vcmp.ne.s16.totalorder %v1240, 0
      %v1251 = vsel %vm1242, %v809, 0
      %v1252 = vsel %vm1243, %v731, 0
      %v1253 = vsel %vm1244, %v739, 0
      %v1254 = vsel %vm1245, %v747, 0
      %v1255 = vsel %vm1246, %v755, 0
      %v1256 = vsel %vm1247, %v763, 0
      %v1257 = vsel %vm1248, %v771, 0
      %v1258 = vsel %vm1249, %v779, 0
      %v1259 = vsel %vm1250, %v787, 0
      %v1260 = vsel %vm1123, %v731, 0
      %v1261 = vsel %vm1124, %v739, 0
      %v1262 = vsel %vm1125, %v747, 0
      %v1263 = vsel %vm1126, %v755, 0
      %v1264 = vsel %vm1127, %v763, 0
      %v1265 = vsel %vm1128, %v771, 0
      %v1266 = vsel %vm1129, %v779, 0
      %v1267 = vsel %vm1130, %v787, 0
      %v1268 = vsel %vm1242, %v731, 0
      %v1269 = vsel %vm1243, %v739, 0
      %v1270 = vsel %vm1244, %v747, 0
      %v1271 = vsel %vm1245, %v755, 0
      %v1272 = vsel %vm1246, %v763, 0
      %v1273 = vsel %vm1247, %v771, 0
      %v1274 = vsel %vm1248, %v779, 0
      %v1275 = vsel %vm1249, %v787, 0
      %v1276 = vsel %vm1250, %v795, 0
      %v1277 = vsel %vm1123, %v739, 0
      %v1278 = vsel %vm1124, %v747, 0
      %v1279 = vsel %vm1125, %v755, 0
      %v1280 = vsel %vm1126, %v763, 0
      %v1281 = vsel %vm1127, %v771, 0
      %v1282 = vsel %vm1128, %v779, 0
      %v1283 = vsel %vm1129, %v787, 0
      %v1284 = vsel %vm1130, %v795, 0
      %v1285 = vsel %vm1242, %v739, 0
      %v1286 = vsel %vm1243, %v747, 0
      %v1287 = vsel %vm1244, %v755, 0
      %v1288 = vsel %vm1245, %v763, 0
      %v1289 = vsel %vm1246, %v771, 0
      %v1290 = vsel %vm1247, %v779, 0
      %v1291 = vsel %vm1248, %v787, 0
      %v1292 = vsel %vm1249, %v795, 0
      %v1293 = vsel %vm1250, %v810, 0
      %vm1294 = vsmask.f32 7424
      %v1296 = vshrl.u32 %v809, 16
      %v1298 = vshll.u32 %v809, 16
      %v1300 = vrot.slane %v1298, 1
      %v1301 = vor.u32 %v1296, %v1300
      %v1303 = vshll.u32 %v731, 16
      %v1305 = vrot.slane %v1303, 1
      %v1306 = vsel %vm1294, %v1301, %v1305
      %v1307 = vshrl.u32 %v731, 16
      %v1309 = vor.u32 %v1307, %v1305
      %v1311 = vshll.u32 %v739, 16
      %v1313 = vrot.slane %v1311, 1
      %v1314 = vsel %vm1294, %v1309, %v1313
      %v1315 = vshrl.u32 %v739, 16
      %v1317 = vor.u32 %v1315, %v1313
      %v1319 = vshll.u32 %v747, 16
      %v1321 = vrot.slane %v1319, 1
      %v1322 = vsel %vm1294, %v1317, %v1321
      %v1323 = vshrl.u32 %v747, 16
      %v1325 = vor.u32 %v1323, %v1321
      %v1327 = vshll.u32 %v755, 16
      %v1329 = vrot.slane %v1327, 1
      %v1330 = vsel %vm1294, %v1325, %v1329
      %v1331 = vshrl.u32 %v755, 16
      %v1333 = vor.u32 %v1331, %v1329
      %v1335 = vshll.u32 %v763, 16
      %v1337 = vrot.slane %v1335, 1
      %v1338 = vsel %vm1294, %v1333, %v1337
      %v1339 = vshrl.u32 %v763, 16
      %v1341 = vor.u32 %v1339, %v1337
      %v1343 = vshll.u32 %v771, 16
      %v1345 = vrot.slane %v1343, 1
      %v1346 = vsel %vm1294, %v1341, %v1345
      %v1347 = vshrl.u32 %v771, 16
      %v1349 = vor.u32 %v1347, %v1345
      %v1351 = vshll.u32 %v779, 16
      %v1353 = vrot.slane %v1351, 1
      %v1354 = vsel %vm1294, %v1349, %v1353
      %v1355 = vshrl.u32 %v779, 16
      %v1357 = vor.u32 %v1355, %v1353
      %v1359 = vshll.u32 %v787, 16
      %v1361 = vrot.slane %v1359, 1
      %v1362 = vsel %vm1294, %v1357, %v1361
      %1363 = vrot.lane.b32.xlu0 %v1306, 4
      %v1364 = vpop.permute.xlu0 %1363
      %1365 = vrot.lane.b32.xlu0 %v1314, 4
      %v1366 = vpop.permute.xlu0 %1365
      %1367 = vrot.lane.b32.xlu0 %v1322, 4
      %v1368 = vpop.permute.xlu0 %1367
      %1369 = vrot.lane.b32.xlu0 %v1330, 4
      %v1370 = vpop.permute.xlu0 %1369
      %1371 = vrot.lane.b32.xlu0 %v1338, 4
      %v1372 = vpop.permute.xlu0 %1371
      %1373 = vrot.lane.b32.xlu0 %v1346, 4
      %v1374 = vpop.permute.xlu0 %1373
      %1375 = vrot.lane.b32.xlu0 %v1354, 4
      %v1376 = vpop.permute.xlu0 %1375
      %1377 = vrot.lane.b32.xlu0 %v1362, 4
      %v1378 = vpop.permute.xlu0 %1377
      %vm1388 = vcmask 1046528
      %v1389 = vrot.slane %v1251, 1
      %v1390 = vrot.slane %v1252, 1
      %v1391 = vsel %vm1388, %v1389, %v1390
      %v1392 = vrot.slane %v1253, 1
      %v1393 = vsel %vm1388, %v1390, %v1392
      %v1394 = vrot.slane %v1254, 1
      %v1395 = vsel %vm1388, %v1392, %v1394
      %v1396 = vrot.slane %v1255, 1
      %v1397 = vsel %vm1388, %v1394, %v1396
      %v1398 = vrot.slane %v1256, 1
      %v1399 = vsel %vm1388, %v1396, %v1398
      %v1400 = vrot.slane %v1257, 1
      %v1401 = vsel %vm1388, %v1398, %v1400
      %v1402 = vrot.slane %v1258, 1
      %v1403 = vsel %vm1388, %v1400, %v1402
      %v1404 = vrot.slane %v1259, 1
      %v1405 = vsel %vm1388, %v1402, %v1404
      %1406 = vrot.lane.b32.xlu0 %v1391, 8
      %v1407 = vpop.permute.xlu0 %1406
      %1408 = vrot.lane.b32.xlu0 %v1393, 8
      %v1409 = vpop.permute.xlu0 %1408
      %1410 = vrot.lane.b32.xlu0 %v1395, 8
      %v1411 = vpop.permute.xlu0 %1410
      %1412 = vrot.lane.b32.xlu0 %v1397, 8
      %v1413 = vpop.permute.xlu0 %1412
      %1414 = vrot.lane.b32.xlu0 %v1399, 8
      %v1415 = vpop.permute.xlu0 %1414
      %1416 = vrot.lane.b32.xlu0 %v1401, 8
      %v1417 = vpop.permute.xlu0 %1416
      %1418 = vrot.lane.b32.xlu0 %v1403, 8
      %v1419 = vpop.permute.xlu0 %1418
      %1420 = vrot.lane.b32.xlu0 %v1405, 8
      %v1421 = vpop.permute.xlu0 %1420
      %1430 = vrot.lane.b32.xlu0 %v1260, 12
      %v1431 = vpop.permute.xlu0 %1430
      %1432 = vrot.lane.b32.xlu0 %v1261, 12
      %v1433 = vpop.permute.xlu0 %1432
      %1434 = vrot.lane.b32.xlu0 %v1262, 12
      %v1435 = vpop.permute.xlu0 %1434
      %1436 = vrot.lane.b32.xlu0 %v1263, 12
      %v1437 = vpop.permute.xlu0 %1436
      %1438 = vrot.lane.b32.xlu0 %v1264, 12
      %v1439 = vpop.permute.xlu0 %1438
      %1440 = vrot.lane.b32.xlu0 %v1265, 12
      %v1441 = vpop.permute.xlu0 %1440
      %1442 = vrot.lane.b32.xlu0 %v1266, 12
      %v1443 = vpop.permute.xlu0 %1442
      %1444 = vrot.lane.b32.xlu0 %v1267, 12
      %v1445 = vpop.permute.xlu0 %1444
      %v1446 = vshrl.u32 %v787, 16
      %v1448 = vor.u32 %v1446, %v1361
      %v1450 = vshll.u32 %v795, 16
      %v1452 = vrot.slane %v1450, 1
      %v1453 = vsel %vm1294, %v1448, %v1452
      %1454 = vrot.lane.b32.xlu0 %v1314, 16
      %v1455 = vpop.permute.xlu0 %1454
      %1456 = vrot.lane.b32.xlu0 %v1322, 16
      %v1457 = vpop.permute.xlu0 %1456
      %1458 = vrot.lane.b32.xlu0 %v1330, 16
      %v1459 = vpop.permute.xlu0 %1458
      %1460 = vrot.lane.b32.xlu0 %v1338, 16
      %v1461 = vpop.permute.xlu0 %1460
      %1462 = vrot.lane.b32.xlu0 %v1346, 16
      %v1463 = vpop.permute.xlu0 %1462
      %1464 = vrot.lane.b32.xlu0 %v1354, 16
      %v1465 = vpop.permute.xlu0 %1464
      %1466 = vrot.lane.b32.xlu0 %v1362, 16
      %v1467 = vpop.permute.xlu0 %1466
      %1468 = vrot.lane.b32.xlu0 %v1453, 16
      %v1469 = vpop.permute.xlu0 %1468
      %v1479 = vrot.slane %v1268, 1
      %v1480 = vrot.slane %v1269, 1
      %v1481 = vsel %vm1388, %v1479, %v1480
      %v1482 = vrot.slane %v1270, 1
      %v1483 = vsel %vm1388, %v1480, %v1482
      %v1484 = vrot.slane %v1271, 1
      %v1485 = vsel %vm1388, %v1482, %v1484
      %v1486 = vrot.slane %v1272, 1
      %v1487 = vsel %vm1388, %v1484, %v1486
      %v1488 = vrot.slane %v1273, 1
      %v1489 = vsel %vm1388, %v1486, %v1488
      %v1490 = vrot.slane %v1274, 1
      %v1491 = vsel %vm1388, %v1488, %v1490
      %v1492 = vrot.slane %v1275, 1
      %v1493 = vsel %vm1388, %v1490, %v1492
      %v1494 = vrot.slane %v1276, 1
      %v1495 = vsel %vm1388, %v1492, %v1494
      %1496 = vrot.lane.b32.xlu0 %v1481, 20
      %v1497 = vpop.permute.xlu0 %1496
      %1498 = vrot.lane.b32.xlu0 %v1483, 20
      %v1499 = vpop.permute.xlu0 %1498
      %1500 = vrot.lane.b32.xlu0 %v1485, 20
      %v1501 = vpop.permute.xlu0 %1500
      %1502 = vrot.lane.b32.xlu0 %v1487, 20
      %v1503 = vpop.permute.xlu0 %1502
      %1504 = vrot.lane.b32.xlu0 %v1489, 20
      %v1505 = vpop.permute.xlu0 %1504
      %1506 = vrot.lane.b32.xlu0 %v1491, 20
      %v1507 = vpop.permute.xlu0 %1506
      %1508 = vrot.lane.b32.xlu0 %v1493, 20
      %v1509 = vpop.permute.xlu0 %1508
      %1510 = vrot.lane.b32.xlu0 %v1495, 20
      %v1511 = vpop.permute.xlu0 %1510
      %1520 = vrot.lane.b32.xlu0 %v1277, 24
      %v1521 = vpop.permute.xlu0 %1520
      %1522 = vrot.lane.b32.xlu0 %v1278, 24
      %v1523 = vpop.permute.xlu0 %1522
      %1524 = vrot.lane.b32.xlu0 %v1279, 24
      %v1525 = vpop.permute.xlu0 %1524
      %1526 = vrot.lane.b32.xlu0 %v1280, 24
      %v1527 = vpop.permute.xlu0 %1526
      %1528 = vrot.lane.b32.xlu0 %v1281, 24
      %v1529 = vpop.permute.xlu0 %1528
      %1530 = vrot.lane.b32.xlu0 %v1282, 24
      %v1531 = vpop.permute.xlu0 %1530
      %1532 = vrot.lane.b32.xlu0 %v1283, 24
      %v1533 = vpop.permute.xlu0 %1532
      %1534 = vrot.lane.b32.xlu0 %v1284, 24
      %v1535 = vpop.permute.xlu0 %1534
      %v1536 = vshrl.u32 %v795, 16
      %v1538 = vor.u32 %v1536, %v1452
      %v1540 = vshll.u32 %v810, 16
      %v1542 = vrot.slane %v1540, 1
      %v1543 = vsel %vm1294, %v1538, %v1542
      %1544 = vrot.lane.b32.xlu0 %v1322, 28
      %v1545 = vpop.permute.xlu0 %1544
      %1546 = vrot.lane.b32.xlu0 %v1330, 28
      %v1547 = vpop.permute.xlu0 %1546
      %1548 = vrot.lane.b32.xlu0 %v1338, 28
      %v1549 = vpop.permute.xlu0 %1548
      %1550 = vrot.lane.b32.xlu0 %v1346, 28
      %v1551 = vpop.permute.xlu0 %1550
      %1552 = vrot.lane.b32.xlu0 %v1354, 28
      %v1553 = vpop.permute.xlu0 %1552
      %1554 = vrot.lane.b32.xlu0 %v1362, 28
      %v1555 = vpop.permute.xlu0 %1554
      %1556 = vrot.lane.b32.xlu0 %v1453, 28
      %v1557 = vpop.permute.xlu0 %1556
      %1558 = vrot.lane.b32.xlu0 %v1543, 28
      %v1559 = vpop.permute.xlu0 %1558
      %v1569 = vrot.slane %v1285, 1
      %v1570 = vrot.slane %v1286, 1
      %v1571 = vsel %vm1388, %v1569, %v1570
      %v1572 = vrot.slane %v1287, 1
      %v1573 = vsel %vm1388, %v1570, %v1572
      %v1574 = vrot.slane %v1288, 1
      %v1575 = vsel %vm1388, %v1572, %v1574
      %v1576 = vrot.slane %v1289, 1
      %v1577 = vsel %vm1388, %v1574, %v1576
      %v1578 = vrot.slane %v1290, 1
      %v1579 = vsel %vm1388, %v1576, %v1578
      %v1580 = vrot.slane %v1291, 1
      %v1581 = vsel %vm1388, %v1578, %v1580
      %v1582 = vrot.slane %v1292, 1
      %v1583 = vsel %vm1388, %v1580, %v1582
      %v1584 = vrot.slane %v1293, 1
      %v1585 = vsel %vm1388, %v1582, %v1584
      %1586 = vrot.lane.b32.xlu0 %v1571, 32
      %v1587 = vpop.permute.xlu0 %1586
      %1588 = vrot.lane.b32.xlu0 %v1573, 32
      %v1589 = vpop.permute.xlu0 %1588
      %1590 = vrot.lane.b32.xlu0 %v1575, 32
      %v1591 = vpop.permute.xlu0 %1590
      %1592 = vrot.lane.b32.xlu0 %v1577, 32
      %v1593 = vpop.permute.xlu0 %1592
      %1594 = vrot.lane.b32.xlu0 %v1579, 32
      %v1595 = vpop.permute.xlu0 %1594
      %1596 = vrot.lane.b32.xlu0 %v1581, 32
      %v1597 = vpop.permute.xlu0 %1596
      %1598 = vrot.lane.b32.xlu0 %v1583, 32
      %v1599 = vpop.permute.xlu0 %1598
      %1600 = vrot.lane.b32.xlu0 %v1585, 32
      %v1601 = vpop.permute.xlu0 %1600
      %vm1602 = vcmask 31744
      %v1605 = vsel %vm1602, %v1131, %v1364
      %v1608 = vsel %vm1602, %v1132, %v1366
      %v1611 = vsel %vm1602, %v1133, %v1368
      %v1614 = vsel %vm1602, %v1134, %v1370
      %v1617 = vsel %vm1602, %v1135, %v1372
      %v1620 = vsel %vm1602, %v1136, %v1374
      %v1623 = vsel %vm1602, %v1137, %v1376
      %v1626 = vsel %vm1602, %v1138, %v1378
      %vm1627 = vcmask 64512
      %v1629 = vsel %vm1627, %v1605, %v1407
      %v1631 = vsel %vm1627, %v1608, %v1409
      %v1633 = vsel %vm1627, %v1611, %v1411
      %v1635 = vsel %vm1627, %v1614, %v1413
      %v1637 = vsel %vm1627, %v1617, %v1415
      %v1639 = vsel %vm1627, %v1620, %v1417
      %v1641 = vsel %vm1627, %v1623, %v1419
      %v1643 = vsel %vm1627, %v1626, %v1421
      %vm1644 = vcmask 97280
      %v1646 = vsel %vm1644, %v1629, %v1431
      %v1648 = vsel %vm1644, %v1631, %v1433
      %v1650 = vsel %vm1644, %v1633, %v1435
      %v1652 = vsel %vm1644, %v1635, %v1437
      %v1654 = vsel %vm1644, %v1637, %v1439
      %v1656 = vsel %vm1644, %v1639, %v1441
      %v1658 = vsel %vm1644, %v1641, %v1443
      %v1660 = vsel %vm1644, %v1643, %v1445
      %vm1661 = vcmask 130048
      %v1663 = vsel %vm1661, %v1646, %v1455
      %v1665 = vsel %vm1661, %v1648, %v1457
      %v1667 = vsel %vm1661, %v1650, %v1459
      %v1669 = vsel %vm1661, %v1652, %v1461
      %v1671 = vsel %vm1661, %v1654, %v1463
      %v1673 = vsel %vm1661, %v1656, %v1465
      %v1675 = vsel %vm1661, %v1658, %v1467
      %v1677 = vsel %vm1661, %v1660, %v1469
      %vm1678 = vcmask 162816
      %v1680 = vsel %vm1678, %v1663, %v1497
      %v1682 = vsel %vm1678, %v1665, %v1499
      %v1684 = vsel %vm1678, %v1667, %v1501
      %v1686 = vsel %vm1678, %v1669, %v1503
      %v1688 = vsel %vm1678, %v1671, %v1505
      %v1690 = vsel %vm1678, %v1673, %v1507
      %v1692 = vsel %vm1678, %v1675, %v1509
      %v1694 = vsel %vm1678, %v1677, %v1511
      %vm1695 = vcmask 195584
      %v1697 = vsel %vm1695, %v1680, %v1521
      %v1699 = vsel %vm1695, %v1682, %v1523
      %v1701 = vsel %vm1695, %v1684, %v1525
      %v1703 = vsel %vm1695, %v1686, %v1527
      %v1705 = vsel %vm1695, %v1688, %v1529
      %v1707 = vsel %vm1695, %v1690, %v1531
      %v1709 = vsel %vm1695, %v1692, %v1533
      %v1711 = vsel %vm1695, %v1694, %v1535
      %vm1712 = vcmask 228352
      %v1714 = vsel %vm1712, %v1697, %v1545
      %v1716 = vsel %vm1712, %v1699, %v1547
      %v1718 = vsel %vm1712, %v1701, %v1549
      %v1720 = vsel %vm1712, %v1703, %v1551
      %v1722 = vsel %vm1712, %v1705, %v1553
      %v1724 = vsel %vm1712, %v1707, %v1555
      %v1726 = vsel %vm1712, %v1709, %v1557
      %v1728 = vsel %vm1712, %v1711, %v1559
      %vm1729 = vcmask 261120
      %v1731 = vsel %vm1729, %v1714, %v1587
      %v1733 = vsel %vm1729, %v1716, %v1589
      %v1735 = vsel %vm1729, %v1718, %v1591
      %v1737 = vsel %vm1729, %v1720, %v1593
      %v1739 = vsel %vm1729, %v1722, %v1595
      %v1741 = vsel %vm1729, %v1724, %v1597
      %v1743 = vsel %vm1729, %v1726, %v1599
      %v1745 = vsel %vm1729, %v1728, %v1601
      %v1746 = vld [vmem:[%s3] sm:$0xf]
      %v1747 = vld [vmem:[%s3 + $0x4] sm:$0xf]
      %v1748 = vld [vmem:[%s3 + $0x8] sm:$0xf]
      %v1749 = vld [vmem:[%s3 + $0xc] sm:$0xf]
      %v1750 = vld [vmem:[%s3 + $0x10] sm:$0x3]
      %v1756 = vunpack.c.l.b16 %v1746
      %v1757 = vunpack.c.l.b16 %v1747
      %v1758 = vunpack.c.l.b16 %v1748
      %v1759 = vunpack.c.l.b16 %v1749
      %v1760 = vunpack.c.l.b16 %v1750
      %v1761 = vpack.c.b16 %v1757, %v1756
      %v1762 = vpack.c.b16 %v1759, %v1758
      %v1763 = vpack.c.b16 %v1760, %v1760
      %vm1766 = vcmask 293888
      %v1767 = vsel %vm1766, %v1731, 0
      %v1769 = vsel %vm1766, %v1733, 0
      %v1771 = vsel %vm1766, %v1735, 0
      %v1773 = vsel %vm1766, %v1737, 0
      %v1775 = vsel %vm1766, %v1739, 0
      %v1777 = vsel %vm1766, %v1741, 0
      %v1779 = vsel %vm1766, %v1743, 0
      %v1781 = vsel %vm1766, %v1745, 0
      %vm1783 = vcmask 1041408
      %v1785 = vsel %vm1783, %v1763, 0
      %1787 = vmatprep.subr.bf16.mxu0 0
      %1788 = vmatpush1.bf16.msra.mxu0 0
      %1789 = vmatprep.subr.bf16.mxu0 0
      %1790 = vmatpush1.bf16.msra.mxu0 0
      %1791 = vmatprep.subr.bf16.mxu0 0
      %1792 = vmatpush1.bf16.msra.mxu0 0
      %1793 = vmatprep.subr.bf16.mxu0 0
      %1794 = vmatpush1.bf16.msra.mxu0 0
      %1795 = vmatprep.subr.bf16.mxu0 0
      %1796 = vmatpush1.bf16.msra.mxu0 0
      %1797 = vmatprep.subr.bf16.mxu0 0
      %1798 = vmatpush1.bf16.msra.mxu0 %v1785
      %1799 = vmatprep.subr.bf16.mxu0 0
      %1800 = vmatpush1.bf16.msra.mxu0 %v1762
      %1801 = vmatprep.subr.bf16.mxu0 0
      %1802 = vmatpush1.bf16.msra.mxu0 %v1761
      %1803 = vmatprep.subr.bf16.mxu0 0
      %1804 = vmatpush2.bf16.msra.mxu0 0
      %1805 = vmatprep.subr.bf16.mxu0 0
      %1806 = vmatpush2.bf16.msra.mxu0 0
      %1807 = vmatprep.subr.bf16.mxu0 0
      %1808 = vmatpush2.bf16.msra.mxu0 0
      %1809 = vmatprep.subr.bf16.mxu0 0
      %1810 = vmatpush2.bf16.msra.mxu0 0
      %1811 = vmatprep.subr.bf16.mxu0 0
      %1812 = vmatpush2.bf16.msra.mxu0 0
      %1813 = vmatprep.subr.bf16.mxu0 0
      %1814 = vmatpush2.bf16.msra.mxu0 0
      %1815 = vmatprep.subr.bf16.mxu0 0
      %1816 = vmatpush2.bf16.msra.mxu0 0
      %1817 = vmatprep.subr.bf16.mxu0 0
      %1818 = vmatpush2.bf16.msra.mxu0 0
      %1819 = vmatprep.mubr.bf16.mxu0 0
      %1820 = vmatmul.mubr.bf16.gmra.mxu0 %v1767
      %v1821 = vpop.f32.mrf.mxu0
      %v1822 = vadd.f32 0.0, %v1821
      %v1823 = vpop.f32.mrf.mxu0
      %v1824 = vpop.f32.mrf.mxu0
      %v1825 = vadd.f32 0.0, %v1824
      %v1826 = vpop.f32.mrf.mxu0
      %1827 = vmatprep.mubr.bf16.mxu0 0
      %1828 = vmatmul.mubr.bf16.gmra.mxu0 %v1769
      %v1829 = vpop.f32.mrf.mxu0
      %v1830 = vadd.f32 0.0, %v1829
      %v1831 = vpop.f32.mrf.mxu0
      %v1832 = vpop.f32.mrf.mxu0
      %v1833 = vadd.f32 0.0, %v1832
      %v1834 = vpop.f32.mrf.mxu0
      %1835 = vmatprep.mubr.bf16.mxu0 0
      %1836 = vmatmul.mubr.bf16.gmra.mxu0 %v1771
      %v1837 = vpop.f32.mrf.mxu0
      %v1838 = vadd.f32 0.0, %v1837
      %v1839 = vpop.f32.mrf.mxu0
      %v1840 = vpop.f32.mrf.mxu0
      %v1841 = vadd.f32 0.0, %v1840
      %v1842 = vpop.f32.mrf.mxu0
      %1843 = vmatprep.mubr.bf16.mxu0 0
      %1844 = vmatmul.mubr.bf16.gmra.mxu0 %v1773
      %v1845 = vpop.f32.mrf.mxu0
      %v1846 = vadd.f32 0.0, %v1845
      %v1847 = vpop.f32.mrf.mxu0
      %v1848 = vpop.f32.mrf.mxu0
      %v1849 = vadd.f32 0.0, %v1848
      %v1850 = vpop.f32.mrf.mxu0
      %1851 = vmatprep.mubr.bf16.mxu0 0
      %1852 = vmatmul.mubr.bf16.gmra.mxu0 %v1775
      %v1853 = vpop.f32.mrf.mxu0
      %v1854 = vadd.f32 0.0, %v1853
      %v1855 = vpop.f32.mrf.mxu0
      %v1856 = vpop.f32.mrf.mxu0
      %v1857 = vadd.f32 0.0, %v1856
      %v1858 = vpop.f32.mrf.mxu0
      %1859 = vmatprep.mubr.bf16.mxu0 0
      %1860 = vmatmul.mubr.bf16.gmra.mxu0 %v1777
      %v1861 = vpop.f32.mrf.mxu0
      %v1862 = vadd.f32 0.0, %v1861
      %v1863 = vpop.f32.mrf.mxu0
      %v1864 = vpop.f32.mrf.mxu0
      %v1865 = vadd.f32 0.0, %v1864
      %v1866 = vpop.f32.mrf.mxu0
      %1867 = vmatprep.mubr.bf16.mxu0 0
      %1868 = vmatmul.mubr.bf16.gmra.mxu0 %v1779
      %v1869 = vpop.f32.mrf.mxu0
      %v1870 = vadd.f32 0.0, %v1869
      %v1871 = vpop.f32.mrf.mxu0
      %v1872 = vpop.f32.mrf.mxu0
      %v1873 = vadd.f32 0.0, %v1872
      %v1874 = vpop.f32.mrf.mxu0
      %1875 = vmatprep.mubr.bf16.mxu0 0
      %1876 = vmatmul.mubr.bf16.gmra.mxu0 %v1781
      %v1877 = vpop.f32.mrf.mxu0
      %v1878 = vadd.f32 0.0, %v1877
      %v1879 = vpop.f32.mrf.mxu0
      %v1880 = vpop.f32.mrf.mxu0
      %v1881 = vadd.f32 0.0, %v1880
      %v1882 = vpop.f32.mrf.mxu0
      %1883 = vdwg.mxu0
      %v1884 = vsel %vm1627, %v1822, 0.0
      %v1885 = vsel %vm1627, %v1825, 0.0
      %v1886 = vadd.f32 %v1884, %v1885
      %v1887 = vsel %vm1627, %v1830, 0.0
      %v1888 = vadd.f32 %v1886, %v1887
      %v1889 = vsel %vm1627, %v1833, 0.0
      %v1890 = vadd.f32 %v1888, %v1889
      %v1891 = vsel %vm1627, %v1838, 0.0
      %v1892 = vadd.f32 %v1890, %v1891
      %v1893 = vsel %vm1627, %v1841, 0.0
      %v1894 = vadd.f32 %v1892, %v1893
      %v1895 = vsel %vm1627, %v1846, 0.0
      %v1896 = vadd.f32 %v1894, %v1895
      %v1897 = vsel %vm1627, %v1849, 0.0
      %v1898 = vadd.f32 %v1896, %v1897
      %v1899 = vsel %vm1627, %v1854, 0.0
      %v1900 = vadd.f32 %v1898, %v1899
      %v1901 = vsel %vm1627, %v1857, 0.0
      %v1902 = vadd.f32 %v1900, %v1901
      %v1903 = vsel %vm1627, %v1862, 0.0
      %v1904 = vadd.f32 %v1902, %v1903
      %v1905 = vsel %vm1627, %v1865, 0.0
      %v1906 = vadd.f32 %v1904, %v1905
      %v1907 = vsel %vm1627, %v1870, 0.0
      %v1908 = vadd.f32 %v1906, %v1907
      %v1909 = vsel %vm1627, %v1873, 0.0
      %v1910 = vadd.f32 %v1908, %v1909
      %v1911 = vsel %vm1627, %v1878, 0.0
      %v1912 = vadd.f32 %v1910, %v1911
      %v1913 = vsel %vm1627, %v1881, 0.0
      %v1914 = vadd.f32 %v1912, %v1913
      %v1915 = vrot.slane %v1914, 4
      %v1916 = vadd.f32 %v1914, %v1915
      %v1917 = vrot.slane %v1916, 2
      %v1918 = vadd.f32 %v1916, %v1917
      %v1919 = vrot.slane %v1918, 1
      %v1920 = vadd.f32 %v1918, %v1919
      %v1921 = vmul.f32 %v1822, %v1822
      %v1922 = vmul.f32 %v1825, %v1825
      %v1923 = vmul.f32 %v1830, %v1830
      %v1924 = vmul.f32 %v1833, %v1833
      %v1925 = vmul.f32 %v1838, %v1838
      %v1926 = vmul.f32 %v1841, %v1841
      %v1927 = vmul.f32 %v1846, %v1846
      %v1928 = vmul.f32 %v1849, %v1849
      %v1929 = vmul.f32 %v1854, %v1854
      %v1930 = vmul.f32 %v1857, %v1857
      %v1931 = vmul.f32 %v1862, %v1862
      %v1932 = vmul.f32 %v1865, %v1865
      %v1933 = vmul.f32 %v1870, %v1870
      %v1934 = vmul.f32 %v1873, %v1873
      %v1935 = vmul.f32 %v1878, %v1878
      %v1936 = vmul.f32 %v1881, %v1881
      %v1937 = vsel %vm1627, %v1921, 0.0
      %v1938 = vsel %vm1627, %v1922, 0.0
      %v1939 = vadd.f32 %v1937, %v1938
      %v1940 = vsel %vm1627, %v1923, 0.0
      %v1941 = vadd.f32 %v1939, %v1940
      %v1942 = vsel %vm1627, %v1924, 0.0
      %v1943 = vadd.f32 %v1941, %v1942
      %v1944 = vsel %vm1627, %v1925, 0.0
      %v1945 = vadd.f32 %v1943, %v1944
      %v1946 = vsel %vm1627, %v1926, 0.0
      %v1947 = vadd.f32 %v1945, %v1946
      %v1948 = vsel %vm1627, %v1927, 0.0
      %v1949 = vadd.f32 %v1947, %v1948
      %v1950 = vsel %vm1627, %v1928, 0.0
      %v1951 = vadd.f32 %v1949, %v1950
      %v1952 = vsel %vm1627, %v1929, 0.0
      %v1953 = vadd.f32 %v1951, %v1952
      %v1954 = vsel %vm1627, %v1930, 0.0
      %v1955 = vadd.f32 %v1953, %v1954
      %v1956 = vsel %vm1627, %v1931, 0.0
      %v1957 = vadd.f32 %v1955, %v1956
      %v1958 = vsel %vm1627, %v1932, 0.0
      %v1959 = vadd.f32 %v1957, %v1958
      %v1960 = vsel %vm1627, %v1933, 0.0
      %v1961 = vadd.f32 %v1959, %v1960
      %v1962 = vsel %vm1627, %v1934, 0.0
      %v1963 = vadd.f32 %v1961, %v1962
      %v1964 = vsel %vm1627, %v1935, 0.0
      %v1965 = vadd.f32 %v1963, %v1964
      %v1966 = vsel %vm1627, %v1936, 0.0
      %v1967 = vadd.f32 %v1965, %v1966
      %v1968 = vrot.slane %v1967, 4
      %v1969 = vadd.f32 %v1967, %v1968
      %v1970 = vrot.slane %v1969, 2
      %v1971 = vadd.f32 %v1969, %v1970
      %v1972 = vrot.slane %v1971, 1
      %v1973 = vadd.f32 %v1971, %v1972
      %vm1974 = vcmask 1040384
      %v1975 = vsel %vm1974, %v1920, %v1973
      %vm1976 = vcmask 58368
      %1977 = vst.msk [vmem:[%s410] sm:$0x3] %vm1976, %v1975
      %v1978 = vpack.c.bf16 %v1825, %v1822
      %v1979 = vpack.c.bf16 %v1833, %v1830
      %v1980 = vpack.c.bf16 %v1841, %v1838
      %v1981 = vpack.c.bf16 %v1849, %v1846
      %v1982 = vpack.c.bf16 %v1857, %v1854
      %v1983 = vpack.c.bf16 %v1865, %v1862
      %v1984 = vpack.c.bf16 %v1873, %v1870
      %v1985 = vpack.c.bf16 %v1881, %v1878
      %v1994 = vunpack.c.l.b16 %v1978
      %v1995 = vunpack.c.h.b16 %v1978
      %v1996 = vunpack.c.l.b16 %v1979
      %v1997 = vunpack.c.h.b16 %v1979
      %v1998 = vunpack.c.l.b16 %v1980
      %v1999 = vunpack.c.h.b16 %v1980
      %v2000 = vunpack.c.l.b16 %v1981
      %v2001 = vunpack.c.h.b16 %v1981
      %v2002 = vunpack.c.l.b16 %v1982
      %v2003 = vunpack.c.h.b16 %v1982
      %v2004 = vunpack.c.l.b16 %v1983
      %v2005 = vunpack.c.h.b16 %v1983
      %v2006 = vunpack.c.l.b16 %v1984
      %v2007 = vunpack.c.h.b16 %v1984
      %v2008 = vunpack.c.l.b16 %v1985
      %v2009 = vunpack.c.h.b16 %v1985
      %v2010 = vpack.c.b16 %v1994, %v1994
      %v2011 = vpack.c.b16 %v1995, %v1995
      %v2012 = vpack.c.b16 %v1996, %v1996
      %v2013 = vpack.c.b16 %v1997, %v1997
      %v2014 = vpack.c.b16 %v1998, %v1998
      %v2015 = vpack.c.b16 %v1999, %v1999
      %v2016 = vpack.c.b16 %v2000, %v2000
      %v2017 = vpack.c.b16 %v2001, %v2001
      %v2018 = vpack.c.b16 %v2002, %v2002
      %v2019 = vpack.c.b16 %v2003, %v2003
      %v2020 = vpack.c.b16 %v2004, %v2004
      %v2021 = vpack.c.b16 %v2005, %v2005
      %v2022 = vpack.c.b16 %v2006, %v2006
      %v2023 = vpack.c.b16 %v2007, %v2007
      %v2024 = vpack.c.b16 %v2008, %v2008
      %v2025 = vpack.c.b16 %v2009, %v2009
      %vm2042 = vcmask 60416
      %2043 = vst.msk [vmem:[%s401] sm:$0xf] %vm2042, %v2010
      %2044 = vst.msk [vmem:[%s401 + $0x4] sm:$0xf] %vm2042, %v2011
      %2045 = vst.msk [vmem:[%s401 + $0x8] sm:$0xf] %vm2042, %v2012
      %2046 = vst.msk [vmem:[%s401 + $0xc] sm:$0xf] %vm2042, %v2013
      %2047 = vst.msk [vmem:[%s401 + $0x10] sm:$0xf] %vm2042, %v2014
      %2048 = vst.msk [vmem:[%s401 + $0x14] sm:$0xf] %vm2042, %v2015
      %2049 = vst.msk [vmem:[%s401 + $0x18] sm:$0xf] %vm2042, %v2016
      %2050 = vst.msk [vmem:[%s401 + $0x1c] sm:$0xf] %vm2042, %v2017
      %2051 = vst.msk [vmem:[%s401 + $0x20] sm:$0xf] %vm2042, %v2018
      %2052 = vst.msk [vmem:[%s401 + $0x24] sm:$0xf] %vm2042, %v2019
      %2053 = vst.msk [vmem:[%s401 + $0x28] sm:$0xf] %vm2042, %v2020
      %2054 = vst.msk [vmem:[%s401 + $0x2c] sm:$0xf] %vm2042, %v2021
      %2055 = vst.msk [vmem:[%s401 + $0x30] sm:$0xf] %vm2042, %v2022
      %2056 = vst.msk [vmem:[%s401 + $0x34] sm:$0xf] %vm2042, %v2023
      %2057 = vst.msk [vmem:[%s401 + $0x38] sm:$0xf] %vm2042, %v2024
      %2058 = vst.msk [vmem:[%s401 + $0x3c] sm:$0xf] %vm2042, %v2025
      %s2059 = smul.u32 %s21, 2
      %s2060 = sadd.s32 %s2059, %s22
      %s2061 = smul.u32 16, %s2060
      %p2062 = scmp.lt.s32.totalorder %s2061, 63
      %s2063 = scalar_select %p2062, %s2061, 63
      %s2064 = smul.addr %s2063, 4
      %s2065 = scalar_lea.vmem %s4, %s2064
      %s2066 = smul.u32 %s21, 2
      %s2067 = sadd.s32 %s2066, %s22
      %p2068 = scmp.lt.s32.totalorder %s2067, 3
      %s2069 = scalar_select %p2068, %s2067, 3
      %s2070 = smul.addr %s2069, 2
      %s2071 = scalar_lea.vmem %s5, %s2070
      // Predicated region
      $region37: #{conv_block_forward.3} parent=35 // pred_check
        %p2072 = pneg %p178
      $region38: #{conv_block_forward.3} parent=35 // pred_check_branch
        %2074 = sbr.rel (%p2072) target = $region40
      $region39: #{conv_block_forward.3} parent=35 // pred_region
        %s2075 = smul.u32 %s21, 2
        %s2076 = sadd.s32 %s2075, %s22
        %s2077 = smul.u32 16, %s2076
      $region40: #{conv_block_forward.3} parent=35 // pred_fallthru
        _
      // Predicated region
      $region41: #{conv_block_forward.3} parent=35 // pred_check
        %p2078 = pneg %p208
      $region42: #{conv_block_forward.3} parent=35 // pred_check_branch
        %2080 = sbr.rel (%p2078) target = $region44
      $region43: #{conv_block_forward.3} parent=35 // pred_region
        %s2081 = smul.u32 %s21, 2
        %s2082 = sadd.s32 %s2081, %s22
      $region44: #{conv_block_forward.3} parent=35 // pred_fallthru
        _
    $region36: #{conv_block_forward.3} parent=5 // pred_fallthru
      _
    %p2083 = scmp.le.s32.totalorder 2, %s12
    // Predicated region
    $region45: #{conv_block_forward.3} parent=5 // pred_check
      %p2084 = pneg %p2083
    $region46: #{conv_block_forward.3} parent=5 // pred_check_branch
      %2086 = sbr.rel (%p2084) target = $region48
    $region47: #{conv_block_forward.3} parent=5 // pred_region
      %s2087 = ssub.s32 %s12, 2
      // Predicated region
      $region49: #{conv_block_forward.3} parent=47 // pred_check
        %p2088 = pneg %p184
      $region50: #{conv_block_forward.3} parent=47 // pred_check_branch
        %2090 = sbr.rel (%p2088) target = $region52
      $region51: #{conv_block_forward.3} parent=47 // pred_region
        %s2091 = smul.u32 %s23, 2
        %s2092 = sadd.s32 %s2091, %s24
        %s2093 = smul.u32 16, %s2092
        %p2094 = scmp.lt.s32.totalorder %s2093, 63
        %s2095 = scalar_select %p2094, %s2093, 63
        %s2096 = smul.addr %s2095, 4
        %s2097 = scalar_lea.vmem %s4, %s2096
      $region52: #{conv_block_forward.3} parent=47 // pred_fallthru
        _
      // Predicated region
      $region53: #{conv_block_forward.3} parent=47 // pred_check
        %p2098 = pneg %p214
      $region54: #{conv_block_forward.3} parent=47 // pred_check_branch
        %2100 = sbr.rel (%p2098) target = $region56
      $region55: #{conv_block_forward.3} parent=47 // pred_region
        %s2101 = smul.u32 %s23, 2
        %s2102 = sadd.s32 %s2101, %s24
        %p2103 = scmp.lt.s32.totalorder %s2102, 3
        %s2104 = scalar_select %p2103, %s2102, 3
        %s2105 = smul.addr %s2104, 2
        %s2106 = scalar_lea.vmem %s5, %s2105
      $region56: #{conv_block_forward.3} parent=47 // pred_fallthru
        _
    $region48: #{conv_block_forward.3} parent=5 // pred_fallthru
      _
  $region6: #{conv_block_forward.3} parent=0 // loop_footer
    %s16 = sadd.s32 1, %s12
  $region7: #{conv_block_forward.3} parent=0 // loop_footer_branch
    %11 = sbr.rel target = $region3
  $region8: #{conv_block_forward.3} parent=0 // loop_exit
    _

</llo_original>
